<compile_context>
chip_gen: v7x
topology: tpu7x:2x2x1
jax: 0.10.0
libtpu: 0.0.40
codegen_flags: <defaults>
</compile_context>

<pallas_src>
import functools

import jax
import jax.numpy as jnp
import numpy as np
from jax.experimental import pallas as pl
from jax.experimental.pallas import tpu as pltpu


def _resident_spec(block_shape, index_map):
    """BlockSpec for a grid-invariant operand; ask for single buffering so the
    useless second pipeline buffer does not eat VMEM.  Falls back to the default
    spec if this JAX build rejects pipeline_mode / Buffered(1)."""
    try:
        return pl.BlockSpec(block_shape, index_map, pipeline_mode=pl.Buffered(1))
    except (TypeError, ValueError, AttributeError):
        return pl.BlockSpec(block_shape, index_map)


# -----------------------------------------------------------------------------
# In-kernel helpers / kernels
# -----------------------------------------------------------------------------
def _phase_matmul(x_ref, w_ref, a, b, *, BT, TH, W, Cin, split_taps):
    """Conv-transpose contribution for output phase (oh%2=a, ow%2=b) of one block.

    x_ref: (BT, TH+2, W+2, Cin) zero-padded / haloed input rows, compute dtype.
    w_ref: (4, 4, Cin, Cout) per-(phase, tap) or (4, 4*Cin, Cout) per-phase weights.
    Returns (BT*TH*W, Cout) f32.
    """
    r0 = 0 if a == 0 else 2          # local start row of the shifted row tap
    c0 = 0 if b == 0 else 2          # local start col of the shifted col tap
    M = BT * TH * W
    p = 2 * a + b

    def tap(r, c):
        return x_ref[:, r:r + TH, c:c + W, :]                     # (BT, TH, W, Cin)

    # Tap order must match the weight packing:
    # (centre,centre), (centre,shift), (shift,centre), (shift,shift).
    offs = ((1, 1), (1, c0), (r0, 1), (r0, c0))
    if split_taps:
        # 4 accumulating matmuls: K = Cin already fills the MXU, no lane concat.
        acc = jnp.dot(tap(*offs[0]).reshape(M, Cin), w_ref[p, 0],
                      preferred_element_type=jnp.float32)
        for t in (1, 2, 3):
            acc = acc + jnp.dot(tap(*offs[t]).reshape(M, Cin), w_ref[p, t],
                                preferred_element_type=jnp.float32)
        return acc
    patch = jnp.concatenate([tap(r, c) for r, c in offs], axis=-1)  # (BT,TH,W,4Cin)
    return jnp.dot(patch.reshape(M, 4 * Cin), w_ref[p],
                   preferred_element_type=jnp.float32)


def _stats_kernel(x_ref, w_ref, stats_ref, *, BT, TH, W, Cin, Cout, split_taps):
    """Pass 1 (recompute strategy): per-block partial (sum, sum-of-squares)."""
    s = jnp.zeros((1, Cout), jnp.float32)
    ss = jnp.zeros((1, Cout), jnp.float32)
    for a in (0, 1):
        for b in (0, 1):
            y = _phase_matmul(x_ref, w_ref, a, b, BT=BT, TH=TH, W=W, Cin=Cin,
                              split_taps=split_taps)
            s = s + jnp.sum(y, axis=0, keepdims=True)
            ss = ss + jnp.sum(y * y, axis=0, keepdims=True)
    stats_ref[0] = jnp.concatenate([s, ss], axis=0)               # (2, Cout)


def _stash_kernel(x_ref, w_ref, y_ref, stats_ref, *, BT, TH, W, Cin, Cout,
                  split_taps):
    """Pass 1 (stash strategy): partial stats + interleaved conv output."""
    s = jnp.zeros((1, Cout), jnp.float32)
    ss = jnp.zeros((1, Cout), jnp.float32)
    for a in (0, 1):
        for b in (0, 1):
            y = _phase_matmul(x_ref, w_ref, a, b, BT=BT, TH=TH, W=W, Cin=Cin,
                              split_taps=split_taps)
            s = s + jnp.sum(y, axis=0, keepdims=True)
            ss = ss + jnp.sum(y * y, axis=0, keepdims=True)
            y_ref[:, :, a, :, b * Cout:(b + 1) * Cout] = (
                y.reshape(BT, TH, W, Cout).astype(y_ref.dtype))
    stats_ref[0] = jnp.concatenate([s, ss], axis=0)


def _apply_kernel(x_ref, w_ref, shift_ref, o_ref, *, BT, TH, W, Cin, Cout,
                  slope, split_taps):
    """Pass 2 (recompute strategy): matmuls with BN-prescaled weights, + shift,
    LeakyReLU; each column phase stored into a static lane slice (free interleave)."""
    shift = shift_ref[...]                                        # (1, Cout) f32
    for a in (0, 1):
        for b in (0, 1):
            y = _phase_matmul(x_ref, w_ref, a, b, BT=BT, TH=TH, W=W, Cin=Cin,
                              split_taps=split_taps)
            y = y + shift
            y = jnp.maximum(y, slope * y)                         # LeakyReLU, slope<1
            o_ref[:, :, a, :, b * Cout:(b + 1) * Cout] = (
                y.reshape(BT, TH, W, Cout).astype(o_ref.dtype))


def _affine_kernel(y_ref, scale_ref, shift_ref, o_ref, *, slope):
    """Pass 2 (stash strategy): pure per-channel affine + LeakyReLU."""
    y = y_ref[...].astype(jnp.float32)
    y = y * scale_ref[...] + shift_ref[...]                       # (1, 2*Cout) bcast
    o_ref[...] = jnp.maximum(y, slope * y).astype(o_ref.dtype)


# -----------------------------------------------------------------------------
# Wrapper
# -----------------------------------------------------------------------------
def dcgan_upconv_forward(x_nchw, weight, bias, gamma, beta, *,
                         eps=1e-5, slope=0.2,
                         compute_dtype=jnp.bfloat16,
                         data_format="NCHW",
                         strategy="auto",
                         vmem_budget_bytes=None,
                         out_dtype=None):
    """weight: (Cin, Cout, 4, 4) -- PyTorch ConvTranspose2d weight layout.

    `bias` is accepted for interface parity but intentionally unused: a per-channel
    constant added before training-mode BatchNorm cancels exactly.
    """
    del bias
    N, Cin, H, W = x_nchw.shape
    Cout = weight.shape[1]
    assert weight.shape == (Cin, Cout, 4, 4)
    assert W % 8 == 0, "W must be a multiple of 8 for cheap in-kernel reshapes"
    cd = jnp.dtype(compute_dtype)
    isz = cd.itemsize
    if out_dtype is None:
        out_dtype = x_nchw.dtype

    split_taps = Cin >= 128
    if strategy == "auto":
        strategy = "stash" if Cin >= 256 else "recompute"
    assert strategy in ("recompute", "stash")

    # --- generation-dependent VMEM budget -----------------------------------------
    try:
        vmem_cap = int(pltpu.get_tpu_info().vmem_capacity_bytes)
    except Exception:  # unknown chip / interpret mode: assume v7x-sized VMEM
        vmem_cap = 64 * 1024 * 1024
    if vmem_cap >= 100 * 1024 * 1024:            # v5e / v6e: 128 MiB VMEM
        budget_default, vmem_limit = 48 * 2**20, 96 * 2**20
    else:                                        # v7x: 64 MiB per TensorCore
        budget_default, vmem_limit = 20 * 2**20, 44 * 2**20
    budget = vmem_budget_bytes or budget_default

    def _pad_lane(c):
        return -(-c // 128) * 128

    def _pad_sub(c):
        return -(-c // 8) * 8

    if split_taps:
        w_bytes = 4 * 4 * _pad_sub(Cin) * _pad_lane(Cout) * isz
    else:
        w_bytes = 4 * _pad_sub(4 * Cin) * _pad_lane(Cout) * isz

    def _fits(bt, th):
        m = bt * th * W
        x_blk = bt * (th + 2) * _pad_sub(W + 2) * _pad_lane(Cin) * isz
        o_blk = bt * th * 2 * _pad_sub(W) * _pad_lane(2 * Cout) * isz
        tmp = 2 * m * (4 * Cin * isz + 4 * Cout)      # patch + f32 acc, live factor 2
        extra = 2 * o_blk if strategy == "stash" else 0
        return 2 * (x_blk + o_blk) + extra + w_bytes + tmp <= budget

    # --- tiling: whole padded images when they fit, haloed row-tiles otherwise ----
    if _fits(1, H):
        TH, n_t = H, 1
    else:
        TH = 1
        for d in range(H - 1, 0, -1):
            if H % d == 0 and _fits(1, d):
                TH = d
                break
        n_t = H // TH
    lead = N * n_t

    divs = [d for d in range(1, lead + 1) if lead % d == 0 and _fits(d, TH)] or [1]
    multi = [d for d in divs if lead // d >= 2]
    pool = multi if multi else divs
    BT = pool[-1]
    for d in pool:                            # smallest BT that feeds the MXU M dim
        if d * TH * W >= 512:
            BT = d
            break
    steps = lead // BT

    # --- input prep: NHWC, cast to compute dtype *before* padding -----------------
    x = jnp.transpose(x_nchw, (0, 2, 3, 1)).astype(cd)        # (N, H, W, Cin)
    x = jnp.pad(x, ((0, 0), (1, 1), (1, 1), (0, 0)))          # (N, H+2, W+2, Cin)
    if n_t == 1:
        x_in = x                                              # no halo duplication
    else:  # fallback only: overlapping (TH+2)-row windows, duplication (TH+2)/TH
        x_in = jnp.stack([x[:, t * TH:t * TH + TH + 2] for t in range(n_t)], axis=1)
        x_in = x_in.reshape(lead, TH + 2, W + 2, Cin)

    # --- per-phase / per-tap weights -----------------------------------------------
    # ConvTranspose2d(k=4, s=2, p=1): oh = 2*ih - 1 + kh
    #   even oh -> (x[i], kh=1), (x[i-1], kh=3);  odd oh -> (x[i], kh=2), (x[i+1], kh=0)
    taps_idx = {0: (1, 3), 1: (2, 0)}          # (centre kh, shifted kh) per phase
    w32 = weight.astype(jnp.float32)
    wm = []
    for a in (0, 1):
        for b in (0, 1):
            kh = jnp.array(taps_idx[a])
            kw = jnp.array(taps_idx[b])
            wsel = w32[:, :, kh][:, :, :, kw]                  # (Cin, Cout, 2, 2)
            wm.append(jnp.transpose(wsel, (2, 3, 0, 1)))       # (2, 2, Cin, Cout)
    wm = jnp.stack(wm, axis=0).reshape(4, 4, Cin, Cout)        # f32 master copy

    def _w_kernel_form(w):
        w = w if split_taps else w.reshape(4, 4 * Cin, Cout)
        return w.astype(cd)

    w1 = _w_kernel_form(wm)

    # --- BlockSpecs -----------------------------------------------------------------
    x_spec = pl.BlockSpec((BT, TH + 2, W + 2, Cin), lambda g: (g, 0, 0, 0))
    if split_taps:
        w_spec = _resident_spec((4, 4, Cin, Cout), lambda g: (0, 0, 0, 0))
    else:
        w_spec = _resident_spec((4, 4 * Cin, Cout), lambda g: (0, 0, 0))
    y_spec = pl.BlockSpec((BT, TH, 2, W, 2 * Cout), lambda g: (g, 0, 0, 0, 0))
    stats_spec = pl.BlockSpec((1, 2, Cout), lambda g: (g, 0, 0))

    cparams = pltpu.CompilerParams(dimension_semantics=("parallel",),
                                   vmem_limit_bytes=vmem_limit)
    kern_args = dict(BT=BT, TH=TH, W=W, Cin=Cin, Cout=Cout, split_taps=split_taps)

    # --- Pass 1: partial BN statistics (optionally stashing the conv output) -------
    if strategy == "recompute":
        stats_partial = pl.pallas_call(
            functools.partial(_stats_kernel, **kern_args),
            grid=(steps,),
            in_specs=[x_spec, w_spec],
            out_specs=stats_spec,
            out_shape=jax.ShapeDtypeStruct((steps, 2, Cout), jnp.float32),
            compiler_params=cparams,
        )(x_in, w1)
        y_stash = None
    else:
        y_stash, stats_partial = pl.pallas_call(
            functools.partial(_stash_kernel, **kern_args),
            grid=(steps,),
            in_specs=[x_spec, w_spec],
            out_specs=(y_spec, stats_spec),
            out_shape=(jax.ShapeDtypeStruct((lead, TH, 2, W, 2 * Cout), cd),
                       jax.ShapeDtypeStruct((steps, 2, Cout), jnp.float32)),
            compiler_params=cparams,
        )(x_in, w1)

    # --- Fold BN into per-channel scale / shift (tiny XLA reduce) -------------------
    stats = jnp.sum(stats_partial, axis=0)                     # (2, Cout)
    count = jnp.float32(N * (2 * H) * (2 * W))
    mean = stats[0] / count
    var = jnp.maximum(stats[1] / count - mean * mean, 0.0)     # biased (torch train BN)
    inv_std = jax.lax.rsqrt(var + eps)
    scale = gamma.astype(jnp.float32) * inv_std                # (Cout,)
    shift = beta.astype(jnp.float32) - mean * scale

    # --- Pass 2: fused BN affine + LeakyReLU ----------------------------------------
    if strategy == "recompute":
        w2 = _w_kernel_form(wm * scale.reshape(1, 1, 1, Cout))  # BN scale folded in
        out_tiles = pl.pallas_call(
            functools.partial(_apply_kernel, slope=slope, **kern_args),
            grid=(steps,),
            in_specs=[x_spec, w_spec,
                      _resident_spec((1, Cout), lambda g: (0, 0))],
            out_specs=y_spec,
            out_shape=jax.ShapeDtypeStruct((lead, TH, 2, W, 2 * Cout), cd),
            compiler_params=cparams,
        )(x_in, w2, shift.reshape(1, Cout))
    else:
        scale2 = jnp.tile(scale.reshape(1, Cout), (1, 2))      # lane order (b, cout)
        shift2 = jnp.tile(shift.reshape(1, Cout), (1, 2))
        # NOTE: under jit this call could use input_output_aliases={0: 0} to run
        # in place over the stashed conv output.
        out_tiles = pl.pallas_call(
            functools.partial(_affine_kernel, slope=slope),
            grid=(steps,),
            in_specs=[y_spec,
                      _resident_spec((1, 2 * Cout), lambda g: (0, 0)),
                      _resident_spec((1, 2 * Cout), lambda g: (0, 0))],
            out_specs=y_spec,
            out_shape=jax.ShapeDtypeStruct((lead, TH, 2, W, 2 * Cout), cd),
            compiler_params=cparams,
        )(y_stash, scale2, shift2)

    # (lead, TH, 2, W, 2*Cout) -> (N, 2H, 2W, Cout): contiguous splits/merges only.
    out_nhwc = out_tiles.reshape(N, 2 * H, 2 * W, Cout)
    if data_format == "NHWC":
        return out_nhwc.astype(out_dtype)
    # Final layout transpose only to honor the PyTorch NCHW interface.
    return jnp.transpose(out_nhwc, (0, 3, 1, 2)).astype(out_dtype)
    # TODO(synk): BatchNorm2d running_mean/running_var buffer updates (training-time
    # side effects on module buffers) are not replicated here.


def reference_forward(x, weight, bias, gamma, beta, eps=1e-5, slope=0.2):
    """Pure-JAX f32 reference: ConvTranspose2d(4,2,1) + training-mode BN + LeakyReLU."""
    w_conv = jnp.transpose(jnp.flip(weight, axis=(2, 3)), (1, 0, 2, 3))  # (Cout,Cin,4,4)
    y = jax.lax.conv_general_dilated(
        x, w_conv, window_strides=(1, 1), padding=[(2, 2), (2, 2)],
        lhs_dilation=(2, 2), rhs_dilation=(1, 1),
        dimension_numbers=('NCHW', 'OIHW', 'NCHW'))
    y = y + bias.reshape(1, -1, 1, 1)
    mean = jnp.mean(y, axis=(0, 2, 3), keepdims=True)
    var = jnp.mean((y - mean) ** 2, axis=(0, 2, 3), keepdims=True)
    y = (y - mean) / jnp.sqrt(var + eps)
    y = y * gamma.reshape(1, -1, 1, 1) + beta.reshape(1, -1, 1, 1)
    return jnp.where(y >= 0, y, slope * y)


if __name__ == "__main__":
    # --- Config 1: small channels -> lane-concat matmuls, "recompute" strategy ----
    N, Cin, Cout, H, W = 2, 4, 8, 16, 16
    k1, k2, k3, k4, k5 = jax.random.split(jax.random.PRNGKey(0), 5)
    x = jax.random.normal(k1, (N, Cin, H, W), jnp.float32)
    weight = jax.random.normal(k2, (Cin, Cout, 4, 4), jnp.float32) * 0.1
    bias = jax.random.normal(k3, (Cout,), jnp.float32) * 0.1
    gamma = 1.0 + 0.1 * jax.random.normal(k4, (Cout,), jnp.float32)
    beta = 0.1 * jax.random.normal(k5, (Cout,), jnp.float32)
    ref = reference_forward(x, weight, bias, gamma, beta)

    out = jax.block_until_ready(
        dcgan_upconv_forward(x, weight, bias, gamma, beta))            # bf16 MXU path
    assert out.shape == (N, Cout, 2 * H, 2 * W) and out.dtype == x.dtype
    np.testing.assert_allclose(np.asarray(out), np.asarray(ref), rtol=5e-2, atol=5e-2)

    out_f32 = jax.block_until_ready(
        dcgan_upconv_forward(x, weight, bias, gamma, beta,
                             compute_dtype=jnp.float32))               # exact cross-check
    np.testing.assert_allclose(np.asarray(out_f32), np.asarray(ref), rtol=2e-3, atol=2e-3)

    # --- Config 2: Cin >= 128 -> split-tap accumulating matmuls + "stash" strategy --
    N2, Cin2, Cout2, H2, W2 = 2, 128, 16, 8, 8
    j1, j2, j3, j4, j5 = jax.random.split(jax.random.PRNGKey(1), 5)
    x2 = jax.random.normal(j1, (N2, Cin2, H2, W2), jnp.float32)
    wt2 = jax.random.normal(j2, (Cin2, Cout2, 4, 4), jnp.float32) * 0.05
    bs2 = jax.random.normal(j3, (Cout2,), jnp.float32) * 0.1
    g2 = 1.0 + 0.1 * jax.random.normal(j4, (Cout2,), jnp.float32)
    be2 = 0.1 * jax.random.normal(j5, (Cout2,), jnp.float32)
    ref2 = reference_forward(x2, wt2, bs2, g2, be2)

    out2_f32 = jax.block_until_ready(
        dcgan_upconv_forward(x2, wt2, bs2, g2, be2, strategy="stash",
                             compute_dtype=jnp.float32))
    np.testing.assert_allclose(np.asarray(out2_f32), np.asarray(ref2),
                               rtol=1e-2, atol=1e-2)

    out2 = jax.block_until_ready(
        dcgan_upconv_forward(x2, wt2, bs2, g2, be2, strategy="stash"))  # bf16
    np.testing.assert_allclose(np.asarray(out2), np.asarray(ref2), rtol=5e-2, atol=5e-2)

    print("KERNEL_OK")
</pallas_src>

<mosaic_0001>
module attributes {stable_mosaic.version = 11 : i64} {
  func.func @_stats_kernel(%arg0: i32, %arg1: memref<1x18x18x4xbf16, #tpu.memory_space<vmem>>, %arg2: memref<4x16x8xbf16, #tpu.memory_space<vmem>>, %arg3: memref<1x2x8xf32, #tpu.memory_space<vmem>>) attributes {dimension_semantics = [#tpu.dimension_semantics<parallel>], iteration_bounds = array<i64: 2>, scalar_prefetch = 0 : i64, scratch_operands = 0 : i64, tpu.core_type = #tpu.core_type<tc>, window_params = [{transform_indices = @transform_0, window_bounds = array<i64: 1, 18, 18, 4>}, {pipeline_mode = #tpu.pipeline_mode<synchronous>, transform_indices = @transform_1, window_bounds = array<i64: 4, 16, 8>}, {transform_indices = @transform_2, window_bounds = array<i64: 1, 2, 8>}]} {
    %cst = arith.constant 0.000000e+00 : f32
    %0 = vector.broadcast %cst : f32 to vector<1x8xf32>
    %cst_0 = arith.constant 0.000000e+00 : f32
    %1 = vector.broadcast %cst_0 : f32 to vector<1x8xf32>
    %c0 = arith.constant 0 : index
    %c1 = arith.constant 1 : index
    %c1_1 = arith.constant 1 : index
    %c0_2 = arith.constant 0 : index
    %2 = vector.load %arg1[%c0, %c1, %c1_1, %c0_2] : memref<1x18x18x4xbf16, #tpu.memory_space<vmem>>, vector<1x16x16x4xbf16>
    %c0_3 = arith.constant 0 : index
    %c1_4 = arith.constant 1 : index
    %c0_5 = arith.constant 0 : index
    %c0_6 = arith.constant 0 : index
    %3 = vector.load %arg1[%c0_3, %c1_4, %c0_5, %c0_6] : memref<1x18x18x4xbf16, #tpu.memory_space<vmem>>, vector<1x16x16x4xbf16>
    %c0_7 = arith.constant 0 : index
    %c0_8 = arith.constant 0 : index
    %c1_9 = arith.constant 1 : index
    %c0_10 = arith.constant 0 : index
    %4 = vector.load %arg1[%c0_7, %c0_8, %c1_9, %c0_10] : memref<1x18x18x4xbf16, #tpu.memory_space<vmem>>, vector<1x16x16x4xbf16>
    %c0_11 = arith.constant 0 : index
    %c0_12 = arith.constant 0 : index
    %c0_13 = arith.constant 0 : index
    %c0_14 = arith.constant 0 : index
    %5 = vector.load %arg1[%c0_11, %c0_12, %c0_13, %c0_14] : memref<1x18x18x4xbf16, #tpu.memory_space<vmem>>, vector<1x16x16x4xbf16>
    %6 = tpu.concatenate %2, %3, %4, %5 in 3 : vector<1x16x16x4xbf16>, vector<1x16x16x4xbf16>, vector<1x16x16x4xbf16>, vector<1x16x16x4xbf16> -> vector<1x16x16x16xbf16>
    %7 = vector.shape_cast %6 : vector<1x16x16x16xbf16> to vector<256x16xbf16>
    %c0_15 = arith.constant 0 : index
    %c0_16 = arith.constant 0 : index
    %c0_17 = arith.constant 0 : index
    %8 = vector.load %arg2[%c0_15, %c0_16, %c0_17] : memref<4x16x8xbf16, #tpu.memory_space<vmem>>, vector<1x16x8xbf16>
    %9 = vector.shape_cast %8 : vector<1x16x8xbf16> to vector<16x8xbf16>
    %cst_18 = arith.constant dense<0.000000e+00> : vector<256x8xf32>
    %10 = tpu.matmul %7, %9, %cst_18 {dimension_numbers = #tpu.dot_dimension_numbers<[1], [0], [0], [1], [0, 0, 1, 1], [], []>} : vector<256x16xbf16>, vector<16x8xbf16>, vector<256x8xf32> -> vector<256x8xf32>
    %cst_19 = arith.constant dense<0.000000e+00> : vector<8xf32>
    %11 = vector.multi_reduction <add>, %10, %cst_19 [0] : vector<256x8xf32> to vector<8xf32>
    %12 = vector.shape_cast %11 : vector<8xf32> to vector<1x8xf32>
    %13 = arith.addf %0, %12 : vector<1x8xf32>
    %14 = arith.mulf %10, %10 : vector<256x8xf32>
    %cst_20 = arith.constant dense<0.000000e+00> : vector<8xf32>
    %15 = vector.multi_reduction <add>, %14, %cst_20 [0] : vector<256x8xf32> to vector<8xf32>
    %16 = vector.shape_cast %15 : vector<8xf32> to vector<1x8xf32>
    %17 = arith.addf %1, %16 : vector<1x8xf32>
    %c0_21 = arith.constant 0 : index
    %c1_22 = arith.constant 1 : index
    %c1_23 = arith.constant 1 : index
    %c0_24 = arith.constant 0 : index
    %18 = vector.load %arg1[%c0_21, %c1_22, %c1_23, %c0_24] : memref<1x18x18x4xbf16, #tpu.memory_space<vmem>>, vector<1x16x16x4xbf16>
    %c0_25 = arith.constant 0 : index
    %c1_26 = arith.constant 1 : index
    %c2 = arith.constant 2 : index
    %c0_27 = arith.constant 0 : index
    %19 = vector.load %arg1[%c0_25, %c1_26, %c2, %c0_27] : memref<1x18x18x4xbf16, #tpu.memory_space<vmem>>, vector<1x16x16x4xbf16>
    %c0_28 = arith.constant 0 : index
    %c0_29 = arith.constant 0 : index
    %c1_30 = arith.constant 1 : index
    %c0_31 = arith.constant 0 : index
    %20 = vector.load %arg1[%c0_28, %c0_29, %c1_30, %c0_31] : memref<1x18x18x4xbf16, #tpu.memory_space<vmem>>, vector<1x16x16x4xbf16>
    %c0_32 = arith.constant 0 : index
    %c0_33 = arith.constant 0 : index
    %c2_34 = arith.constant 2 : index
    %c0_35 = arith.constant 0 : index
    %21 = vector.load %arg1[%c0_32, %c0_33, %c2_34, %c0_35] : memref<1x18x18x4xbf16, #tpu.memory_space<vmem>>, vector<1x16x16x4xbf16>
    %22 = tpu.concatenate %18, %19, %20, %21 in 3 : vector<1x16x16x4xbf16>, vector<1x16x16x4xbf16>, vector<1x16x16x4xbf16>, vector<1x16x16x4xbf16> -> vector<1x16x16x16xbf16>
    %23 = vector.shape_cast %22 : vector<1x16x16x16xbf16> to vector<256x16xbf16>
    %c1_36 = arith.constant 1 : index
    %c0_37 = arith.constant 0 : index
    %c0_38 = arith.constant 0 : index
    %24 = vector.load %arg2[%c1_36, %c0_37, %c0_38] : memref<4x16x8xbf16, #tpu.memory_space<vmem>>, vector<1x16x8xbf16>
    %25 = vector.shape_cast %24 : vector<1x16x8xbf16> to vector<16x8xbf16>
    %cst_39 = arith.constant dense<0.000000e+00> : vector<256x8xf32>
    %26 = tpu.matmul %23, %25, %cst_39 {dimension_numbers = #tpu.dot_dimension_numbers<[1], [0], [0], [1], [0, 0, 1, 1], [], []>} : vector<256x16xbf16>, vector<16x8xbf16>, vector<256x8xf32> -> vector<256x8xf32>
    %cst_40 = arith.constant dense<0.000000e+00> : vector<8xf32>
    %27 = vector.multi_reduction <add>, %26, %cst_40 [0] : vector<256x8xf32> to vector<8xf32>
    %28 = vector.shape_cast %27 : vector<8xf32> to vector<1x8xf32>
    %29 = arith.addf %13, %28 : vector<1x8xf32>
    %30 = arith.mulf %26, %26 : vector<256x8xf32>
    %cst_41 = arith.constant dense<0.000000e+00> : vector<8xf32>
    %31 = vector.multi_reduction <add>, %30, %cst_41 [0] : vector<256x8xf32> to vector<8xf32>
    %32 = vector.shape_cast %31 : vector<8xf32> to vector<1x8xf32>
    %33 = arith.addf %17, %32 : vector<1x8xf32>
    %c0_42 = arith.constant 0 : index
    %c1_43 = arith.constant 1 : index
    %c1_44 = arith.constant 1 : index
    %c0_45 = arith.constant 0 : index
    %34 = vector.load %arg1[%c0_42, %c1_43, %c1_44, %c0_45] : memref<1x18x18x4xbf16, #tpu.memory_space<vmem>>, vector<1x16x16x4xbf16>
    %c0_46 = arith.constant 0 : index
    %c1_47 = arith.constant 1 : index
    %c0_48 = arith.constant 0 : index
    %c0_49 = arith.constant 0 : index
    %35 = vector.load %arg1[%c0_46, %c1_47, %c0_48, %c0_49] : memref<1x18x18x4xbf16, #tpu.memory_space<vmem>>, vector<1x16x16x4xbf16>
    %c0_50 = arith.constant 0 : index
    %c2_51 = arith.constant 2 : index
    %c1_52 = arith.constant 1 : index
    %c0_53 = arith.constant 0 : index
    %36 = vector.load %arg1[%c0_50, %c2_51, %c1_52, %c0_53] : memref<1x18x18x4xbf16, #tpu.memory_space<vmem>>, vector<1x16x16x4xbf16>
    %c0_54 = arith.constant 0 : index
    %c2_55 = arith.constant 2 : index
    %c0_56 = arith.constant 0 : index
    %c0_57 = arith.constant 0 : index
    %37 = vector.load %arg1[%c0_54, %c2_55, %c0_56, %c0_57] : memref<1x18x18x4xbf16, #tpu.memory_space<vmem>>, vector<1x16x16x4xbf16>
    %38 = tpu.concatenate %34, %35, %36, %37 in 3 : vector<1x16x16x4xbf16>, vector<1x16x16x4xbf16>, vector<1x16x16x4xbf16>, vector<1x16x16x4xbf16> -> vector<1x16x16x16xbf16>
    %39 = vector.shape_cast %38 : vector<1x16x16x16xbf16> to vector<256x16xbf16>
    %c2_58 = arith.constant 2 : index
    %c0_59 = arith.constant 0 : index
    %c0_60 = arith.constant 0 : index
    %40 = vector.load %arg2[%c2_58, %c0_59, %c0_60] : memref<4x16x8xbf16, #tpu.memory_space<vmem>>, vector<1x16x8xbf16>
    %41 = vector.shape_cast %40 : vector<1x16x8xbf16> to vector<16x8xbf16>
    %cst_61 = arith.constant dense<0.000000e+00> : vector<256x8xf32>
    %42 = tpu.matmul %39, %41, %cst_61 {dimension_numbers = #tpu.dot_dimension_numbers<[1], [0], [0], [1], [0, 0, 1, 1], [], []>} : vector<256x16xbf16>, vector<16x8xbf16>, vector<256x8xf32> -> vector<256x8xf32>
    %cst_62 = arith.constant dense<0.000000e+00> : vector<8xf32>
    %43 = vector.multi_reduction <add>, %42, %cst_62 [0] : vector<256x8xf32> to vector<8xf32>
    %44 = vector.shape_cast %43 : vector<8xf32> to vector<1x8xf32>
    %45 = arith.addf %29, %44 : vector<1x8xf32>
    %46 = arith.mulf %42, %42 : vector<256x8xf32>
    %cst_63 = arith.constant dense<0.000000e+00> : vector<8xf32>
    %47 = vector.multi_reduction <add>, %46, %cst_63 [0] : vector<256x8xf32> to vector<8xf32>
    %48 = vector.shape_cast %47 : vector<8xf32> to vector<1x8xf32>
    %49 = arith.addf %33, %48 : vector<1x8xf32>
    %c0_64 = arith.constant 0 : index
    %c1_65 = arith.constant 1 : index
    %c1_66 = arith.constant 1 : index
    %c0_67 = arith.constant 0 : index
    %50 = vector.load %arg1[%c0_64, %c1_65, %c1_66, %c0_67] : memref<1x18x18x4xbf16, #tpu.memory_space<vmem>>, vector<1x16x16x4xbf16>
    %c0_68 = arith.constant 0 : index
    %c1_69 = arith.constant 1 : index
    %c2_70 = arith.constant 2 : index
    %c0_71 = arith.constant 0 : index
    %51 = vector.load %arg1[%c0_68, %c1_69, %c2_70, %c0_71] : memref<1x18x18x4xbf16, #tpu.memory_space<vmem>>, vector<1x16x16x4xbf16>
    %c0_72 = arith.constant 0 : index
    %c2_73 = arith.constant 2 : index
    %c1_74 = arith.constant 1 : index
    %c0_75 = arith.constant 0 : index
    %52 = vector.load %arg1[%c0_72, %c2_73, %c1_74, %c0_75] : memref<1x18x18x4xbf16, #tpu.memory_space<vmem>>, vector<1x16x16x4xbf16>
    %c0_76 = arith.constant 0 : index
    %c2_77 = arith.constant 2 : index
    %c2_78 = arith.constant 2 : index
    %c0_79 = arith.constant 0 : index
    %53 = vector.load %arg1[%c0_76, %c2_77, %c2_78, %c0_79] : memref<1x18x18x4xbf16, #tpu.memory_space<vmem>>, vector<1x16x16x4xbf16>
    %54 = tpu.concatenate %50, %51, %52, %53 in 3 : vector<1x16x16x4xbf16>, vector<1x16x16x4xbf16>, vector<1x16x16x4xbf16>, vector<1x16x16x4xbf16> -> vector<1x16x16x16xbf16>
    %55 = vector.shape_cast %54 : vector<1x16x16x16xbf16> to vector<256x16xbf16>
    %c3 = arith.constant 3 : index
    %c0_80 = arith.constant 0 : index
    %c0_81 = arith.constant 0 : index
    %56 = vector.load %arg2[%c3, %c0_80, %c0_81] : memref<4x16x8xbf16, #tpu.memory_space<vmem>>, vector<1x16x8xbf16>
    %57 = vector.shape_cast %56 : vector<1x16x8xbf16> to vector<16x8xbf16>
    %cst_82 = arith.constant dense<0.000000e+00> : vector<256x8xf32>
    %58 = tpu.matmul %55, %57, %cst_82 {dimension_numbers = #tpu.dot_dimension_numbers<[1], [0], [0], [1], [0, 0, 1, 1], [], []>} : vector<256x16xbf16>, vector<16x8xbf16>, vector<256x8xf32> -> vector<256x8xf32>
    %cst_83 = arith.constant dense<0.000000e+00> : vector<8xf32>
    %59 = vector.multi_reduction <add>, %58, %cst_83 [0] : vector<256x8xf32> to vector<8xf32>
    %60 = vector.shape_cast %59 : vector<8xf32> to vector<1x8xf32>
    %61 = arith.addf %45, %60 : vector<1x8xf32>
    %62 = arith.mulf %58, %58 : vector<256x8xf32>
    %cst_84 = arith.constant dense<0.000000e+00> : vector<8xf32>
    %63 = vector.multi_reduction <add>, %62, %cst_84 [0] : vector<256x8xf32> to vector<8xf32>
    %64 = vector.shape_cast %63 : vector<8xf32> to vector<1x8xf32>
    %65 = arith.addf %49, %64 : vector<1x8xf32>
    %66 = tpu.concatenate %61, %65 in 0 : vector<1x8xf32>, vector<1x8xf32> -> vector<2x8xf32>
    %c0_85 = arith.constant 0 : index
    %c0_86 = arith.constant 0 : index
    %c0_87 = arith.constant 0 : index
    %67 = vector.load %arg3[%c0_85, %c0_86, %c0_87] : memref<1x2x8xf32, #tpu.memory_space<vmem>>, vector<1x2x8xf32>
    %68 = vector.shape_cast %67 : vector<1x2x8xf32> to vector<2x8xf32>
    %69 = vector.shape_cast %66 : vector<2x8xf32> to vector<1x2x8xf32>
    tpu.vector_store %arg3[%c0_85, %c0_86, %c0_87], %69 {strides = array<i32>} : memref<1x2x8xf32, #tpu.memory_space<vmem>>, vector<1x2x8xf32>,
    return
  }
  func.func @transform_0(%arg0: i32) -> (i32, i32, i32, i32) {
    %c0_i32 = arith.constant 0 : i32
    %c0_i32_0 = arith.constant 0 : i32
    %c0_i32_1 = arith.constant 0 : i32
    %c0_i32_2 = arith.constant 0 : i32
    return %arg0, %c0_i32, %c0_i32_0, %c0_i32_1 : i32, i32, i32, i32
  }
  func.func @transform_1(%arg0: i32) -> (i32, i32, i32) {
    %c0_i32 = arith.constant 0 : i32
    %c0_i32_0 = arith.constant 0 : i32
    %c0_i32_1 = arith.constant 0 : i32
    %c0_i32_2 = arith.constant 0 : i32
    return %c0_i32, %c0_i32_0, %c0_i32_1 : i32, i32, i32
  }
  func.func @transform_2(%arg0: i32) -> (i32, i32, i32) {
    %c0_i32 = arith.constant 0 : i32
    %c0_i32_0 = arith.constant 0 : i32
    %c0_i32_1 = arith.constant 0 : i32
    return %arg0, %c0_i32, %c0_i32_0 : i32, i32, i32
  }
}

</mosaic_0001>

<llo_original>
// kernel: tpu_custom_call.1
$region0: #{tpu_custom_call.1}
  #allocation0 [shape = 'u32[]', space=smem, size = 0x4, offset = 0x4, fixed_abs, tag = 'smem constant byte address 0x4 - core index']
  #allocation1 [shape = 'u32[144,128]{1,0:T(1,128)}', space=vmem, size = 0x12000, scoped, tag = 'internal scratch']
  %s0 = inlined_call_operand.vmem [shape: bf16[2,18,18,4], index: 0, kind: input, shape index: {}]
  %s1 = inlined_call_operand.vmem [shape: bf16[4,16,8], index: 1, kind: input, shape index: {}]
  %s2 = inlined_call_operand.hbm [shape: f32[2,2,8], index: 2, kind: output, shape index: {}]
  %s3 = sld [smem:[#allocation0]]
  $region41: #{tpu_custom_call.1} parent=0
    _
  %s5 = ssub.s32 1, %s3
  %s6 = scalar_select 0, %s5, %s3
  $region1: #{tpu_custom_call.1} parent=0
    #allocation2 [shape = 'u8[2048]{0}', space=vmem, size = 0x800, scoped, tag = 'output window, operand 0']
    #allocation3 [shape = 's32[2]{0}', space=sflag, size = 0x8, scoped, tag = 'scoped memory for tpu_custom_call.1']
    %7 = vsyncpa [#allocation3], 0
    %s8 = scalar_lea.sflag [#allocation3], 1
    %9 = vsyncpa %s8, 0
    loop: start=0, step=1, limit=4
    $region2: #{tpu_custom_call.1} parent=1 // loop_pre_header
      _
    $region3: #{tpu_custom_call.1} parent=1 // loop_header
      %s11 = sphi 0, %s15
      %p12 = scmp.ge.s32.totalorder %s11, 4
      %s21 = sphi 0, %s23
      %s24 = sphi 0, %s21
      %s25 = sphi 0, %s24
      %s41 = sphi 0, %s25
      %s45 = sphi 0, %s45
      %s47 = sphi 0, %s45
      %s48 = sphi 0, %s47
      %s62 = sphi 0, %s48
      %s68 = sphi 0, %s70
      %s71 = sphi 0, %s68
      %s72 = sphi 0, %s71
      %s88 = sphi 0, %s72
    $region4: #{tpu_custom_call.1} parent=1 // loop_header_branch
      %14 = sbr.rel (%p12) target = $region8
    $region5: #{tpu_custom_call.1} parent=1 // loop_body
      %s16 = ssub.s32 %s11, 1
      %s17 = ssub.s32 %s11, 2
      %s18 = sadd.s32 %s11, 1
      %s19 = ssub.s32 %s11, %s18
      %p20 = scmp.eq.s32.totalorder %s19, 0
      %s22 = sadd.s32 %s21, 1
      %s23 = scalar_select %p20, %s21, %s22
      %p26 = pneg %p20
      %p27 = scmp.eq.s32.totalorder %s11, 1
      %p28 = por %p26, %p27
      %p29 = scmp.ne.s32.totalorder %s21, %s24
      %p30 = scmp.eq.s32.totalorder %s11, 0
      %p31 = por %p29, %p30
      %p32 = scmp.ne.s32.totalorder %s21, %s24
      %p33 = scmp.eq.s32.totalorder %s16, 1
      %p34 = por %p32, %p33
      %p35 = scmp.ne.s32.totalorder %s24, %s25
      %p36 = scmp.eq.s32.totalorder %s16, 0
      %p37 = por %p35, %p36
      %p38 = scmp.ne.s32.totalorder %s24, %s25
      %p39 = scmp.eq.s32.totalorder %s17, 1
      %p40 = por %p38, %p39
      %p42 = scmp.ne.s32.totalorder %s25, %s41
      %p43 = scmp.eq.s32.totalorder %s17, 0
      %p44 = por %p42, %p43
      %s46 = sadd.s32 %s45, 1
      %p49 = scmp.eq.s32.totalorder %s11, 1
      %p50 = scmp.ne.s32.totalorder %s45, %s47
      %p51 = scmp.eq.s32.totalorder %s11, 0
      %p52 = por %p50, %p51
      %p53 = scmp.ne.s32.totalorder %s45, %s47
      %p54 = scmp.eq.s32.totalorder %s16, 1
      %p55 = por %p53, %p54
      %p56 = scmp.ne.s32.totalorder %s47, %s48
      %p57 = scmp.eq.s32.totalorder %s16, 0
      %p58 = por %p56, %p57
      %p59 = scmp.ne.s32.totalorder %s47, %s48
      %p60 = scmp.eq.s32.totalorder %s17, 1
      %p61 = por %p59, %p60
      %p63 = scmp.ne.s32.totalorder %s48, %s62
      %p64 = scmp.eq.s32.totalorder %s17, 0
      %p65 = por %p63, %p64
      %s66 = ssub.s32 %s11, %s18
      %p67 = scmp.eq.s32.totalorder %s66, 0
      %s69 = sadd.s32 %s68, 1
      %s70 = scalar_select %p67, %s68, %s69
      %p73 = pneg %p67
      %p74 = scmp.eq.s32.totalorder %s11, 1
      %p75 = por %p73, %p74
      %p76 = scmp.ne.s32.totalorder %s68, %s71
      %p77 = scmp.eq.s32.totalorder %s11, 0
      %p78 = por %p76, %p77
      %p79 = scmp.ne.s32.totalorder %s68, %s71
      %p80 = scmp.eq.s32.totalorder %s16, 1
      %p81 = por %p79, %p80
      %p82 = scmp.ne.s32.totalorder %s71, %s72
      %p83 = scmp.eq.s32.totalorder %s16, 0
      %p84 = por %p82, %p83
      %p85 = scmp.ne.s32.totalorder %s71, %s72
      %p86 = scmp.eq.s32.totalorder %s17, 1
      %p87 = por %p85, %p86
      %p89 = scmp.ne.s32.totalorder %s72, %s88
      %p90 = scmp.eq.s32.totalorder %s17, 0
      %p91 = por %p89, %p90
      %p92 = scmp.le.s32.totalorder 1, %s11
      %p93 = scmp.lt.s32.totalorder %s11, 3
      %p94 = pnand %p92, %p93
      %p95 = pneg %p94
      // Predicated region
      $region9: #{tpu_custom_call.1} parent=5 // pred_check
        _
      $region10: #{tpu_custom_call.1} parent=5 // pred_check_branch
        %97 = sbr.rel (%p94) target = $region12
      $region11: #{tpu_custom_call.1} parent=5 // pred_region
        %s98 = ssub.s32 %s11, 1
        // Predicated region
        $region13: #{tpu_custom_call.1} parent=11 // pred_check
          %p99 = pneg %p58
        $region14: #{tpu_custom_call.1} parent=11 // pred_check_branch
          %101 = sbr.rel (%p99) target = $region16
        $region15: #{tpu_custom_call.1} parent=11 // pred_region
          _
        $region16: #{tpu_custom_call.1} parent=11 // pred_fallthru
          _
      $region12: #{tpu_custom_call.1} parent=5 // pred_fallthru
        _
      %p102 = scmp.lt.s32.totalorder %s11, 2
      // Predicated region
      $region17: #{tpu_custom_call.1} parent=5 // pred_check
        %p103 = pneg %p102
      $region18: #{tpu_custom_call.1} parent=5 // pred_check_branch
        %105 = sbr.rel (%p103) target = $region20
      $region19: #{tpu_custom_call.1} parent=5 // pred_region
        // Predicated region
        $region21: #{tpu_custom_call.1} parent=19 // pred_check
          %p106 = pneg %p31
        $region22: #{tpu_custom_call.1} parent=19 // pred_check_branch
          %108 = sbr.rel (%p106) target = $region24
        $region23: #{tpu_custom_call.1} parent=19 // pred_region
          %p109 = scmp.lt.s32.totalorder %s11, 1
          %s110 = scalar_select %p109, %s11, 1
          %s111 = smul.addr %s110, 54
          %s112 = smul.addr %s111, 4
          %s113 = scalar_lea.vmem %s0, %s112
        $region24: #{tpu_custom_call.1} parent=19 // pred_fallthru
          _
      $region20: #{tpu_custom_call.1} parent=5 // pred_fallthru
        _
      %p114 = scmp.le.s32.totalorder 1, %s11
      %p115 = scmp.lt.s32.totalorder %s11, 3
      %p116 = pnand %p114, %p115
      %p117 = pneg %p116
      // Predicated region
      $region25: #{tpu_custom_call.1} parent=5 // pred_check
        _
      $region26: #{tpu_custom_call.1} parent=5 // pred_check_branch
        %119 = sbr.rel (%p116) target = $region28
      $region27: #{tpu_custom_call.1} parent=5 // pred_region
        %s120 = ssub.s32 %s11, 1
        %p121 = scmp.lt.s32.totalorder %s16, 1
        %s122 = scalar_select %p121, %s16, 1
        %s123 = smul.addr %s122, 54
        %s124 = smul.addr %s123, 4
        %s125 = scalar_lea.vmem %s0, %s124
        %p126 = pneg %p37
        %p127 = pneg %p34
        %p128 = pneg %p58
        %p129 = pneg %p55
        %p130 = pneg %p84
        %p131 = pneg %p81
        %s132 = sand.u32 %s71, 1
        %s133 = scalar_lea.sflag [#allocation3], %s132
        %s134 = sand.u32 %s71, 1
        %s135 = smul.addr %s134, 2
        %s136 = scalar_lea.vmem [#allocation2], %s135
        %p137 = scmp.lt.s32.totalorder %s16, 1
        %s138 = scalar_select %p137, %s16, 1
        %s139 = smul.addr %s138, 54
        %s140 = smul.addr %s139, 4
        %s141 = scalar_lea.vmem %s0, %s140
        %s143 = scalar_lea.vmem %s141, 12
        %v144 = vld [vmem:[%s143] sm:$0xf]
        %v145 = vld [vmem:[%s143 + $0x4] sm:$0xf]
        %v146 = vld [vmem:[%s143 + $0x8] sm:$0x1]
        %v147 = vld [vmem:[%s143 + $0xc] sm:$0xf]
        %v148 = vld [vmem:[%s143 + $0x10] sm:$0xf]
        %v149 = vld [vmem:[%s143 + $0x14] sm:$0x1]
        %v150 = vld [vmem:[%s143 + $0x18] sm:$0xf]
        %v151 = vld [vmem:[%s143 + $0x1c] sm:$0xf]
        %v152 = vld [vmem:[%s143 + $0x20] sm:$0x1]
        %v153 = vld [vmem:[%s143 + $0x24] sm:$0xf]
        %v154 = vld [vmem:[%s143 + $0x28] sm:$0xf]
        %v155 = vld [vmem:[%s143 + $0x2c] sm:$0x1]
        %v156 = vld [vmem:[%s143 + $0x30] sm:$0xf]
        %v157 = vld [vmem:[%s143 + $0x34] sm:$0xf]
        %v158 = vld [vmem:[%s143 + $0x38] sm:$0x1]
        %v159 = vld [vmem:[%s143 + $0x3c] sm:$0xf]
        %v160 = vld [vmem:[%s143 + $0x40] sm:$0xf]
        %v161 = vld [vmem:[%s143 + $0x44] sm:$0x1]
        %v162 = vld [vmem:[%s143 + $0x48] sm:$0xf]
        %v163 = vld [vmem:[%s143 + $0x4c] sm:$0xf]
        %v164 = vld [vmem:[%s143 + $0x50] sm:$0x1]
        %v165 = vld [vmem:[%s143 + $0x54] sm:$0xf]
        %v166 = vld [vmem:[%s143 + $0x58] sm:$0xf]
        %v167 = vld [vmem:[%s143 + $0x5c] sm:$0x1]
        %v168 = vld [vmem:[%s143 + $0x60] sm:$0xf]
        %v169 = vld [vmem:[%s143 + $0x64] sm:$0xf]
        %v170 = vld [vmem:[%s143 + $0x68] sm:$0x1]
        %v171 = vld [vmem:[%s143 + $0x6c] sm:$0xf]
        %v172 = vld [vmem:[%s143 + $0x70] sm:$0xf]
        %v173 = vld [vmem:[%s143 + $0x74] sm:$0x1]
        %v174 = vld [vmem:[%s143 + $0x78] sm:$0xf]
        %v175 = vld [vmem:[%s143 + $0x7c] sm:$0xf]
        %v176 = vld [vmem:[%s143 + $0x80] sm:$0x1]
        %v177 = vld [vmem:[%s143 + $0x84] sm:$0xf]
        %v178 = vld [vmem:[%s143 + $0x88] sm:$0xf]
        %v179 = vld [vmem:[%s143 + $0x8c] sm:$0x1]
        %v180 = vld [vmem:[%s143 + $0x90] sm:$0xf]
        %v181 = vld [vmem:[%s143 + $0x94] sm:$0xf]
        %v182 = vld [vmem:[%s143 + $0x98] sm:$0x1]
        %v183 = vld [vmem:[%s143 + $0x9c] sm:$0xf]
        %v184 = vld [vmem:[%s143 + $0xa0] sm:$0xf]
        %v185 = vld [vmem:[%s143 + $0xa4] sm:$0x1]
        %v186 = vld [vmem:[%s143 + $0xa8] sm:$0xf]
        %v187 = vld [vmem:[%s143 + $0xac] sm:$0xf]
        %v188 = vld [vmem:[%s143 + $0xb0] sm:$0x1]
        %v189 = vld [vmem:[%s143 + $0xb4] sm:$0xf]
        %v190 = vld [vmem:[%s143 + $0xb8] sm:$0xf]
        %v191 = vld [vmem:[%s143 + $0xbc] sm:$0x1]
        %v192 = vld [vmem:[%s141] sm:$0xf]
        %v193 = vld [vmem:[%s141 + $0x4] sm:$0xf]
        %v194 = vld [vmem:[%s141 + $0x8] sm:$0x1]
        %v195 = vld [vmem:[%s141 + $0xc] sm:$0xf]
        %v196 = vld [vmem:[%s141 + $0x10] sm:$0xf]
        %v197 = vld [vmem:[%s141 + $0x14] sm:$0x1]
        %v198 = vld [vmem:[%s141 + $0x18] sm:$0xf]
        %v199 = vld [vmem:[%s141 + $0x1c] sm:$0xf]
        %v200 = vld [vmem:[%s141 + $0x20] sm:$0x1]
        %v201 = vld [vmem:[%s141 + $0x24] sm:$0xf]
        %v202 = vld [vmem:[%s141 + $0x28] sm:$0xf]
        %v203 = vld [vmem:[%s141 + $0x2c] sm:$0x1]
        %v204 = vld [vmem:[%s141 + $0x30] sm:$0xf]
        %v205 = vld [vmem:[%s141 + $0x34] sm:$0xf]
        %v206 = vld [vmem:[%s141 + $0x38] sm:$0x1]
        %v207 = vld [vmem:[%s141 + $0x3c] sm:$0xf]
        %v208 = vld [vmem:[%s141 + $0x40] sm:$0xf]
        %v209 = vld [vmem:[%s141 + $0x44] sm:$0x1]
        %v210 = vld [vmem:[%s141 + $0x48] sm:$0xf]
        %v211 = vld [vmem:[%s141 + $0x4c] sm:$0xf]
        %v212 = vld [vmem:[%s141 + $0x50] sm:$0x1]
        %v213 = vld [vmem:[%s141 + $0x54] sm:$0xf]
        %v214 = vld [vmem:[%s141 + $0x58] sm:$0xf]
        %v215 = vld [vmem:[%s141 + $0x5c] sm:$0x1]
        %v216 = vld [vmem:[%s141 + $0x60] sm:$0xf]
        %v217 = vld [vmem:[%s141 + $0x64] sm:$0xf]
        %v218 = vld [vmem:[%s141 + $0x68] sm:$0x1]
        %v219 = vld [vmem:[%s141 + $0x6c] sm:$0xf]
        %v220 = vld [vmem:[%s141 + $0x70] sm:$0xf]
        %v221 = vld [vmem:[%s141 + $0x74] sm:$0x1]
        %v222 = vld [vmem:[%s141 + $0x78] sm:$0xf]
        %v223 = vld [vmem:[%s141 + $0x7c] sm:$0xf]
        %v224 = vld [vmem:[%s141 + $0x80] sm:$0x1]
        %v225 = vld [vmem:[%s141 + $0x84] sm:$0xf]
        %v226 = vld [vmem:[%s141 + $0x88] sm:$0xf]
        %v227 = vld [vmem:[%s141 + $0x8c] sm:$0x1]
        %v228 = vld [vmem:[%s141 + $0x90] sm:$0xf]
        %v229 = vld [vmem:[%s141 + $0x94] sm:$0xf]
        %v230 = vld [vmem:[%s141 + $0x98] sm:$0x1]
        %v231 = vld [vmem:[%s141 + $0x9c] sm:$0xf]
        %v232 = vld [vmem:[%s141 + $0xa0] sm:$0xf]
        %v233 = vld [vmem:[%s141 + $0xa4] sm:$0x1]
        %v234 = vld [vmem:[%s141 + $0xa8] sm:$0xf]
        %v235 = vld [vmem:[%s141 + $0xac] sm:$0xf]
        %v236 = vld [vmem:[%s141 + $0xb0] sm:$0x1]
        %v237 = vld [vmem:[%s141 + $0xb4] sm:$0xf]
        %v238 = vld [vmem:[%s141 + $0xb8] sm:$0xf]
        %v239 = vld [vmem:[%s141 + $0xbc] sm:$0x1]
        %v288 = vunpack.c.l.b16 %v144
        %v289 = vunpack.c.l.b16 %v145
        %v290 = vunpack.c.l.b16 %v146
        %v291 = vunpack.c.l.b16 %v147
        %v292 = vunpack.c.l.b16 %v148
        %v293 = vunpack.c.l.b16 %v149
        %v294 = vunpack.c.l.b16 %v150
        %v295 = vunpack.c.l.b16 %v151
        %v296 = vunpack.c.l.b16 %v152
        %v297 = vunpack.c.l.b16 %v153
        %v298 = vunpack.c.l.b16 %v154
        %v299 = vunpack.c.l.b16 %v155
        %v300 = vunpack.c.l.b16 %v156
        %v301 = vunpack.c.l.b16 %v157
        %v302 = vunpack.c.l.b16 %v158
        %v303 = vunpack.c.l.b16 %v159
        %v304 = vunpack.c.l.b16 %v160
        %v305 = vunpack.c.l.b16 %v161
        %v306 = vunpack.c.l.b16 %v162
        %v307 = vunpack.c.l.b16 %v163
        %v308 = vunpack.c.l.b16 %v164
        %v309 = vunpack.c.l.b16 %v165
        %v310 = vunpack.c.l.b16 %v166
        %v311 = vunpack.c.l.b16 %v167
        %v312 = vunpack.c.l.b16 %v168
        %v313 = vunpack.c.l.b16 %v169
        %v314 = vunpack.c.l.b16 %v170
        %v315 = vunpack.c.l.b16 %v171
        %v316 = vunpack.c.l.b16 %v172
        %v317 = vunpack.c.l.b16 %v173
        %v318 = vunpack.c.l.b16 %v174
        %v319 = vunpack.c.l.b16 %v175
        %v320 = vunpack.c.l.b16 %v176
        %v321 = vunpack.c.l.b16 %v177
        %v322 = vunpack.c.l.b16 %v178
        %v323 = vunpack.c.l.b16 %v179
        %v324 = vunpack.c.l.b16 %v180
        %v325 = vunpack.c.l.b16 %v181
        %v326 = vunpack.c.l.b16 %v182
        %v327 = vunpack.c.l.b16 %v183
        %v328 = vunpack.c.l.b16 %v184
        %v329 = vunpack.c.l.b16 %v185
        %v330 = vunpack.c.l.b16 %v186
        %v331 = vunpack.c.l.b16 %v187
        %v332 = vunpack.c.l.b16 %v188
        %v333 = vunpack.c.l.b16 %v189
        %v334 = vunpack.c.l.b16 %v190
        %v335 = vunpack.c.l.b16 %v191
        %v336 = vpack.c.b16 %v289, %v288
        %v337 = vpack.c.b16 %v290, %v290
        %v338 = vpack.c.b16 %v292, %v291
        %v339 = vpack.c.b16 %v293, %v293
        %v340 = vpack.c.b16 %v295, %v294
        %v341 = vpack.c.b16 %v296, %v296
        %v342 = vpack.c.b16 %v298, %v297
        %v343 = vpack.c.b16 %v299, %v299
        %v344 = vpack.c.b16 %v301, %v300
        %v345 = vpack.c.b16 %v302, %v302
        %v346 = vpack.c.b16 %v304, %v303
        %v347 = vpack.c.b16 %v305, %v305
        %v348 = vpack.c.b16 %v307, %v306
        %v349 = vpack.c.b16 %v308, %v308
        %v350 = vpack.c.b16 %v310, %v309
        %v351 = vpack.c.b16 %v311, %v311
        %v352 = vpack.c.b16 %v313, %v312
        %v353 = vpack.c.b16 %v314, %v314
        %v354 = vpack.c.b16 %v316, %v315
        %v355 = vpack.c.b16 %v317, %v317
        %v356 = vpack.c.b16 %v319, %v318
        %v357 = vpack.c.b16 %v320, %v320
        %v358 = vpack.c.b16 %v322, %v321
        %v359 = vpack.c.b16 %v323, %v323
        %v360 = vpack.c.b16 %v325, %v324
        %v361 = vpack.c.b16 %v326, %v326
        %v362 = vpack.c.b16 %v328, %v327
        %v363 = vpack.c.b16 %v329, %v329
        %v364 = vpack.c.b16 %v331, %v330
        %v365 = vpack.c.b16 %v332, %v332
        %v366 = vpack.c.b16 %v334, %v333
        %v367 = vpack.c.b16 %v335, %v335
        %v369 = vshrl.u32 %v336, 16
        %v371 = vrot.slane %v369, 7
        %v372 = vshll.u32 %v336, 16
        %v374 = vor.u32 %v371, %v372
        %v376 = vshrl.u32 %v338, 16
        %v378 = vrot.slane %v376, 7
        %v379 = vshll.u32 %v338, 16
        %v381 = vor.u32 %v378, %v379
        %v383 = vshrl.u32 %v340, 16
        %v385 = vrot.slane %v383, 7
        %v386 = vshll.u32 %v340, 16
        %v388 = vor.u32 %v385, %v386
        %v390 = vshrl.u32 %v342, 16
        %v392 = vrot.slane %v390, 7
        %v393 = vshll.u32 %v342, 16
        %v395 = vor.u32 %v392, %v393
        %v397 = vshrl.u32 %v344, 16
        %v399 = vrot.slane %v397, 7
        %v400 = vshll.u32 %v344, 16
        %v402 = vor.u32 %v399, %v400
        %v404 = vshrl.u32 %v346, 16
        %v406 = vrot.slane %v404, 7
        %v407 = vshll.u32 %v346, 16
        %v409 = vor.u32 %v406, %v407
        %v411 = vshrl.u32 %v348, 16
        %v413 = vrot.slane %v411, 7
        %v414 = vshll.u32 %v348, 16
        %v416 = vor.u32 %v413, %v414
        %v418 = vshrl.u32 %v350, 16
        %v420 = vrot.slane %v418, 7
        %v421 = vshll.u32 %v350, 16
        %v423 = vor.u32 %v420, %v421
        %v425 = vshrl.u32 %v352, 16
        %v427 = vrot.slane %v425, 7
        %v428 = vshll.u32 %v352, 16
        %v430 = vor.u32 %v427, %v428
        %v432 = vshrl.u32 %v354, 16
        %v434 = vrot.slane %v432, 7
        %v435 = vshll.u32 %v354, 16
        %v437 = vor.u32 %v434, %v435
        %v439 = vshrl.u32 %v356, 16
        %v441 = vrot.slane %v439, 7
        %v442 = vshll.u32 %v356, 16
        %v444 = vor.u32 %v441, %v442
        %v446 = vshrl.u32 %v358, 16
        %v448 = vrot.slane %v446, 7
        %v449 = vshll.u32 %v358, 16
        %v451 = vor.u32 %v448, %v449
        %v453 = vshrl.u32 %v360, 16
        %v455 = vrot.slane %v453, 7
        %v456 = vshll.u32 %v360, 16
        %v458 = vor.u32 %v455, %v456
        %v460 = vshrl.u32 %v362, 16
        %v462 = vrot.slane %v460, 7
        %v463 = vshll.u32 %v362, 16
        %v465 = vor.u32 %v462, %v463
        %v467 = vshrl.u32 %v364, 16
        %v469 = vrot.slane %v467, 7
        %v470 = vshll.u32 %v364, 16
        %v472 = vor.u32 %v469, %v470
        %v474 = vshrl.u32 %v366, 16
        %v476 = vrot.slane %v474, 7
        %v477 = vshll.u32 %v366, 16
        %v479 = vor.u32 %v476, %v477
        %480 = vrot.lane.b32.xlu0 %v374, 4
        %v481 = vpop.permute.xlu0 %480
        %482 = vrot.lane.b32.xlu0 %v371, 4
        %v483 = vpop.permute.xlu0 %482
        %484 = vrot.lane.b32.xlu0 %v381, 4
        %v485 = vpop.permute.xlu0 %484
        %486 = vrot.lane.b32.xlu0 %v378, 4
        %v487 = vpop.permute.xlu0 %486
        %488 = vrot.lane.b32.xlu0 %v388, 4
        %v489 = vpop.permute.xlu0 %488
        %490 = vrot.lane.b32.xlu0 %v385, 4
        %v491 = vpop.permute.xlu0 %490
        %492 = vrot.lane.b32.xlu0 %v395, 4
        %v493 = vpop.permute.xlu0 %492
        %494 = vrot.lane.b32.xlu0 %v392, 4
        %v495 = vpop.permute.xlu0 %494
        %496 = vrot.lane.b32.xlu0 %v402, 4
        %v497 = vpop.permute.xlu0 %496
        %498 = vrot.lane.b32.xlu0 %v399, 4
        %v499 = vpop.permute.xlu0 %498
        %500 = vrot.lane.b32.xlu0 %v409, 4
        %v501 = vpop.permute.xlu0 %500
        %502 = vrot.lane.b32.xlu0 %v406, 4
        %v503 = vpop.permute.xlu0 %502
        %504 = vrot.lane.b32.xlu0 %v416, 4
        %v505 = vpop.permute.xlu0 %504
        %506 = vrot.lane.b32.xlu0 %v413, 4
        %v507 = vpop.permute.xlu0 %506
        %508 = vrot.lane.b32.xlu0 %v423, 4
        %v509 = vpop.permute.xlu0 %508
        %510 = vrot.lane.b32.xlu0 %v420, 4
        %v511 = vpop.permute.xlu0 %510
        %512 = vrot.lane.b32.xlu0 %v430, 4
        %v513 = vpop.permute.xlu0 %512
        %514 = vrot.lane.b32.xlu0 %v427, 4
        %v515 = vpop.permute.xlu0 %514
        %516 = vrot.lane.b32.xlu0 %v437, 4
        %v517 = vpop.permute.xlu0 %516
        %518 = vrot.lane.b32.xlu0 %v434, 4
        %v519 = vpop.permute.xlu0 %518
        %520 = vrot.lane.b32.xlu0 %v444, 4
        %v521 = vpop.permute.xlu0 %520
        %522 = vrot.lane.b32.xlu0 %v441, 4
        %v523 = vpop.permute.xlu0 %522
        %524 = vrot.lane.b32.xlu0 %v451, 4
        %v525 = vpop.permute.xlu0 %524
        %526 = vrot.lane.b32.xlu0 %v448, 4
        %v527 = vpop.permute.xlu0 %526
        %528 = vrot.lane.b32.xlu0 %v458, 4
        %v529 = vpop.permute.xlu0 %528
        %530 = vrot.lane.b32.xlu0 %v455, 4
        %v531 = vpop.permute.xlu0 %530
        %532 = vrot.lane.b32.xlu0 %v465, 4
        %v533 = vpop.permute.xlu0 %532
        %534 = vrot.lane.b32.xlu0 %v462, 4
        %v535 = vpop.permute.xlu0 %534
        %536 = vrot.lane.b32.xlu0 %v472, 4
        %v537 = vpop.permute.xlu0 %536
        %538 = vrot.lane.b32.xlu0 %v469, 4
        %v539 = vpop.permute.xlu0 %538
        %540 = vrot.lane.b32.xlu0 %v479, 4
        %v541 = vpop.permute.xlu0 %540
        %542 = vrot.lane.b32.xlu0 %v476, 4
        %v543 = vpop.permute.xlu0 %542
        %v592 = vunpack.c.l.b16 %v192
        %v593 = vunpack.c.l.b16 %v193
        %v594 = vunpack.c.l.b16 %v194
        %v595 = vunpack.c.l.b16 %v195
        %v596 = vunpack.c.l.b16 %v196
        %v597 = vunpack.c.l.b16 %v197
        %v598 = vunpack.c.l.b16 %v198
        %v599 = vunpack.c.l.b16 %v199
        %v600 = vunpack.c.l.b16 %v200
        %v601 = vunpack.c.l.b16 %v201
        %v602 = vunpack.c.l.b16 %v202
        %v603 = vunpack.c.l.b16 %v203
        %v604 = vunpack.c.l.b16 %v204
        %v605 = vunpack.c.l.b16 %v205
        %v606 = vunpack.c.l.b16 %v206
        %v607 = vunpack.c.l.b16 %v207
        %v608 = vunpack.c.l.b16 %v208
        %v609 = vunpack.c.l.b16 %v209
        %v610 = vunpack.c.l.b16 %v210
        %v611 = vunpack.c.l.b16 %v211
        %v612 = vunpack.c.l.b16 %v212
        %v613 = vunpack.c.l.b16 %v213
        %v614 = vunpack.c.l.b16 %v214
        %v615 = vunpack.c.l.b16 %v215
        %v616 = vunpack.c.l.b16 %v216
        %v617 = vunpack.c.l.b16 %v217
        %v618 = vunpack.c.l.b16 %v218
        %v619 = vunpack.c.l.b16 %v219
        %v620 = vunpack.c.l.b16 %v220
        %v621 = vunpack.c.l.b16 %v221
        %v622 = vunpack.c.l.b16 %v222
        %v623 = vunpack.c.l.b16 %v223
        %v624 = vunpack.c.l.b16 %v224
        %v625 = vunpack.c.l.b16 %v225
        %v626 = vunpack.c.l.b16 %v226
        %v627 = vunpack.c.l.b16 %v227
        %v628 = vunpack.c.l.b16 %v228
        %v629 = vunpack.c.l.b16 %v229
        %v630 = vunpack.c.l.b16 %v230
        %v631 = vunpack.c.l.b16 %v231
        %v632 = vunpack.c.l.b16 %v232
        %v633 = vunpack.c.l.b16 %v233
        %v634 = vunpack.c.l.b16 %v234
        %v635 = vunpack.c.l.b16 %v235
        %v636 = vunpack.c.l.b16 %v236
        %v637 = vunpack.c.l.b16 %v237
        %v638 = vunpack.c.l.b16 %v238
        %v639 = vunpack.c.l.b16 %v239
        %v640 = vpack.c.b16 %v593, %v592
        %v641 = vpack.c.b16 %v594, %v594
        %v642 = vpack.c.b16 %v596, %v595
        %v643 = vpack.c.b16 %v597, %v597
        %v644 = vpack.c.b16 %v599, %v598
        %v645 = vpack.c.b16 %v600, %v600
        %v646 = vpack.c.b16 %v602, %v601
        %v647 = vpack.c.b16 %v603, %v603
        %v648 = vpack.c.b16 %v605, %v604
        %v649 = vpack.c.b16 %v606, %v606
        %v650 = vpack.c.b16 %v608, %v607
        %v651 = vpack.c.b16 %v609, %v609
        %v652 = vpack.c.b16 %v611, %v610
        %v653 = vpack.c.b16 %v612, %v612
        %v654 = vpack.c.b16 %v614, %v613
        %v655 = vpack.c.b16 %v615, %v615
        %v656 = vpack.c.b16 %v617, %v616
        %v657 = vpack.c.b16 %v618, %v618
        %v658 = vpack.c.b16 %v620, %v619
        %v659 = vpack.c.b16 %v621, %v621
        %v660 = vpack.c.b16 %v623, %v622
        %v661 = vpack.c.b16 %v624, %v624
        %v662 = vpack.c.b16 %v626, %v625
        %v663 = vpack.c.b16 %v627, %v627
        %v664 = vpack.c.b16 %v629, %v628
        %v665 = vpack.c.b16 %v630, %v630
        %v666 = vpack.c.b16 %v632, %v631
        %v667 = vpack.c.b16 %v633, %v633
        %v668 = vpack.c.b16 %v635, %v634
        %v669 = vpack.c.b16 %v636, %v636
        %v670 = vpack.c.b16 %v638, %v637
        %v671 = vpack.c.b16 %v639, %v639
        %672 = vrot.lane.b32.xlu0 %v640, 8
        %v673 = vpop.permute.xlu0 %672
        %674 = vrot.lane.b32.xlu0 %v641, 8
        %v675 = vpop.permute.xlu0 %674
        %676 = vrot.lane.b32.xlu0 %v642, 8
        %v677 = vpop.permute.xlu0 %676
        %678 = vrot.lane.b32.xlu0 %v643, 8
        %v679 = vpop.permute.xlu0 %678
        %680 = vrot.lane.b32.xlu0 %v644, 8
        %v681 = vpop.permute.xlu0 %680
        %682 = vrot.lane.b32.xlu0 %v645, 8
        %v683 = vpop.permute.xlu0 %682
        %684 = vrot.lane.b32.xlu0 %v646, 8
        %v685 = vpop.permute.xlu0 %684
        %686 = vrot.lane.b32.xlu0 %v647, 8
        %v687 = vpop.permute.xlu0 %686
        %688 = vrot.lane.b32.xlu0 %v648, 8
        %v689 = vpop.permute.xlu0 %688
        %690 = vrot.lane.b32.xlu0 %v649, 8
        %v691 = vpop.permute.xlu0 %690
        %692 = vrot.lane.b32.xlu0 %v650, 8
        %v693 = vpop.permute.xlu0 %692
        %694 = vrot.lane.b32.xlu0 %v651, 8
        %v695 = vpop.permute.xlu0 %694
        %696 = vrot.lane.b32.xlu0 %v652, 8
        %v697 = vpop.permute.xlu0 %696
        %698 = vrot.lane.b32.xlu0 %v653, 8
        %v699 = vpop.permute.xlu0 %698
        %700 = vrot.lane.b32.xlu0 %v654, 8
        %v701 = vpop.permute.xlu0 %700
        %702 = vrot.lane.b32.xlu0 %v655, 8
        %v703 = vpop.permute.xlu0 %702
        %704 = vrot.lane.b32.xlu0 %v656, 8
        %v705 = vpop.permute.xlu0 %704
        %706 = vrot.lane.b32.xlu0 %v657, 8
        %v707 = vpop.permute.xlu0 %706
        %708 = vrot.lane.b32.xlu0 %v658, 8
        %v709 = vpop.permute.xlu0 %708
        %710 = vrot.lane.b32.xlu0 %v659, 8
        %v711 = vpop.permute.xlu0 %710
        %712 = vrot.lane.b32.xlu0 %v660, 8
        %v713 = vpop.permute.xlu0 %712
        %714 = vrot.lane.b32.xlu0 %v661, 8
        %v715 = vpop.permute.xlu0 %714
        %716 = vrot.lane.b32.xlu0 %v662, 8
        %v717 = vpop.permute.xlu0 %716
        %718 = vrot.lane.b32.xlu0 %v663, 8
        %v719 = vpop.permute.xlu0 %718
        %720 = vrot.lane.b32.xlu0 %v664, 8
        %v721 = vpop.permute.xlu0 %720
        %722 = vrot.lane.b32.xlu0 %v665, 8
        %v723 = vpop.permute.xlu0 %722
        %724 = vrot.lane.b32.xlu0 %v666, 8
        %v725 = vpop.permute.xlu0 %724
        %726 = vrot.lane.b32.xlu0 %v667, 8
        %v727 = vpop.permute.xlu0 %726
        %728 = vrot.lane.b32.xlu0 %v668, 8
        %v729 = vpop.permute.xlu0 %728
        %730 = vrot.lane.b32.xlu0 %v669, 8
        %v731 = vpop.permute.xlu0 %730
        %732 = vrot.lane.b32.xlu0 %v670, 8
        %v733 = vpop.permute.xlu0 %732
        %734 = vrot.lane.b32.xlu0 %v671, 8
        %v735 = vpop.permute.xlu0 %734
        %v737 = vshrl.u32 %v640, 16
        %v739 = vrot.slane %v737, 7
        %v740 = vshll.u32 %v640, 16
        %v742 = vor.u32 %v739, %v740
        %v744 = vshrl.u32 %v642, 16
        %v746 = vrot.slane %v744, 7
        %v747 = vshll.u32 %v642, 16
        %v749 = vor.u32 %v746, %v747
        %v751 = vshrl.u32 %v644, 16
        %v753 = vrot.slane %v751, 7
        %v754 = vshll.u32 %v644, 16
        %v756 = vor.u32 %v753, %v754
        %v758 = vshrl.u32 %v646, 16
        %v760 = vrot.slane %v758, 7
        %v761 = vshll.u32 %v646, 16
        %v763 = vor.u32 %v760, %v761
        %v765 = vshrl.u32 %v648, 16
        %v767 = vrot.slane %v765, 7
        %v768 = vshll.u32 %v648, 16
        %v770 = vor.u32 %v767, %v768
        %v772 = vshrl.u32 %v650, 16
        %v774 = vrot.slane %v772, 7
        %v775 = vshll.u32 %v650, 16
        %v777 = vor.u32 %v774, %v775
        %v779 = vshrl.u32 %v652, 16
        %v781 = vrot.slane %v779, 7
        %v782 = vshll.u32 %v652, 16
        %v784 = vor.u32 %v781, %v782
        %v786 = vshrl.u32 %v654, 16
        %v788 = vrot.slane %v786, 7
        %v789 = vshll.u32 %v654, 16
        %v791 = vor.u32 %v788, %v789
        %v793 = vshrl.u32 %v656, 16
        %v795 = vrot.slane %v793, 7
        %v796 = vshll.u32 %v656, 16
        %v798 = vor.u32 %v795, %v796
        %v800 = vshrl.u32 %v658, 16
        %v802 = vrot.slane %v800, 7
        %v803 = vshll.u32 %v658, 16
        %v805 = vor.u32 %v802, %v803
        %v807 = vshrl.u32 %v660, 16
        %v809 = vrot.slane %v807, 7
        %v810 = vshll.u32 %v660, 16
        %v812 = vor.u32 %v809, %v810
        %v814 = vshrl.u32 %v662, 16
        %v816 = vrot.slane %v814, 7
        %v817 = vshll.u32 %v662, 16
        %v819 = vor.u32 %v816, %v817
        %v821 = vshrl.u32 %v664, 16
        %v823 = vrot.slane %v821, 7
        %v824 = vshll.u32 %v664, 16
        %v826 = vor.u32 %v823, %v824
        %v828 = vshrl.u32 %v666, 16
        %v830 = vrot.slane %v828, 7
        %v831 = vshll.u32 %v666, 16
        %v833 = vor.u32 %v830, %v831
        %v835 = vshrl.u32 %v668, 16
        %v837 = vrot.slane %v835, 7
        %v838 = vshll.u32 %v668, 16
        %v840 = vor.u32 %v837, %v838
        %v842 = vshrl.u32 %v670, 16
        %v844 = vrot.slane %v842, 7
        %v845 = vshll.u32 %v670, 16
        %v847 = vor.u32 %v844, %v845
        %848 = vrot.lane.b32.xlu0 %v742, 12
        %v849 = vpop.permute.xlu0 %848
        %850 = vrot.lane.b32.xlu0 %v739, 12
        %v851 = vpop.permute.xlu0 %850
        %852 = vrot.lane.b32.xlu0 %v749, 12
        %v853 = vpop.permute.xlu0 %852
        %854 = vrot.lane.b32.xlu0 %v746, 12
        %v855 = vpop.permute.xlu0 %854
        %856 = vrot.lane.b32.xlu0 %v756, 12
        %v857 = vpop.permute.xlu0 %856
        %858 = vrot.lane.b32.xlu0 %v753, 12
        %v859 = vpop.permute.xlu0 %858
        %860 = vrot.lane.b32.xlu0 %v763, 12
        %v861 = vpop.permute.xlu0 %860
        %862 = vrot.lane.b32.xlu0 %v760, 12
        %v863 = vpop.permute.xlu0 %862
        %864 = vrot.lane.b32.xlu0 %v770, 12
        %v865 = vpop.permute.xlu0 %864
        %866 = vrot.lane.b32.xlu0 %v767, 12
        %v867 = vpop.permute.xlu0 %866
        %868 = vrot.lane.b32.xlu0 %v777, 12
        %v869 = vpop.permute.xlu0 %868
        %870 = vrot.lane.b32.xlu0 %v774, 12
        %v871 = vpop.permute.xlu0 %870
        %872 = vrot.lane.b32.xlu0 %v784, 12
        %v873 = vpop.permute.xlu0 %872
        %874 = vrot.lane.b32.xlu0 %v781, 12
        %v875 = vpop.permute.xlu0 %874
        %876 = vrot.lane.b32.xlu0 %v791, 12
        %v877 = vpop.permute.xlu0 %876
        %878 = vrot.lane.b32.xlu0 %v788, 12
        %v879 = vpop.permute.xlu0 %878
        %880 = vrot.lane.b32.xlu0 %v798, 12
        %v881 = vpop.permute.xlu0 %880
        %882 = vrot.lane.b32.xlu0 %v795, 12
        %v883 = vpop.permute.xlu0 %882
        %884 = vrot.lane.b32.xlu0 %v805, 12
        %v885 = vpop.permute.xlu0 %884
        %886 = vrot.lane.b32.xlu0 %v802, 12
        %v887 = vpop.permute.xlu0 %886
        %888 = vrot.lane.b32.xlu0 %v812, 12
        %v889 = vpop.permute.xlu0 %888
        %890 = vrot.lane.b32.xlu0 %v809, 12
        %v891 = vpop.permute.xlu0 %890
        %892 = vrot.lane.b32.xlu0 %v819, 12
        %v893 = vpop.permute.xlu0 %892
        %894 = vrot.lane.b32.xlu0 %v816, 12
        %v895 = vpop.permute.xlu0 %894
        %896 = vrot.lane.b32.xlu0 %v826, 12
        %v897 = vpop.permute.xlu0 %896
        %898 = vrot.lane.b32.xlu0 %v823, 12
        %v899 = vpop.permute.xlu0 %898
        %900 = vrot.lane.b32.xlu0 %v833, 12
        %v901 = vpop.permute.xlu0 %900
        %902 = vrot.lane.b32.xlu0 %v830, 12
        %v903 = vpop.permute.xlu0 %902
        %904 = vrot.lane.b32.xlu0 %v840, 12
        %v905 = vpop.permute.xlu0 %904
        %906 = vrot.lane.b32.xlu0 %v837, 12
        %v907 = vpop.permute.xlu0 %906
        %908 = vrot.lane.b32.xlu0 %v847, 12
        %v909 = vpop.permute.xlu0 %908
        %910 = vrot.lane.b32.xlu0 %v844, 12
        %v911 = vpop.permute.xlu0 %910
        %vm912 = vcmask 31744
        %v914 = vsel %vm912, %v336, %v481
        %v917 = vsel %vm912, %v337, %v483
        %v919 = vsel %vm912, %v338, %v485
        %v922 = vsel %vm912, %v339, %v487
        %v924 = vsel %vm912, %v340, %v489
        %v927 = vsel %vm912, %v341, %v491
        %v929 = vsel %vm912, %v342, %v493
        %v932 = vsel %vm912, %v343, %v495
        %v934 = vsel %vm912, %v344, %v497
        %v937 = vsel %vm912, %v345, %v499
        %v939 = vsel %vm912, %v346, %v501
        %v942 = vsel %vm912, %v347, %v503
        %v944 = vsel %vm912, %v348, %v505
        %v947 = vsel %vm912, %v349, %v507
        %v949 = vsel %vm912, %v350, %v509
        %v952 = vsel %vm912, %v351, %v511
        %v954 = vsel %vm912, %v352, %v513
        %v957 = vsel %vm912, %v353, %v515
        %v959 = vsel %vm912, %v354, %v517
        %v962 = vsel %vm912, %v355, %v519
        %v964 = vsel %vm912, %v356, %v521
        %v967 = vsel %vm912, %v357, %v523
        %v969 = vsel %vm912, %v358, %v525
        %v972 = vsel %vm912, %v359, %v527
        %v974 = vsel %vm912, %v360, %v529
        %v977 = vsel %vm912, %v361, %v531
        %v979 = vsel %vm912, %v362, %v533
        %v982 = vsel %vm912, %v363, %v535
        %v984 = vsel %vm912, %v364, %v537
        %v987 = vsel %vm912, %v365, %v539
        %v989 = vsel %vm912, %v366, %v541
        %v992 = vsel %vm912, %v367, %v543
        %vm993 = vcmask 64512
        %v995 = vsel %vm993, %v914, %v673
        %v997 = vsel %vm993, %v917, %v675
        %v999 = vsel %vm993, %v919, %v677
        %v1001 = vsel %vm993, %v922, %v679
        %v1003 = vsel %vm993, %v924, %v681
        %v1005 = vsel %vm993, %v927, %v683
        %v1007 = vsel %vm993, %v929, %v685
        %v1009 = vsel %vm993, %v932, %v687
        %v1011 = vsel %vm993, %v934, %v689
        %v1013 = vsel %vm993, %v937, %v691
        %v1015 = vsel %vm993, %v939, %v693
        %v1017 = vsel %vm993, %v942, %v695
        %v1019 = vsel %vm993, %v944, %v697
        %v1021 = vsel %vm993, %v947, %v699
        %v1023 = vsel %vm993, %v949, %v701
        %v1025 = vsel %vm993, %v952, %v703
        %v1027 = vsel %vm993, %v954, %v705
        %v1029 = vsel %vm993, %v957, %v707
        %v1031 = vsel %vm993, %v959, %v709
        %v1033 = vsel %vm993, %v962, %v711
        %v1035 = vsel %vm993, %v964, %v713
        %v1037 = vsel %vm993, %v967, %v715
        %v1039 = vsel %vm993, %v969, %v717
        %v1041 = vsel %vm993, %v972, %v719
        %v1043 = vsel %vm993, %v974, %v721
        %v1045 = vsel %vm993, %v977, %v723
        %v1047 = vsel %vm993, %v979, %v725
        %v1049 = vsel %vm993, %v982, %v727
        %v1051 = vsel %vm993, %v984, %v729
        %v1053 = vsel %vm993, %v987, %v731
        %v1055 = vsel %vm993, %v989, %v733
        %v1057 = vsel %vm993, %v992, %v735
        %vm1058 = vcmask 97280
        %v1060 = vsel %vm1058, %v995, %v849
        %v1062 = vsel %vm1058, %v997, %v851
        %v1064 = vsel %vm1058, %v999, %v853
        %v1066 = vsel %vm1058, %v1001, %v855
        %v1068 = vsel %vm1058, %v1003, %v857
        %v1070 = vsel %vm1058, %v1005, %v859
        %v1072 = vsel %vm1058, %v1007, %v861
        %v1074 = vsel %vm1058, %v1009, %v863
        %v1076 = vsel %vm1058, %v1011, %v865
        %v1078 = vsel %vm1058, %v1013, %v867
        %v1080 = vsel %vm1058, %v1015, %v869
        %v1082 = vsel %vm1058, %v1017, %v871
        %v1084 = vsel %vm1058, %v1019, %v873
        %v1086 = vsel %vm1058, %v1021, %v875
        %v1088 = vsel %vm1058, %v1023, %v877
        %v1090 = vsel %vm1058, %v1025, %v879
        %v1092 = vsel %vm1058, %v1027, %v881
        %v1094 = vsel %vm1058, %v1029, %v883
        %v1096 = vsel %vm1058, %v1031, %v885
        %v1098 = vsel %vm1058, %v1033, %v887
        %v1100 = vsel %vm1058, %v1035, %v889
        %v1102 = vsel %vm1058, %v1037, %v891
        %v1104 = vsel %vm1058, %v1039, %v893
        %v1106 = vsel %vm1058, %v1041, %v895
        %v1108 = vsel %vm1058, %v1043, %v897
        %v1110 = vsel %vm1058, %v1045, %v899
        %v1112 = vsel %vm1058, %v1047, %v901
        %v1114 = vsel %vm1058, %v1049, %v903
        %v1116 = vsel %vm1058, %v1051, %v905
        %v1118 = vsel %vm1058, %v1053, %v907
        %v1120 = vsel %vm1058, %v1055, %v909
        %v1122 = vsel %vm1058, %v1057, %v911
        %vm1123 = vsmask.f32 7424
        %v1124 = vshrl.u32 %v1060, 16
        %v1126 = vshll.u32 %v1060, 16
        %v1128 = vrot.slane %v1126, 1
        %v1129 = vor.u32 %v1124, %v1128
        %v1130 = vshll.u32 %v1062, 16
        %v1132 = vrot.slane %v1130, 1
        %v1133 = vsel %vm1123, %v1129, %v1132
        %v1134 = vshrl.u32 %v1064, 16
        %v1136 = vshll.u32 %v1064, 16
        %v1138 = vrot.slane %v1136, 1
        %v1139 = vor.u32 %v1134, %v1138
        %v1140 = vshll.u32 %v1066, 16
        %v1142 = vrot.slane %v1140, 1
        %v1143 = vsel %vm1123, %v1139, %v1142
        %v1144 = vshrl.u32 %v1068, 16
        %v1146 = vshll.u32 %v1068, 16
        %v1148 = vrot.slane %v1146, 1
        %v1149 = vor.u32 %v1144, %v1148
        %v1150 = vshll.u32 %v1070, 16
        %v1152 = vrot.slane %v1150, 1
        %v1153 = vsel %vm1123, %v1149, %v1152
        %v1154 = vshrl.u32 %v1072, 16
        %v1156 = vshll.u32 %v1072, 16
        %v1158 = vrot.slane %v1156, 1
        %v1159 = vor.u32 %v1154, %v1158
        %v1160 = vshll.u32 %v1074, 16
        %v1162 = vrot.slane %v1160, 1
        %v1163 = vsel %vm1123, %v1159, %v1162
        %v1164 = vshrl.u32 %v1076, 16
        %v1166 = vshll.u32 %v1076, 16
        %v1168 = vrot.slane %v1166, 1
        %v1169 = vor.u32 %v1164, %v1168
        %v1170 = vshll.u32 %v1078, 16
        %v1172 = vrot.slane %v1170, 1
        %v1173 = vsel %vm1123, %v1169, %v1172
        %v1174 = vshrl.u32 %v1080, 16
        %v1176 = vshll.u32 %v1080, 16
        %v1178 = vrot.slane %v1176, 1
        %v1179 = vor.u32 %v1174, %v1178
        %v1180 = vshll.u32 %v1082, 16
        %v1182 = vrot.slane %v1180, 1
        %v1183 = vsel %vm1123, %v1179, %v1182
        %v1184 = vshrl.u32 %v1084, 16
        %v1186 = vshll.u32 %v1084, 16
        %v1188 = vrot.slane %v1186, 1
        %v1189 = vor.u32 %v1184, %v1188
        %v1190 = vshll.u32 %v1086, 16
        %v1192 = vrot.slane %v1190, 1
        %v1193 = vsel %vm1123, %v1189, %v1192
        %v1194 = vshrl.u32 %v1088, 16
        %v1196 = vshll.u32 %v1088, 16
        %v1198 = vrot.slane %v1196, 1
        %v1199 = vor.u32 %v1194, %v1198
        %v1200 = vshll.u32 %v1090, 16
        %v1202 = vrot.slane %v1200, 1
        %v1203 = vsel %vm1123, %v1199, %v1202
        %v1204 = vshrl.u32 %v1092, 16
        %v1206 = vshll.u32 %v1092, 16
        %v1208 = vrot.slane %v1206, 1
        %v1209 = vor.u32 %v1204, %v1208
        %v1210 = vshll.u32 %v1094, 16
        %v1212 = vrot.slane %v1210, 1
        %v1213 = vsel %vm1123, %v1209, %v1212
        %v1214 = vshrl.u32 %v1096, 16
        %v1216 = vshll.u32 %v1096, 16
        %v1218 = vrot.slane %v1216, 1
        %v1219 = vor.u32 %v1214, %v1218
        %v1220 = vshll.u32 %v1098, 16
        %v1222 = vrot.slane %v1220, 1
        %v1223 = vsel %vm1123, %v1219, %v1222
        %v1224 = vshrl.u32 %v1100, 16
        %v1226 = vshll.u32 %v1100, 16
        %v1228 = vrot.slane %v1226, 1
        %v1229 = vor.u32 %v1224, %v1228
        %v1230 = vshll.u32 %v1102, 16
        %v1232 = vrot.slane %v1230, 1
        %v1233 = vsel %vm1123, %v1229, %v1232
        %v1234 = vshrl.u32 %v1104, 16
        %v1236 = vshll.u32 %v1104, 16
        %v1238 = vrot.slane %v1236, 1
        %v1239 = vor.u32 %v1234, %v1238
        %v1240 = vshll.u32 %v1106, 16
        %v1242 = vrot.slane %v1240, 1
        %v1243 = vsel %vm1123, %v1239, %v1242
        %v1244 = vshrl.u32 %v1108, 16
        %v1246 = vshll.u32 %v1108, 16
        %v1248 = vrot.slane %v1246, 1
        %v1249 = vor.u32 %v1244, %v1248
        %v1250 = vshll.u32 %v1110, 16
        %v1252 = vrot.slane %v1250, 1
        %v1253 = vsel %vm1123, %v1249, %v1252
        %v1254 = vshrl.u32 %v1112, 16
        %v1256 = vshll.u32 %v1112, 16
        %v1258 = vrot.slane %v1256, 1
        %v1259 = vor.u32 %v1254, %v1258
        %v1260 = vshll.u32 %v1114, 16
        %v1262 = vrot.slane %v1260, 1
        %v1263 = vsel %vm1123, %v1259, %v1262
        %v1264 = vshrl.u32 %v1116, 16
        %v1266 = vshll.u32 %v1116, 16
        %v1268 = vrot.slane %v1266, 1
        %v1269 = vor.u32 %v1264, %v1268
        %v1270 = vshll.u32 %v1118, 16
        %v1272 = vrot.slane %v1270, 1
        %v1273 = vsel %vm1123, %v1269, %v1272
        %v1274 = vshrl.u32 %v1120, 16
        %v1276 = vshll.u32 %v1120, 16
        %v1278 = vrot.slane %v1276, 1
        %v1279 = vor.u32 %v1274, %v1278
        %v1280 = vshll.u32 %v1122, 16
        %v1282 = vrot.slane %v1280, 1
        %v1283 = vsel %vm1123, %v1279, %v1282
        %v1284 = vld [vmem:[%s1] sm:$0xf]
        %v1285 = vld [vmem:[%s1 + $0x4] sm:$0xf]
        %v1288 = vunpack.c.l.b16 %v1284
        %v1289 = vunpack.c.l.b16 %v1285
        %v1290 = vpack.c.b16 %v1289, %v1288
        %vm1292 = vcmask 130048
        %v1294 = vsel %vm1292, %v1133, 0
        %v1297 = vsel %vm1292, %v1143, 0
        %v1300 = vsel %vm1292, %v1153, 0
        %v1303 = vsel %vm1292, %v1163, 0
        %v1306 = vsel %vm1292, %v1173, 0
        %v1309 = vsel %vm1292, %v1183, 0
        %v1312 = vsel %vm1292, %v1193, 0
        %v1315 = vsel %vm1292, %v1203, 0
        %v1318 = vsel %vm1292, %v1213, 0
        %v1321 = vsel %vm1292, %v1223, 0
        %v1324 = vsel %vm1292, %v1233, 0
        %v1327 = vsel %vm1292, %v1243, 0
        %v1330 = vsel %vm1292, %v1253, 0
        %v1333 = vsel %vm1292, %v1263, 0
        %v1336 = vsel %vm1292, %v1273, 0
        %v1339 = vsel %vm1292, %v1283, 0
        %1341 = vmatprep.subr.bf16.mxu0 0
        %1342 = vmatpush1.bf16.msra.mxu0 %v1290
        %1343 = vmatprep.subr.bf16.mxu0 0
        %1344 = vmatpush1.bf16.msra.mxu0 0
        %1345 = vmatprep.subr.bf16.mxu0 0
        %1346 = vmatpush1.bf16.msra.mxu0 0
        %1347 = vmatprep.subr.bf16.mxu0 0
        %1348 = vmatpush1.bf16.msra.mxu0 0
        %1349 = vmatprep.subr.bf16.mxu0 0
        %1350 = vmatpush1.bf16.msra.mxu0 0
        %1351 = vmatprep.subr.bf16.mxu0 0
        %1352 = vmatpush1.bf16.msra.mxu0 0
        %1353 = vmatprep.subr.bf16.mxu0 0
        %1354 = vmatpush1.bf16.msra.mxu0 0
        %1355 = vmatprep.subr.bf16.mxu0 0
        %1356 = vmatpush1.bf16.msra.mxu0 0
        %1357 = vmatprep.subr.bf16.mxu0 0
        %1358 = vmatpush1.bf16.msra.mxu0 0
        %1359 = vmatprep.subr.bf16.mxu0 0
        %1360 = vmatpush1.bf16.msra.mxu0 0
        %1361 = vmatprep.subr.bf16.mxu0 0
        %1362 = vmatpush1.bf16.msra.mxu0 0
        %1363 = vmatprep.subr.bf16.mxu0 0
        %1364 = vmatpush1.bf16.msra.mxu0 0
        %1365 = vmatprep.subr.bf16.mxu0 0
        %1366 = vmatpush1.bf16.msra.mxu0 0
        %1367 = vmatprep.subr.bf16.mxu0 0
        %1368 = vmatpush1.bf16.msra.mxu0 0
        %1369 = vmatprep.subr.bf16.mxu0 0
        %1370 = vmatpush1.bf16.msra.mxu0 0
        %1371 = vmatprep.subr.bf16.mxu0 0
        %1372 = vmatpush1.bf16.msra.mxu0 0
        %1373 = vmatprep.mubr.bf16.mxu0 0
        %1374 = vmatmul.mubr.bf16.gmra.mrb[0].mxu0 %v1294
        %v1375 = vpop.f32.mrb[0].mxu0
        %v1376 = vadd.f32 0.0, %v1375
        %v1377 = vpop.f32.mrb[0].mxu0
        %v1378 = vpop.f32.mrb[0].mxu0
        %v1379 = vadd.f32 0.0, %v1378
        %v1380 = vpop.f32.mrb[0].mxu0
        %1381 = vmatprep.mubr.bf16.mxu0 0
        %1382 = vmatmul.mubr.bf16.gmra.mrb[0].mxu0 %v1297
        %v1383 = vpop.f32.mrb[0].mxu0
        %v1384 = vadd.f32 0.0, %v1383
        %v1385 = vpop.f32.mrb[0].mxu0
        %v1386 = vpop.f32.mrb[0].mxu0
        %v1387 = vadd.f32 0.0, %v1386
        %v1388 = vpop.f32.mrb[0].mxu0
        %1389 = vmatprep.mubr.bf16.mxu0 0
        %1390 = vmatmul.mubr.bf16.gmra.mrb[0].mxu0 %v1300
        %v1391 = vpop.f32.mrb[0].mxu0
        %v1392 = vadd.f32 0.0, %v1391
        %v1393 = vpop.f32.mrb[0].mxu0
        %v1394 = vpop.f32.mrb[0].mxu0
        %v1395 = vadd.f32 0.0, %v1394
        %v1396 = vpop.f32.mrb[0].mxu0
        %1397 = vmatprep.mubr.bf16.mxu0 0
        %1398 = vmatmul.mubr.bf16.gmra.mrb[0].mxu0 %v1303
        %v1399 = vpop.f32.mrb[0].mxu0
        %v1400 = vadd.f32 0.0, %v1399
        %v1401 = vpop.f32.mrb[0].mxu0
        %v1402 = vpop.f32.mrb[0].mxu0
        %v1403 = vadd.f32 0.0, %v1402
        %v1404 = vpop.f32.mrb[0].mxu0
        %1405 = vmatprep.mubr.bf16.mxu0 0
        %1406 = vmatmul.mubr.bf16.gmra.mrb[0].mxu0 %v1306
        %v1407 = vpop.f32.mrb[0].mxu0
        %v1408 = vadd.f32 0.0, %v1407
        %v1409 = vpop.f32.mrb[0].mxu0
        %v1410 = vpop.f32.mrb[0].mxu0
        %v1411 = vadd.f32 0.0, %v1410
        %v1412 = vpop.f32.mrb[0].mxu0
        %1413 = vmatprep.mubr.bf16.mxu0 0
        %1414 = vmatmul.mubr.bf16.gmra.mrb[0].mxu0 %v1309
        %v1415 = vpop.f32.mrb[0].mxu0
        %v1416 = vadd.f32 0.0, %v1415
        %v1417 = vpop.f32.mrb[0].mxu0
        %v1418 = vpop.f32.mrb[0].mxu0
        %v1419 = vadd.f32 0.0, %v1418
        %v1420 = vpop.f32.mrb[0].mxu0
        %1421 = vmatprep.mubr.bf16.mxu0 0
        %1422 = vmatmul.mubr.bf16.gmra.mrb[0].mxu0 %v1312
        %v1423 = vpop.f32.mrb[0].mxu0
        %v1424 = vadd.f32 0.0, %v1423
        %v1425 = vpop.f32.mrb[0].mxu0
        %v1426 = vpop.f32.mrb[0].mxu0
        %v1427 = vadd.f32 0.0, %v1426
        %v1428 = vpop.f32.mrb[0].mxu0
        %1429 = vmatprep.mubr.bf16.mxu0 0
        %1430 = vmatmul.mubr.bf16.gmra.mrb[0].mxu0 %v1315
        %v1431 = vpop.f32.mrb[0].mxu0
        %v1432 = vadd.f32 0.0, %v1431
        %v1433 = vpop.f32.mrb[0].mxu0
        %v1434 = vpop.f32.mrb[0].mxu0
        %v1435 = vadd.f32 0.0, %v1434
        %v1436 = vpop.f32.mrb[0].mxu0
        %1437 = vmatprep.mubr.bf16.mxu0 0
        %1438 = vmatmul.mubr.bf16.gmra.mrb[0].mxu0 %v1318
        %v1439 = vpop.f32.mrb[0].mxu0
        %v1440 = vadd.f32 0.0, %v1439
        %v1441 = vpop.f32.mrb[0].mxu0
        %v1442 = vpop.f32.mrb[0].mxu0
        %v1443 = vadd.f32 0.0, %v1442
        %v1444 = vpop.f32.mrb[0].mxu0
        %1445 = vmatprep.mubr.bf16.mxu0 0
        %1446 = vmatmul.mubr.bf16.gmra.mrb[0].mxu0 %v1321
        %v1447 = vpop.f32.mrb[0].mxu0
        %v1448 = vadd.f32 0.0, %v1447
        %v1449 = vpop.f32.mrb[0].mxu0
        %v1450 = vpop.f32.mrb[0].mxu0
        %v1451 = vadd.f32 0.0, %v1450
        %v1452 = vpop.f32.mrb[0].mxu0
        %1453 = vmatprep.mubr.bf16.mxu0 0
        %1454 = vmatmul.mubr.bf16.gmra.mrb[0].mxu0 %v1324
        %v1455 = vpop.f32.mrb[0].mxu0
        %v1456 = vadd.f32 0.0, %v1455
        %v1457 = vpop.f32.mrb[0].mxu0
        %v1458 = vpop.f32.mrb[0].mxu0
        %v1459 = vadd.f32 0.0, %v1458
        %v1460 = vpop.f32.mrb[0].mxu0
        %1461 = vmatprep.mubr.bf16.mxu0 0
        %1462 = vmatmul.mubr.bf16.gmra.mrb[0].mxu0 %v1327
        %v1463 = vpop.f32.mrb[0].mxu0
        %v1464 = vadd.f32 0.0, %v1463
        %v1465 = vpop.f32.mrb[0].mxu0
        %v1466 = vpop.f32.mrb[0].mxu0
        %v1467 = vadd.f32 0.0, %v1466
        %v1468 = vpop.f32.mrb[0].mxu0
        %1469 = vmatprep.mubr.bf16.mxu0 0
        %1470 = vmatmul.mubr.bf16.gmra.mrb[0].mxu0 %v1330
        %v1471 = vpop.f32.mrb[0].mxu0
        %v1472 = vadd.f32 0.0, %v1471
        %v1473 = vpop.f32.mrb[0].mxu0
        %v1474 = vpop.f32.mrb[0].mxu0
        %v1475 = vadd.f32 0.0, %v1474
        %v1476 = vpop.f32.mrb[0].mxu0
        %1477 = vmatprep.mubr.bf16.mxu0 0
        %1478 = vmatmul.mubr.bf16.gmra.mrb[0].mxu0 %v1333
        %v1479 = vpop.f32.mrb[0].mxu0
        %v1480 = vadd.f32 0.0, %v1479
        %v1481 = vpop.f32.mrb[0].mxu0
        %v1482 = vpop.f32.mrb[0].mxu0
        %v1483 = vadd.f32 0.0, %v1482
        %v1484 = vpop.f32.mrb[0].mxu0
        %1485 = vmatprep.mubr.bf16.mxu0 0
        %1486 = vmatmul.mubr.bf16.gmra.mrb[0].mxu0 %v1336
        %v1487 = vpop.f32.mrb[0].mxu0
        %v1488 = vadd.f32 0.0, %v1487
        %v1489 = vpop.f32.mrb[0].mxu0
        %v1490 = vpop.f32.mrb[0].mxu0
        %v1491 = vadd.f32 0.0, %v1490
        %v1492 = vpop.f32.mrb[0].mxu0
        %1493 = vmatprep.mubr.bf16.mxu0 0
        %1494 = vmatmul.mubr.bf16.gmra.mrb[0].mxu0 %v1339
        %v1495 = vpop.f32.mrb[0].mxu0
        %v1496 = vadd.f32 0.0, %v1495
        %v1497 = vpop.f32.mrb[0].mxu0
        %v1498 = vpop.f32.mrb[0].mxu0
        %v1499 = vadd.f32 0.0, %v1498
        %v1500 = vpop.f32.mrb[0].mxu0
        %1501 = vdwg.mxu0
        %v1502 = vsel %vm993, %v1376, 0.0
        %v1503 = vsel %vm993, %v1379, 0.0
        %v1504 = vadd.f32 %v1502, %v1503
        %v1505 = vsel %vm993, %v1384, 0.0
        %v1506 = vadd.f32 %v1504, %v1505
        %v1507 = vsel %vm993, %v1387, 0.0
        %v1508 = vadd.f32 %v1506, %v1507
        %v1509 = vsel %vm993, %v1392, 0.0
        %v1510 = vadd.f32 %v1508, %v1509
        %v1511 = vsel %vm993, %v1395, 0.0
        %v1512 = vadd.f32 %v1510, %v1511
        %v1513 = vsel %vm993, %v1400, 0.0
        %v1514 = vadd.f32 %v1512, %v1513
        %v1515 = vsel %vm993, %v1403, 0.0
        %v1516 = vadd.f32 %v1514, %v1515
        %v1517 = vsel %vm993, %v1408, 0.0
        %v1518 = vadd.f32 %v1516, %v1517
        %v1519 = vsel %vm993, %v1411, 0.0
        %v1520 = vadd.f32 %v1518, %v1519
        %v1521 = vsel %vm993, %v1416, 0.0
        %v1522 = vadd.f32 %v1520, %v1521
        %v1523 = vsel %vm993, %v1419, 0.0
        %v1524 = vadd.f32 %v1522, %v1523
        %v1525 = vsel %vm993, %v1424, 0.0
        %v1526 = vadd.f32 %v1524, %v1525
        %v1527 = vsel %vm993, %v1427, 0.0
        %v1528 = vadd.f32 %v1526, %v1527
        %v1529 = vsel %vm993, %v1432, 0.0
        %v1530 = vadd.f32 %v1528, %v1529
        %v1531 = vsel %vm993, %v1435, 0.0
        %v1532 = vadd.f32 %v1530, %v1531
        %v1533 = vsel %vm993, %v1440, 0.0
        %v1534 = vadd.f32 %v1532, %v1533
        %v1535 = vsel %vm993, %v1443, 0.0
        %v1536 = vadd.f32 %v1534, %v1535
        %v1537 = vsel %vm993, %v1448, 0.0
        %v1538 = vadd.f32 %v1536, %v1537
        %v1539 = vsel %vm993, %v1451, 0.0
        %v1540 = vadd.f32 %v1538, %v1539
        %v1541 = vsel %vm993, %v1456, 0.0
        %v1542 = vadd.f32 %v1540, %v1541
        %v1543 = vsel %vm993, %v1459, 0.0
        %v1544 = vadd.f32 %v1542, %v1543
        %v1545 = vsel %vm993, %v1464, 0.0
        %v1546 = vadd.f32 %v1544, %v1545
        %v1547 = vsel %vm993, %v1467, 0.0
        %v1548 = vadd.f32 %v1546, %v1547
        %v1549 = vsel %vm993, %v1472, 0.0
        %v1550 = vadd.f32 %v1548, %v1549
        %v1551 = vsel %vm993, %v1475, 0.0
        %v1552 = vadd.f32 %v1550, %v1551
        %v1553 = vsel %vm993, %v1480, 0.0
        %v1554 = vadd.f32 %v1552, %v1553
        %v1555 = vsel %vm993, %v1483, 0.0
        %v1556 = vadd.f32 %v1554, %v1555
        %v1557 = vsel %vm993, %v1488, 0.0
        %v1558 = vadd.f32 %v1556, %v1557
        %v1559 = vsel %vm993, %v1491, 0.0
        %v1560 = vadd.f32 %v1558, %v1559
        %v1561 = vsel %vm993, %v1496, 0.0
        %v1562 = vadd.f32 %v1560, %v1561
        %v1563 = vsel %vm993, %v1499, 0.0
        %v1564 = vadd.f32 %v1562, %v1563
        %v1565 = vrot.slane %v1564, 4
        %v1566 = vadd.f32 %v1564, %v1565
        %v1567 = vrot.slane %v1566, 2
        %v1568 = vadd.f32 %v1566, %v1567
        %v1569 = vrot.slane %v1568, 1
        %v1570 = vadd.f32 %v1568, %v1569
        %v1571 = vadd.f32 %v1570, 0.0
        %v1572 = vmul.f32 %v1376, %v1376
        %v1573 = vmul.f32 %v1379, %v1379
        %v1574 = vmul.f32 %v1384, %v1384
        %v1575 = vmul.f32 %v1387, %v1387
        %v1576 = vmul.f32 %v1392, %v1392
        %v1577 = vmul.f32 %v1395, %v1395
        %v1578 = vmul.f32 %v1400, %v1400
        %v1579 = vmul.f32 %v1403, %v1403
        %v1580 = vmul.f32 %v1408, %v1408
        %v1581 = vmul.f32 %v1411, %v1411
        %v1582 = vmul.f32 %v1416, %v1416
        %v1583 = vmul.f32 %v1419, %v1419
        %v1584 = vmul.f32 %v1424, %v1424
        %v1585 = vmul.f32 %v1427, %v1427
        %v1586 = vmul.f32 %v1432, %v1432
        %v1587 = vmul.f32 %v1435, %v1435
        %v1588 = vmul.f32 %v1440, %v1440
        %v1589 = vmul.f32 %v1443, %v1443
        %v1590 = vmul.f32 %v1448, %v1448
        %v1591 = vmul.f32 %v1451, %v1451
        %v1592 = vmul.f32 %v1456, %v1456
        %v1593 = vmul.f32 %v1459, %v1459
        %v1594 = vmul.f32 %v1464, %v1464
        %v1595 = vmul.f32 %v1467, %v1467
        %v1596 = vmul.f32 %v1472, %v1472
        %v1597 = vmul.f32 %v1475, %v1475
        %v1598 = vmul.f32 %v1480, %v1480
        %v1599 = vmul.f32 %v1483, %v1483
        %v1600 = vmul.f32 %v1488, %v1488
        %v1601 = vmul.f32 %v1491, %v1491
        %v1602 = vmul.f32 %v1496, %v1496
        %v1603 = vmul.f32 %v1499, %v1499
        %v1604 = vsel %vm993, %v1572, 0.0
        %v1605 = vsel %vm993, %v1573, 0.0
        %v1606 = vadd.f32 %v1604, %v1605
        %v1607 = vsel %vm993, %v1574, 0.0
        %v1608 = vadd.f32 %v1606, %v1607
        %v1609 = vsel %vm993, %v1575, 0.0
        %v1610 = vadd.f32 %v1608, %v1609
        %v1611 = vsel %vm993, %v1576, 0.0
        %v1612 = vadd.f32 %v1610, %v1611
        %v1613 = vsel %vm993, %v1577, 0.0
        %v1614 = vadd.f32 %v1612, %v1613
        %v1615 = vsel %vm993, %v1578, 0.0
        %v1616 = vadd.f32 %v1614, %v1615
        %v1617 = vsel %vm993, %v1579, 0.0
        %v1618 = vadd.f32 %v1616, %v1617
        %v1619 = vsel %vm993, %v1580, 0.0
        %v1620 = vadd.f32 %v1618, %v1619
        %v1621 = vsel %vm993, %v1581, 0.0
        %v1622 = vadd.f32 %v1620, %v1621
        %v1623 = vsel %vm993, %v1582, 0.0
        %v1624 = vadd.f32 %v1622, %v1623
        %v1625 = vsel %vm993, %v1583, 0.0
        %v1626 = vadd.f32 %v1624, %v1625
        %v1627 = vsel %vm993, %v1584, 0.0
        %v1628 = vadd.f32 %v1626, %v1627
        %v1629 = vsel %vm993, %v1585, 0.0
        %v1630 = vadd.f32 %v1628, %v1629
        %v1631 = vsel %vm993, %v1586, 0.0
        %v1632 = vadd.f32 %v1630, %v1631
        %v1633 = vsel %vm993, %v1587, 0.0
        %v1634 = vadd.f32 %v1632, %v1633
        %v1635 = vsel %vm993, %v1588, 0.0
        %v1636 = vadd.f32 %v1634, %v1635
        %v1637 = vsel %vm993, %v1589, 0.0
        %v1638 = vadd.f32 %v1636, %v1637
        %v1639 = vsel %vm993, %v1590, 0.0
        %v1640 = vadd.f32 %v1638, %v1639
        %v1641 = vsel %vm993, %v1591, 0.0
        %v1642 = vadd.f32 %v1640, %v1641
        %v1643 = vsel %vm993, %v1592, 0.0
        %v1644 = vadd.f32 %v1642, %v1643
        %v1645 = vsel %vm993, %v1593, 0.0
        %v1646 = vadd.f32 %v1644, %v1645
        %v1647 = vsel %vm993, %v1594, 0.0
        %v1648 = vadd.f32 %v1646, %v1647
        %v1649 = vsel %vm993, %v1595, 0.0
        %v1650 = vadd.f32 %v1648, %v1649
        %v1651 = vsel %vm993, %v1596, 0.0
        %v1652 = vadd.f32 %v1650, %v1651
        %v1653 = vsel %vm993, %v1597, 0.0
        %v1654 = vadd.f32 %v1652, %v1653
        %v1655 = vsel %vm993, %v1598, 0.0
        %v1656 = vadd.f32 %v1654, %v1655
        %v1657 = vsel %vm993, %v1599, 0.0
        %v1658 = vadd.f32 %v1656, %v1657
        %v1659 = vsel %vm993, %v1600, 0.0
        %v1660 = vadd.f32 %v1658, %v1659
        %v1661 = vsel %vm993, %v1601, 0.0
        %v1662 = vadd.f32 %v1660, %v1661
        %v1663 = vsel %vm993, %v1602, 0.0
        %v1664 = vadd.f32 %v1662, %v1663
        %v1665 = vsel %vm993, %v1603, 0.0
        %v1666 = vadd.f32 %v1664, %v1665
        %v1667 = vrot.slane %v1666, 4
        %v1668 = vadd.f32 %v1666, %v1667
        %v1669 = vrot.slane %v1668, 2
        %v1670 = vadd.f32 %v1668, %v1669
        %v1671 = vrot.slane %v1670, 1
        %v1672 = vadd.f32 %v1670, %v1671
        %v1673 = vadd.f32 %v1672, 0.0
        %v1674 = vld [vmem:[%s143] sm:$0xe]
        %v1675 = vld [vmem:[%s143 + $0xc] sm:$0xe]
        %v1676 = vld [vmem:[%s143 + $0x18] sm:$0xe]
        %v1677 = vld [vmem:[%s143 + $0x24] sm:$0xe]
        %v1678 = vld [vmem:[%s143 + $0x30] sm:$0xe]
        %v1679 = vld [vmem:[%s143 + $0x3c] sm:$0xe]
        %v1680 = vld [vmem:[%s143 + $0x48] sm:$0xe]
        %v1681 = vld [vmem:[%s143 + $0x54] sm:$0xe]
        %v1682 = vld [vmem:[%s143 + $0x60] sm:$0xe]
        %v1683 = vld [vmem:[%s143 + $0x6c] sm:$0xe]
        %v1684 = vld [vmem:[%s143 + $0x78] sm:$0xe]
        %v1685 = vld [vmem:[%s143 + $0x84] sm:$0xe]
        %v1686 = vld [vmem:[%s143 + $0x90] sm:$0xe]
        %v1687 = vld [vmem:[%s143 + $0x9c] sm:$0xe]
        %v1688 = vld [vmem:[%s143 + $0xa8] sm:$0xe]
        %v1689 = vld [vmem:[%s143 + $0xb4] sm:$0xe]
        %v1690 = vld [vmem:[%s141] sm:$0xe]
        %v1691 = vld [vmem:[%s141 + $0xc] sm:$0xe]
        %v1692 = vld [vmem:[%s141 + $0x18] sm:$0xe]
        %v1693 = vld [vmem:[%s141 + $0x24] sm:$0xe]
        %v1694 = vld [vmem:[%s141 + $0x30] sm:$0xe]
        %v1695 = vld [vmem:[%s141 + $0x3c] sm:$0xe]
        %v1696 = vld [vmem:[%s141 + $0x48] sm:$0xe]
        %v1697 = vld [vmem:[%s141 + $0x54] sm:$0xe]
        %v1698 = vld [vmem:[%s141 + $0x60] sm:$0xe]
        %v1699 = vld [vmem:[%s141 + $0x6c] sm:$0xe]
        %v1700 = vld [vmem:[%s141 + $0x78] sm:$0xe]
        %v1701 = vld [vmem:[%s141 + $0x84] sm:$0xe]
        %v1702 = vld [vmem:[%s141 + $0x90] sm:$0xe]
        %v1703 = vld [vmem:[%s141 + $0x9c] sm:$0xe]
        %v1704 = vld [vmem:[%s141 + $0xa8] sm:$0xe]
        %v1705 = vld [vmem:[%s141 + $0xb4] sm:$0xe]
        %v1722 = vunpack.c.l.b16 %v1674
        %v1723 = vunpack.c.l.b16 %v1675
        %v1724 = vunpack.c.l.b16 %v1676
        %v1725 = vunpack.c.l.b16 %v1677
        %v1726 = vunpack.c.l.b16 %v1678
        %v1727 = vunpack.c.l.b16 %v1679
        %v1728 = vunpack.c.l.b16 %v1680
        %v1729 = vunpack.c.l.b16 %v1681
        %v1730 = vunpack.c.l.b16 %v1682
        %v1731 = vunpack.c.l.b16 %v1683
        %v1732 = vunpack.c.l.b16 %v1684
        %v1733 = vunpack.c.l.b16 %v1685
        %v1734 = vunpack.c.l.b16 %v1686
        %v1735 = vunpack.c.l.b16 %v1687
        %v1736 = vunpack.c.l.b16 %v1688
        %v1737 = vunpack.c.l.b16 %v1689
        %v1738 = vpack.c.b16 %v289, %v1722
        %v1739 = vpack.c.b16 %v292, %v1723
        %v1740 = vpack.c.b16 %v295, %v1724
        %v1741 = vpack.c.b16 %v298, %v1725
        %v1742 = vpack.c.b16 %v301, %v1726
        %v1743 = vpack.c.b16 %v304, %v1727
        %v1744 = vpack.c.b16 %v307, %v1728
        %v1745 = vpack.c.b16 %v310, %v1729
        %v1746 = vpack.c.b16 %v313, %v1730
        %v1747 = vpack.c.b16 %v316, %v1731
        %v1748 = vpack.c.b16 %v319, %v1732
        %v1749 = vpack.c.b16 %v322, %v1733
        %v1750 = vpack.c.b16 %v325, %v1734
        %v1751 = vpack.c.b16 %v328, %v1735
        %v1752 = vpack.c.b16 %v331, %v1736
        %v1753 = vpack.c.b16 %v334, %v1737
        %v1755 = vshrl.u32 %v1738, 16
        %v1757 = vshll.u32 %v1738, 16
        %v1759 = vrot.slane %v1757, 1
        %v1760 = vor.u32 %v1755, %v1759
        %v1761 = vshll.u32 %v337, 16
        %v1763 = vrot.slane %v1761, 1
        %v1764 = vsel %vm1123, %v1760, %v1763
        %v1765 = vshrl.u32 %v337, 16
        %v1768 = vshrl.u32 %v1739, 16
        %v1770 = vshll.u32 %v1739, 16
        %v1772 = vrot.slane %v1770, 1
        %v1773 = vor.u32 %v1768, %v1772
        %v1774 = vshll.u32 %v339, 16
        %v1776 = vrot.slane %v1774, 1
        %v1777 = vsel %vm1123, %v1773, %v1776
        %v1778 = vshrl.u32 %v339, 16
        %v1781 = vshrl.u32 %v1740, 16
        %v1783 = vshll.u32 %v1740, 16
        %v1785 = vrot.slane %v1783, 1
        %v1786 = vor.u32 %v1781, %v1785
        %v1787 = vshll.u32 %v341, 16
        %v1789 = vrot.slane %v1787, 1
        %v1790 = vsel %vm1123, %v1786, %v1789
        %v1791 = vshrl.u32 %v341, 16
        %v1794 = vshrl.u32 %v1741, 16
        %v1796 = vshll.u32 %v1741, 16
        %v1798 = vrot.slane %v1796, 1
        %v1799 = vor.u32 %v1794, %v1798
        %v1800 = vshll.u32 %v343, 16
        %v1802 = vrot.slane %v1800, 1
        %v1803 = vsel %vm1123, %v1799, %v1802
        %v1804 = vshrl.u32 %v343, 16
        %v1807 = vshrl.u32 %v1742, 16
        %v1809 = vshll.u32 %v1742, 16
        %v1811 = vrot.slane %v1809, 1
        %v1812 = vor.u32 %v1807, %v1811
        %v1813 = vshll.u32 %v345, 16
        %v1815 = vrot.slane %v1813, 1
        %v1816 = vsel %vm1123, %v1812, %v1815
        %v1817 = vshrl.u32 %v345, 16
        %v1820 = vshrl.u32 %v1743, 16
        %v1822 = vshll.u32 %v1743, 16
        %v1824 = vrot.slane %v1822, 1
        %v1825 = vor.u32 %v1820, %v1824
        %v1826 = vshll.u32 %v347, 16
        %v1828 = vrot.slane %v1826, 1
        %v1829 = vsel %vm1123, %v1825, %v1828
        %v1830 = vshrl.u32 %v347, 16
        %v1833 = vshrl.u32 %v1744, 16
        %v1835 = vshll.u32 %v1744, 16
        %v1837 = vrot.slane %v1835, 1
        %v1838 = vor.u32 %v1833, %v1837
        %v1839 = vshll.u32 %v349, 16
        %v1841 = vrot.slane %v1839, 1
        %v1842 = vsel %vm1123, %v1838, %v1841
        %v1843 = vshrl.u32 %v349, 16
        %v1846 = vshrl.u32 %v1745, 16
        %v1848 = vshll.u32 %v1745, 16
        %v1850 = vrot.slane %v1848, 1
        %v1851 = vor.u32 %v1846, %v1850
        %v1852 = vshll.u32 %v351, 16
        %v1854 = vrot.slane %v1852, 1
        %v1855 = vsel %vm1123, %v1851, %v1854
        %v1856 = vshrl.u32 %v351, 16
        %v1859 = vshrl.u32 %v1746, 16
        %v1861 = vshll.u32 %v1746, 16
        %v1863 = vrot.slane %v1861, 1
        %v1864 = vor.u32 %v1859, %v1863
        %v1865 = vshll.u32 %v353, 16
        %v1867 = vrot.slane %v1865, 1
        %v1868 = vsel %vm1123, %v1864, %v1867
        %v1869 = vshrl.u32 %v353, 16
        %v1872 = vshrl.u32 %v1747, 16
        %v1874 = vshll.u32 %v1747, 16
        %v1876 = vrot.slane %v1874, 1
        %v1877 = vor.u32 %v1872, %v1876
        %v1878 = vshll.u32 %v355, 16
        %v1880 = vrot.slane %v1878, 1
        %v1881 = vsel %vm1123, %v1877, %v1880
        %v1882 = vshrl.u32 %v355, 16
        %v1885 = vshrl.u32 %v1748, 16
        %v1887 = vshll.u32 %v1748, 16
        %v1889 = vrot.slane %v1887, 1
        %v1890 = vor.u32 %v1885, %v1889
        %v1891 = vshll.u32 %v357, 16
        %v1893 = vrot.slane %v1891, 1
        %v1894 = vsel %vm1123, %v1890, %v1893
        %v1895 = vshrl.u32 %v357, 16
        %v1898 = vshrl.u32 %v1749, 16
        %v1900 = vshll.u32 %v1749, 16
        %v1902 = vrot.slane %v1900, 1
        %v1903 = vor.u32 %v1898, %v1902
        %v1904 = vshll.u32 %v359, 16
        %v1906 = vrot.slane %v1904, 1
        %v1907 = vsel %vm1123, %v1903, %v1906
        %v1908 = vshrl.u32 %v359, 16
        %v1911 = vshrl.u32 %v1750, 16
        %v1913 = vshll.u32 %v1750, 16
        %v1915 = vrot.slane %v1913, 1
        %v1916 = vor.u32 %v1911, %v1915
        %v1917 = vshll.u32 %v361, 16
        %v1919 = vrot.slane %v1917, 1
        %v1920 = vsel %vm1123, %v1916, %v1919
        %v1921 = vshrl.u32 %v361, 16
        %v1924 = vshrl.u32 %v1751, 16
        %v1926 = vshll.u32 %v1751, 16
        %v1928 = vrot.slane %v1926, 1
        %v1929 = vor.u32 %v1924, %v1928
        %v1930 = vshll.u32 %v363, 16
        %v1932 = vrot.slane %v1930, 1
        %v1933 = vsel %vm1123, %v1929, %v1932
        %v1934 = vshrl.u32 %v363, 16
        %v1937 = vshrl.u32 %v1752, 16
        %v1939 = vshll.u32 %v1752, 16
        %v1941 = vrot.slane %v1939, 1
        %v1942 = vor.u32 %v1937, %v1941
        %v1943 = vshll.u32 %v365, 16
        %v1945 = vrot.slane %v1943, 1
        %v1946 = vsel %vm1123, %v1942, %v1945
        %v1947 = vshrl.u32 %v365, 16
        %v1950 = vshrl.u32 %v1753, 16
        %v1952 = vshll.u32 %v1753, 16
        %v1954 = vrot.slane %v1952, 1
        %v1955 = vor.u32 %v1950, %v1954
        %v1956 = vshll.u32 %v367, 16
        %v1958 = vrot.slane %v1956, 1
        %v1959 = vsel %vm1123, %v1955, %v1958
        %v1960 = vshrl.u32 %v367, 16
        %1962 = vrot.lane.b32.xlu0 %v1764, 4
        %v1963 = vpop.permute.xlu0 %1962
        %1964 = vrot.lane.b32.xlu0 %v1765, 4
        %v1965 = vpop.permute.xlu0 %1964
        %1966 = vrot.lane.b32.xlu0 %v1777, 4
        %v1967 = vpop.permute.xlu0 %1966
        %1968 = vrot.lane.b32.xlu0 %v1778, 4
        %v1969 = vpop.permute.xlu0 %1968
        %1970 = vrot.lane.b32.xlu0 %v1790, 4
        %v1971 = vpop.permute.xlu0 %1970
        %1972 = vrot.lane.b32.xlu0 %v1791, 4
        %v1973 = vpop.permute.xlu0 %1972
        %1974 = vrot.lane.b32.xlu0 %v1803, 4
        %v1975 = vpop.permute.xlu0 %1974
        %1976 = vrot.lane.b32.xlu0 %v1804, 4
        %v1977 = vpop.permute.xlu0 %1976
        %1978 = vrot.lane.b32.xlu0 %v1816, 4
        %v1979 = vpop.permute.xlu0 %1978
        %1980 = vrot.lane.b32.xlu0 %v1817, 4
        %v1981 = vpop.permute.xlu0 %1980
        %1982 = vrot.lane.b32.xlu0 %v1829, 4
        %v1983 = vpop.permute.xlu0 %1982
        %1984 = vrot.lane.b32.xlu0 %v1830, 4
        %v1985 = vpop.permute.xlu0 %1984
        %1986 = vrot.lane.b32.xlu0 %v1842, 4
        %v1987 = vpop.permute.xlu0 %1986
        %1988 = vrot.lane.b32.xlu0 %v1843, 4
        %v1989 = vpop.permute.xlu0 %1988
        %1990 = vrot.lane.b32.xlu0 %v1855, 4
        %v1991 = vpop.permute.xlu0 %1990
        %1992 = vrot.lane.b32.xlu0 %v1856, 4
        %v1993 = vpop.permute.xlu0 %1992
        %1994 = vrot.lane.b32.xlu0 %v1868, 4
        %v1995 = vpop.permute.xlu0 %1994
        %1996 = vrot.lane.b32.xlu0 %v1869, 4
        %v1997 = vpop.permute.xlu0 %1996
        %1998 = vrot.lane.b32.xlu0 %v1881, 4
        %v1999 = vpop.permute.xlu0 %1998
        %2000 = vrot.lane.b32.xlu0 %v1882, 4
        %v2001 = vpop.permute.xlu0 %2000
        %2002 = vrot.lane.b32.xlu0 %v1894, 4
        %v2003 = vpop.permute.xlu0 %2002
        %2004 = vrot.lane.b32.xlu0 %v1895, 4
        %v2005 = vpop.permute.xlu0 %2004
        %2006 = vrot.lane.b32.xlu0 %v1907, 4
        %v2007 = vpop.permute.xlu0 %2006
        %2008 = vrot.lane.b32.xlu0 %v1908, 4
        %v2009 = vpop.permute.xlu0 %2008
        %2010 = vrot.lane.b32.xlu0 %v1920, 4
        %v2011 = vpop.permute.xlu0 %2010
        %2012 = vrot.lane.b32.xlu0 %v1921, 4
        %v2013 = vpop.permute.xlu0 %2012
        %2014 = vrot.lane.b32.xlu0 %v1933, 4
        %v2015 = vpop.permute.xlu0 %2014
        %2016 = vrot.lane.b32.xlu0 %v1934, 4
        %v2017 = vpop.permute.xlu0 %2016
        %2018 = vrot.lane.b32.xlu0 %v1946, 4
        %v2019 = vpop.permute.xlu0 %2018
        %2020 = vrot.lane.b32.xlu0 %v1947, 4
        %v2021 = vpop.permute.xlu0 %2020
        %2022 = vrot.lane.b32.xlu0 %v1959, 4
        %v2023 = vpop.permute.xlu0 %2022
        %2024 = vrot.lane.b32.xlu0 %v1960, 4
        %v2025 = vpop.permute.xlu0 %2024
        %v2042 = vunpack.c.l.b16 %v1690
        %v2043 = vunpack.c.l.b16 %v1691
        %v2044 = vunpack.c.l.b16 %v1692
        %v2045 = vunpack.c.l.b16 %v1693
        %v2046 = vunpack.c.l.b16 %v1694
        %v2047 = vunpack.c.l.b16 %v1695
        %v2048 = vunpack.c.l.b16 %v1696
        %v2049 = vunpack.c.l.b16 %v1697
        %v2050 = vunpack.c.l.b16 %v1698
        %v2051 = vunpack.c.l.b16 %v1699
        %v2052 = vunpack.c.l.b16 %v1700
        %v2053 = vunpack.c.l.b16 %v1701
        %v2054 = vunpack.c.l.b16 %v1702
        %v2055 = vunpack.c.l.b16 %v1703
        %v2056 = vunpack.c.l.b16 %v1704
        %v2057 = vunpack.c.l.b16 %v1705
        %v2058 = vpack.c.b16 %v593, %v2042
        %v2059 = vpack.c.b16 %v596, %v2043
        %v2060 = vpack.c.b16 %v599, %v2044
        %v2061 = vpack.c.b16 %v602, %v2045
        %v2062 = vpack.c.b16 %v605, %v2046
        %v2063 = vpack.c.b16 %v608, %v2047
        %v2064 = vpack.c.b16 %v611, %v2048
        %v2065 = vpack.c.b16 %v614, %v2049
        %v2066 = vpack.c.b16 %v617, %v2050
        %v2067 = vpack.c.b16 %v620, %v2051
        %v2068 = vpack.c.b16 %v623, %v2052
        %v2069 = vpack.c.b16 %v626, %v2053
        %v2070 = vpack.c.b16 %v629, %v2054
        %v2071 = vpack.c.b16 %v632, %v2055
        %v2072 = vpack.c.b16 %v635, %v2056
        %v2073 = vpack.c.b16 %v638, %v2057
        %v2075 = vshrl.u32 %v2058, 16
        %v2077 = vshll.u32 %v2058, 16
        %v2079 = vrot.slane %v2077, 1
        %v2080 = vor.u32 %v2075, %v2079
        %v2082 = vshll.u32 %v641, 16
        %v2084 = vrot.slane %v2082, 1
        %v2085 = vsel %vm1123, %v2080, %v2084
        %v2086 = vshrl.u32 %v641, 16
        %v2089 = vshrl.u32 %v2059, 16
        %v2091 = vshll.u32 %v2059, 16
        %v2093 = vrot.slane %v2091, 1
        %v2094 = vor.u32 %v2089, %v2093
        %v2096 = vshll.u32 %v643, 16
        %v2098 = vrot.slane %v2096, 1
        %v2099 = vsel %vm1123, %v2094, %v2098
        %v2100 = vshrl.u32 %v643, 16
        %v2103 = vshrl.u32 %v2060, 16
        %v2105 = vshll.u32 %v2060, 16
        %v2107 = vrot.slane %v2105, 1
        %v2108 = vor.u32 %v2103, %v2107
        %v2110 = vshll.u32 %v645, 16
        %v2112 = vrot.slane %v2110, 1
        %v2113 = vsel %vm1123, %v2108, %v2112
        %v2114 = vshrl.u32 %v645, 16
        %v2117 = vshrl.u32 %v2061, 16
        %v2119 = vshll.u32 %v2061, 16
        %v2121 = vrot.slane %v2119, 1
        %v2122 = vor.u32 %v2117, %v2121
        %v2124 = vshll.u32 %v647, 16
        %v2126 = vrot.slane %v2124, 1
        %v2127 = vsel %vm1123, %v2122, %v2126
        %v2128 = vshrl.u32 %v647, 16
        %v2131 = vshrl.u32 %v2062, 16
        %v2133 = vshll.u32 %v2062, 16
        %v2135 = vrot.slane %v2133, 1
        %v2136 = vor.u32 %v2131, %v2135
        %v2138 = vshll.u32 %v649, 16
        %v2140 = vrot.slane %v2138, 1
        %v2141 = vsel %vm1123, %v2136, %v2140
        %v2142 = vshrl.u32 %v649, 16
        %v2145 = vshrl.u32 %v2063, 16
        %v2147 = vshll.u32 %v2063, 16
        %v2149 = vrot.slane %v2147, 1
        %v2150 = vor.u32 %v2145, %v2149
        %v2152 = vshll.u32 %v651, 16
        %v2154 = vrot.slane %v2152, 1
        %v2155 = vsel %vm1123, %v2150, %v2154
        %v2156 = vshrl.u32 %v651, 16
        %v2159 = vshrl.u32 %v2064, 16
        %v2161 = vshll.u32 %v2064, 16
        %v2163 = vrot.slane %v2161, 1
        %v2164 = vor.u32 %v2159, %v2163
        %v2166 = vshll.u32 %v653, 16
        %v2168 = vrot.slane %v2166, 1
        %v2169 = vsel %vm1123, %v2164, %v2168
        %v2170 = vshrl.u32 %v653, 16
        %v2173 = vshrl.u32 %v2065, 16
        %v2175 = vshll.u32 %v2065, 16
        %v2177 = vrot.slane %v2175, 1
        %v2178 = vor.u32 %v2173, %v2177
        %v2180 = vshll.u32 %v655, 16
        %v2182 = vrot.slane %v2180, 1
        %v2183 = vsel %vm1123, %v2178, %v2182
        %v2184 = vshrl.u32 %v655, 16
        %v2187 = vshrl.u32 %v2066, 16
        %v2189 = vshll.u32 %v2066, 16
        %v2191 = vrot.slane %v2189, 1
        %v2192 = vor.u32 %v2187, %v2191
        %v2194 = vshll.u32 %v657, 16
        %v2196 = vrot.slane %v2194, 1
        %v2197 = vsel %vm1123, %v2192, %v2196
        %v2198 = vshrl.u32 %v657, 16
        %v2201 = vshrl.u32 %v2067, 16
        %v2203 = vshll.u32 %v2067, 16
        %v2205 = vrot.slane %v2203, 1
        %v2206 = vor.u32 %v2201, %v2205
        %v2208 = vshll.u32 %v659, 16
        %v2210 = vrot.slane %v2208, 1
        %v2211 = vsel %vm1123, %v2206, %v2210
        %v2212 = vshrl.u32 %v659, 16
        %v2215 = vshrl.u32 %v2068, 16
        %v2217 = vshll.u32 %v2068, 16
        %v2219 = vrot.slane %v2217, 1
        %v2220 = vor.u32 %v2215, %v2219
        %v2222 = vshll.u32 %v661, 16
        %v2224 = vrot.slane %v2222, 1
        %v2225 = vsel %vm1123, %v2220, %v2224
        %v2226 = vshrl.u32 %v661, 16
        %v2229 = vshrl.u32 %v2069, 16
        %v2231 = vshll.u32 %v2069, 16
        %v2233 = vrot.slane %v2231, 1
        %v2234 = vor.u32 %v2229, %v2233
        %v2236 = vshll.u32 %v663, 16
        %v2238 = vrot.slane %v2236, 1
        %v2239 = vsel %vm1123, %v2234, %v2238
        %v2240 = vshrl.u32 %v663, 16
        %v2243 = vshrl.u32 %v2070, 16
        %v2245 = vshll.u32 %v2070, 16
        %v2247 = vrot.slane %v2245, 1
        %v2248 = vor.u32 %v2243, %v2247
        %v2250 = vshll.u32 %v665, 16
        %v2252 = vrot.slane %v2250, 1
        %v2253 = vsel %vm1123, %v2248, %v2252
        %v2254 = vshrl.u32 %v665, 16
        %v2257 = vshrl.u32 %v2071, 16
        %v2259 = vshll.u32 %v2071, 16
        %v2261 = vrot.slane %v2259, 1
        %v2262 = vor.u32 %v2257, %v2261
        %v2264 = vshll.u32 %v667, 16
        %v2266 = vrot.slane %v2264, 1
        %v2267 = vsel %vm1123, %v2262, %v2266
        %v2268 = vshrl.u32 %v667, 16
        %v2271 = vshrl.u32 %v2072, 16
        %v2273 = vshll.u32 %v2072, 16
        %v2275 = vrot.slane %v2273, 1
        %v2276 = vor.u32 %v2271, %v2275
        %v2278 = vshll.u32 %v669, 16
        %v2280 = vrot.slane %v2278, 1
        %v2281 = vsel %vm1123, %v2276, %v2280
        %v2282 = vshrl.u32 %v669, 16
        %v2285 = vshrl.u32 %v2073, 16
        %v2287 = vshll.u32 %v2073, 16
        %v2289 = vrot.slane %v2287, 1
        %v2290 = vor.u32 %v2285, %v2289
        %v2292 = vshll.u32 %v671, 16
        %v2294 = vrot.slane %v2292, 1
        %v2295 = vsel %vm1123, %v2290, %v2294
        %v2296 = vshrl.u32 %v671, 16
        %2298 = vrot.lane.b32.xlu0 %v2085, 12
        %v2299 = vpop.permute.xlu0 %2298
        %2300 = vrot.lane.b32.xlu0 %v2086, 12
        %v2301 = vpop.permute.xlu0 %2300
        %2302 = vrot.lane.b32.xlu0 %v2099, 12
        %v2303 = vpop.permute.xlu0 %2302
        %2304 = vrot.lane.b32.xlu0 %v2100, 12
        %v2305 = vpop.permute.xlu0 %2304
        %2306 = vrot.lane.b32.xlu0 %v2113, 12
        %v2307 = vpop.permute.xlu0 %2306
        %2308 = vrot.lane.b32.xlu0 %v2114, 12
        %v2309 = vpop.permute.xlu0 %2308
        %2310 = vrot.lane.b32.xlu0 %v2127, 12
        %v2311 = vpop.permute.xlu0 %2310
        %2312 = vrot.lane.b32.xlu0 %v2128, 12
        %v2313 = vpop.permute.xlu0 %2312
        %2314 = vrot.lane.b32.xlu0 %v2141, 12
        %v2315 = vpop.permute.xlu0 %2314
        %2316 = vrot.lane.b32.xlu0 %v2142, 12
        %v2317 = vpop.permute.xlu0 %2316
        %2318 = vrot.lane.b32.xlu0 %v2155, 12
        %v2319 = vpop.permute.xlu0 %2318
        %2320 = vrot.lane.b32.xlu0 %v2156, 12
        %v2321 = vpop.permute.xlu0 %2320
        %2322 = vrot.lane.b32.xlu0 %v2169, 12
        %v2323 = vpop.permute.xlu0 %2322
        %2324 = vrot.lane.b32.xlu0 %v2170, 12
        %v2325 = vpop.permute.xlu0 %2324
        %2326 = vrot.lane.b32.xlu0 %v2183, 12
        %v2327 = vpop.permute.xlu0 %2326
        %2328 = vrot.lane.b32.xlu0 %v2184, 12
        %v2329 = vpop.permute.xlu0 %2328
        %2330 = vrot.lane.b32.xlu0 %v2197, 12
        %v2331 = vpop.permute.xlu0 %2330
        %2332 = vrot.lane.b32.xlu0 %v2198, 12
        %v2333 = vpop.permute.xlu0 %2332
        %2334 = vrot.lane.b32.xlu0 %v2211, 12
        %v2335 = vpop.permute.xlu0 %2334
        %2336 = vrot.lane.b32.xlu0 %v2212, 12
        %v2337 = vpop.permute.xlu0 %2336
        %2338 = vrot.lane.b32.xlu0 %v2225, 12
        %v2339 = vpop.permute.xlu0 %2338
        %2340 = vrot.lane.b32.xlu0 %v2226, 12
        %v2341 = vpop.permute.xlu0 %2340
        %2342 = vrot.lane.b32.xlu0 %v2239, 12
        %v2343 = vpop.permute.xlu0 %2342
        %2344 = vrot.lane.b32.xlu0 %v2240, 12
        %v2345 = vpop.permute.xlu0 %2344
        %2346 = vrot.lane.b32.xlu0 %v2253, 12
        %v2347 = vpop.permute.xlu0 %2346
        %2348 = vrot.lane.b32.xlu0 %v2254, 12
        %v2349 = vpop.permute.xlu0 %2348
        %2350 = vrot.lane.b32.xlu0 %v2267, 12
        %v2351 = vpop.permute.xlu0 %2350
        %2352 = vrot.lane.b32.xlu0 %v2268, 12
        %v2353 = vpop.permute.xlu0 %2352
        %2354 = vrot.lane.b32.xlu0 %v2281, 12
        %v2355 = vpop.permute.xlu0 %2354
        %2356 = vrot.lane.b32.xlu0 %v2282, 12
        %v2357 = vpop.permute.xlu0 %2356
        %2358 = vrot.lane.b32.xlu0 %v2295, 12
        %v2359 = vpop.permute.xlu0 %2358
        %2360 = vrot.lane.b32.xlu0 %v2296, 12
        %v2361 = vpop.permute.xlu0 %2360
        %v2363 = vsel %vm912, %v336, %v1963
        %v2365 = vsel %vm912, %v337, %v1965
        %v2367 = vsel %vm912, %v338, %v1967
        %v2369 = vsel %vm912, %v339, %v1969
        %v2371 = vsel %vm912, %v340, %v1971
        %v2373 = vsel %vm912, %v341, %v1973
        %v2375 = vsel %vm912, %v342, %v1975
        %v2377 = vsel %vm912, %v343, %v1977
        %v2379 = vsel %vm912, %v344, %v1979
        %v2381 = vsel %vm912, %v345, %v1981
        %v2383 = vsel %vm912, %v346, %v1983
        %v2385 = vsel %vm912, %v347, %v1985
        %v2387 = vsel %vm912, %v348, %v1987
        %v2389 = vsel %vm912, %v349, %v1989
        %v2391 = vsel %vm912, %v350, %v1991
        %v2393 = vsel %vm912, %v351, %v1993
        %v2395 = vsel %vm912, %v352, %v1995
        %v2397 = vsel %vm912, %v353, %v1997
        %v2399 = vsel %vm912, %v354, %v1999
        %v2401 = vsel %vm912, %v355, %v2001
        %v2403 = vsel %vm912, %v356, %v2003
        %v2405 = vsel %vm912, %v357, %v2005
        %v2407 = vsel %vm912, %v358, %v2007
        %v2409 = vsel %vm912, %v359, %v2009
        %v2411 = vsel %vm912, %v360, %v2011
        %v2413 = vsel %vm912, %v361, %v2013
        %v2415 = vsel %vm912, %v362, %v2015
        %v2417 = vsel %vm912, %v363, %v2017
        %v2419 = vsel %vm912, %v364, %v2019
        %v2421 = vsel %vm912, %v365, %v2021
        %v2423 = vsel %vm912, %v366, %v2023
        %v2425 = vsel %vm912, %v367, %v2025
        %v2426 = vsel %vm993, %v2363, %v673
        %v2427 = vsel %vm993, %v2365, %v675
        %v2428 = vsel %vm993, %v2367, %v677
        %v2429 = vsel %vm993, %v2369, %v679
        %v2430 = vsel %vm993, %v2371, %v681
        %v2431 = vsel %vm993, %v2373, %v683
        %v2432 = vsel %vm993, %v2375, %v685
        %v2433 = vsel %vm993, %v2377, %v687
        %v2434 = vsel %vm993, %v2379, %v689
        %v2435 = vsel %vm993, %v2381, %v691
        %v2436 = vsel %vm993, %v2383, %v693
        %v2437 = vsel %vm993, %v2385, %v695
        %v2438 = vsel %vm993, %v2387, %v697
        %v2439 = vsel %vm993, %v2389, %v699
        %v2440 = vsel %vm993, %v2391, %v701
        %v2441 = vsel %vm993, %v2393, %v703
        %v2442 = vsel %vm993, %v2395, %v705
        %v2443 = vsel %vm993, %v2397, %v707
        %v2444 = vsel %vm993, %v2399, %v709
        %v2445 = vsel %vm993, %v2401, %v711
        %v2446 = vsel %vm993, %v2403, %v713
        %v2447 = vsel %vm993, %v2405, %v715
        %v2448 = vsel %vm993, %v2407, %v717
        %v2449 = vsel %vm993, %v2409, %v719
        %v2450 = vsel %vm993, %v2411, %v721
        %v2451 = vsel %vm993, %v2413, %v723
        %v2452 = vsel %vm993, %v2415, %v725
        %v2453 = vsel %vm993, %v2417, %v727
        %v2454 = vsel %vm993, %v2419, %v729
        %v2455 = vsel %vm993, %v2421, %v731
        %v2456 = vsel %vm993, %v2423, %v733
        %v2457 = vsel %vm993, %v2425, %v735
        %v2459 = vsel %vm1058, %v2426, %v2299
        %v2461 = vsel %vm1058, %v2427, %v2301
        %v2463 = vsel %vm1058, %v2428, %v2303
        %v2465 = vsel %vm1058, %v2429, %v2305
        %v2467 = vsel %vm1058, %v2430, %v2307
        %v2469 = vsel %vm1058, %v2431, %v2309
        %v2471 = vsel %vm1058, %v2432, %v2311
        %v2473 = vsel %vm1058, %v2433, %v2313
        %v2475 = vsel %vm1058, %v2434, %v2315
        %v2477 = vsel %vm1058, %v2435, %v2317
        %v2479 = vsel %vm1058, %v2436, %v2319
        %v2481 = vsel %vm1058, %v2437, %v2321
        %v2483 = vsel %vm1058, %v2438, %v2323
        %v2485 = vsel %vm1058, %v2439, %v2325
        %v2487 = vsel %vm1058, %v2440, %v2327
        %v2489 = vsel %vm1058, %v2441, %v2329
        %v2491 = vsel %vm1058, %v2442, %v2331
        %v2493 = vsel %vm1058, %v2443, %v2333
        %v2495 = vsel %vm1058, %v2444, %v2335
        %v2497 = vsel %vm1058, %v2445, %v2337
        %v2499 = vsel %vm1058, %v2446, %v2339
        %v2501 = vsel %vm1058, %v2447, %v2341
        %v2503 = vsel %vm1058, %v2448, %v2343
        %v2505 = vsel %vm1058, %v2449, %v2345
        %v2507 = vsel %vm1058, %v2450, %v2347
        %v2509 = vsel %vm1058, %v2451, %v2349
        %v2511 = vsel %vm1058, %v2452, %v2351
        %v2513 = vsel %vm1058, %v2453, %v2353
        %v2515 = vsel %vm1058, %v2454, %v2355
        %v2517 = vsel %vm1058, %v2455, %v2357
        %v2519 = vsel %vm1058, %v2456, %v2359
        %v2521 = vsel %vm1058, %v2457, %v2361
        %v2522 = vshrl.u32 %v2459, 16
        %v2524 = vshll.u32 %v2459, 16
        %v2526 = vrot.slane %v2524, 1
        %v2527 = vor.u32 %v2522, %v2526
        %v2528 = vshll.u32 %v2461, 16
        %v2530 = vrot.slane %v2528, 1
        %v2531 = vsel %vm1123, %v2527, %v2530
        %v2532 = vshrl.u32 %v2463, 16
        %v2534 = vshll.u32 %v2463, 16
        %v2536 = vrot.slane %v2534, 1
        %v2537 = vor.u32 %v2532, %v2536
        %v2538 = vshll.u32 %v2465, 16
        %v2540 = vrot.slane %v2538, 1
        %v2541 = vsel %vm1123, %v2537, %v2540
        %v2542 = vshrl.u32 %v2467, 16
        %v2544 = vshll.u32 %v2467, 16
        %v2546 = vrot.slane %v2544, 1
        %v2547 = vor.u32 %v2542, %v2546
        %v2548 = vshll.u32 %v2469, 16
        %v2550 = vrot.slane %v2548, 1
        %v2551 = vsel %vm1123, %v2547, %v2550
        %v2552 = vshrl.u32 %v2471, 16
        %v2554 = vshll.u32 %v2471, 16
        %v2556 = vrot.slane %v2554, 1
        %v2557 = vor.u32 %v2552, %v2556
        %v2558 = vshll.u32 %v2473, 16
        %v2560 = vrot.slane %v2558, 1
        %v2561 = vsel %vm1123, %v2557, %v2560
        %v2562 = vshrl.u32 %v2475, 16
        %v2564 = vshll.u32 %v2475, 16
        %v2566 = vrot.slane %v2564, 1
        %v2567 = vor.u32 %v2562, %v2566
        %v2568 = vshll.u32 %v2477, 16
        %v2570 = vrot.slane %v2568, 1
        %v2571 = vsel %vm1123, %v2567, %v2570
        %v2572 = vshrl.u32 %v2479, 16
        %v2574 = vshll.u32 %v2479, 16
        %v2576 = vrot.slane %v2574, 1
        %v2577 = vor.u32 %v2572, %v2576
        %v2578 = vshll.u32 %v2481, 16
        %v2580 = vrot.slane %v2578, 1
        %v2581 = vsel %vm1123, %v2577, %v2580
        %v2582 = vshrl.u32 %v2483, 16
        %v2584 = vshll.u32 %v2483, 16
        %v2586 = vrot.slane %v2584, 1
        %v2587 = vor.u32 %v2582, %v2586
        %v2588 = vshll.u32 %v2485, 16
        %v2590 = vrot.slane %v2588, 1
        %v2591 = vsel %vm1123, %v2587, %v2590
        %v2592 = vshrl.u32 %v2487, 16
        %v2594 = vshll.u32 %v2487, 16
        %v2596 = vrot.slane %v2594, 1
        %v2597 = vor.u32 %v2592, %v2596
        %v2598 = vshll.u32 %v2489, 16
        %v2600 = vrot.slane %v2598, 1
        %v2601 = vsel %vm1123, %v2597, %v2600
        %v2602 = vshrl.u32 %v2491, 16
        %v2604 = vshll.u32 %v2491, 16
        %v2606 = vrot.slane %v2604, 1
        %v2607 = vor.u32 %v2602, %v2606
        %v2608 = vshll.u32 %v2493, 16
        %v2610 = vrot.slane %v2608, 1
        %v2611 = vsel %vm1123, %v2607, %v2610
        %v2612 = vshrl.u32 %v2495, 16
        %v2614 = vshll.u32 %v2495, 16
        %v2616 = vrot.slane %v2614, 1
        %v2617 = vor.u32 %v2612, %v2616
        %v2618 = vshll.u32 %v2497, 16
        %v2620 = vrot.slane %v2618, 1
        %v2621 = vsel %vm1123, %v2617, %v2620
        %v2622 = vshrl.u32 %v2499, 16
        %v2624 = vshll.u32 %v2499, 16
        %v2626 = vrot.slane %v2624, 1
        %v2627 = vor.u32 %v2622, %v2626
        %v2628 = vshll.u32 %v2501, 16
        %v2630 = vrot.slane %v2628, 1
        %v2631 = vsel %vm1123, %v2627, %v2630
        %v2632 = vshrl.u32 %v2503, 16
        %v2634 = vshll.u32 %v2503, 16
        %v2636 = vrot.slane %v2634, 1
        %v2637 = vor.u32 %v2632, %v2636
        %v2638 = vshll.u32 %v2505, 16
        %v2640 = vrot.slane %v2638, 1
        %v2641 = vsel %vm1123, %v2637, %v2640
        %v2642 = vshrl.u32 %v2507, 16
        %v2644 = vshll.u32 %v2507, 16
        %v2646 = vrot.slane %v2644, 1
        %v2647 = vor.u32 %v2642, %v2646
        %v2648 = vshll.u32 %v2509, 16
        %v2650 = vrot.slane %v2648, 1
        %v2651 = vsel %vm1123, %v2647, %v2650
        %v2652 = vshrl.u32 %v2511, 16
        %v2654 = vshll.u32 %v2511, 16
        %v2656 = vrot.slane %v2654, 1
        %v2657 = vor.u32 %v2652, %v2656
        %v2658 = vshll.u32 %v2513, 16
        %v2660 = vrot.slane %v2658, 1
        %v2661 = vsel %vm1123, %v2657, %v2660
        %v2662 = vshrl.u32 %v2515, 16
        %v2664 = vshll.u32 %v2515, 16
        %v2666 = vrot.slane %v2664, 1
        %v2667 = vor.u32 %v2662, %v2666
        %v2668 = vshll.u32 %v2517, 16
        %v2670 = vrot.slane %v2668, 1
        %v2671 = vsel %vm1123, %v2667, %v2670
        %v2672 = vshrl.u32 %v2519, 16
        %v2674 = vshll.u32 %v2519, 16
        %v2676 = vrot.slane %v2674, 1
        %v2677 = vor.u32 %v2672, %v2676
        %v2678 = vshll.u32 %v2521, 16
        %v2680 = vrot.slane %v2678, 1
        %v2681 = vsel %vm1123, %v2677, %v2680
        %s2682 = scalar_lea.vmem %s1, 8
        %v2683 = vld [vmem:[%s2682] sm:$0xf]
        %v2684 = vld [vmem:[%s2682 + $0x4] sm:$0xf]
        %v2687 = vunpack.c.l.b16 %v2683
        %v2688 = vunpack.c.l.b16 %v2684
        %v2689 = vpack.c.b16 %v2688, %v2687
        %v2692 = vsel %vm1292, %v2531, 0
        %v2695 = vsel %vm1292, %v2541, 0
        %v2698 = vsel %vm1292, %v2551, 0
        %v2701 = vsel %vm1292, %v2561, 0
        %v2704 = vsel %vm1292, %v2571, 0
        %v2707 = vsel %vm1292, %v2581, 0
        %v2710 = vsel %vm1292, %v2591, 0
        %v2713 = vsel %vm1292, %v2601, 0
        %v2716 = vsel %vm1292, %v2611, 0
        %v2719 = vsel %vm1292, %v2621, 0
        %v2722 = vsel %vm1292, %v2631, 0
        %v2725 = vsel %vm1292, %v2641, 0
        %v2728 = vsel %vm1292, %v2651, 0
        %v2731 = vsel %vm1292, %v2661, 0
        %v2734 = vsel %vm1292, %v2671, 0
        %v2737 = vsel %vm1292, %v2681, 0
        %2739 = vmatprep.subr.bf16.mxu0 0
        %2740 = vmatpush1.bf16.msra.mxu0 %v2689
        %2741 = vmatprep.subr.bf16.mxu0 0
        %2742 = vmatpush1.bf16.msra.mxu0 0
        %2743 = vmatprep.subr.bf16.mxu0 0
        %2744 = vmatpush1.bf16.msra.mxu0 0
        %2745 = vmatprep.subr.bf16.mxu0 0
        %2746 = vmatpush1.bf16.msra.mxu0 0
        %2747 = vmatprep.subr.bf16.mxu0 0
        %2748 = vmatpush1.bf16.msra.mxu0 0
        %2749 = vmatprep.subr.bf16.mxu0 0
        %2750 = vmatpush1.bf16.msra.mxu0 0
        %2751 = vmatprep.subr.bf16.mxu0 0
        %2752 = vmatpush1.bf16.msra.mxu0 0
        %2753 = vmatprep.subr.bf16.mxu0 0
        %2754 = vmatpush1.bf16.msra.mxu0 0
        %2755 = vmatprep.subr.bf16.mxu0 0
        %2756 = vmatpush1.bf16.msra.mxu0 0
        %2757 = vmatprep.subr.bf16.mxu0 0
        %2758 = vmatpush1.bf16.msra.mxu0 0
        %2759 = vmatprep.subr.bf16.mxu0 0
        %2760 = vmatpush1.bf16.msra.mxu0 0
        %2761 = vmatprep.subr.bf16.mxu0 0
        %2762 = vmatpush1.bf16.msra.mxu0 0
        %2763 = vmatprep.subr.bf16.mxu0 0
        %2764 = vmatpush1.bf16.msra.mxu0 0
        %2765 = vmatprep.subr.bf16.mxu0 0
        %2766 = vmatpush1.bf16.msra.mxu0 0
        %2767 = vmatprep.subr.bf16.mxu0 0
        %2768 = vmatpush1.bf16.msra.mxu0 0
        %2769 = vmatprep.subr.bf16.mxu0 0
        %2770 = vmatpush1.bf16.msra.mxu0 0
        %2771 = vmatprep.mubr.bf16.mxu0 0
        %2772 = vmatmul.mubr.bf16.gmra.mrb[0].mxu0 %v2692
        %v2773 = vpop.f32.mrb[0].mxu0
        %v2774 = vadd.f32 0.0, %v2773
        %v2775 = vpop.f32.mrb[0].mxu0
        %v2776 = vpop.f32.mrb[0].mxu0
        %v2777 = vadd.f32 0.0, %v2776
        %v2778 = vpop.f32.mrb[0].mxu0
        %2779 = vmatprep.mubr.bf16.mxu0 0
        %2780 = vmatmul.mubr.bf16.gmra.mrb[0].mxu0 %v2695
        %v2781 = vpop.f32.mrb[0].mxu0
        %v2782 = vadd.f32 0.0, %v2781
        %v2783 = vpop.f32.mrb[0].mxu0
        %v2784 = vpop.f32.mrb[0].mxu0
        %v2785 = vadd.f32 0.0, %v2784
        %v2786 = vpop.f32.mrb[0].mxu0
        %2787 = vmatprep.mubr.bf16.mxu0 0
        %2788 = vmatmul.mubr.bf16.gmra.mrb[0].mxu0 %v2698
        %v2789 = vpop.f32.mrb[0].mxu0
        %v2790 = vadd.f32 0.0, %v2789
        %v2791 = vpop.f32.mrb[0].mxu0
        %v2792 = vpop.f32.mrb[0].mxu0
        %v2793 = vadd.f32 0.0, %v2792
        %v2794 = vpop.f32.mrb[0].mxu0
        %2795 = vmatprep.mubr.bf16.mxu0 0
        %2796 = vmatmul.mubr.bf16.gmra.mrb[0].mxu0 %v2701
        %v2797 = vpop.f32.mrb[0].mxu0
        %v2798 = vadd.f32 0.0, %v2797
        %v2799 = vpop.f32.mrb[0].mxu0
        %v2800 = vpop.f32.mrb[0].mxu0
        %v2801 = vadd.f32 0.0, %v2800
        %v2802 = vpop.f32.mrb[0].mxu0
        %2803 = vmatprep.mubr.bf16.mxu0 0
        %2804 = vmatmul.mubr.bf16.gmra.mrb[0].mxu0 %v2704
        %v2805 = vpop.f32.mrb[0].mxu0
        %v2806 = vadd.f32 0.0, %v2805
        %v2807 = vpop.f32.mrb[0].mxu0
        %v2808 = vpop.f32.mrb[0].mxu0
        %v2809 = vadd.f32 0.0, %v2808
        %v2810 = vpop.f32.mrb[0].mxu0
        %2811 = vmatprep.mubr.bf16.mxu0 0
        %2812 = vmatmul.mubr.bf16.gmra.mrb[0].mxu0 %v2707
        %v2813 = vpop.f32.mrb[0].mxu0
        %v2814 = vadd.f32 0.0, %v2813
        %v2815 = vpop.f32.mrb[0].mxu0
        %v2816 = vpop.f32.mrb[0].mxu0
        %v2817 = vadd.f32 0.0, %v2816
        %v2818 = vpop.f32.mrb[0].mxu0
        %2819 = vmatprep.mubr.bf16.mxu0 0
        %2820 = vmatmul.mubr.bf16.gmra.mrb[0].mxu0 %v2710
        %v2821 = vpop.f32.mrb[0].mxu0
        %v2822 = vadd.f32 0.0, %v2821
        %v2823 = vpop.f32.mrb[0].mxu0
        %v2824 = vpop.f32.mrb[0].mxu0
        %v2825 = vadd.f32 0.0, %v2824
        %v2826 = vpop.f32.mrb[0].mxu0
        %2827 = vmatprep.mubr.bf16.mxu0 0
        %2828 = vmatmul.mubr.bf16.gmra.mrb[0].mxu0 %v2713
        %v2829 = vpop.f32.mrb[0].mxu0
        %v2830 = vadd.f32 0.0, %v2829
        %v2831 = vpop.f32.mrb[0].mxu0
        %v2832 = vpop.f32.mrb[0].mxu0
        %v2833 = vadd.f32 0.0, %v2832
        %v2834 = vpop.f32.mrb[0].mxu0
        %2835 = vmatprep.mubr.bf16.mxu0 0
        %2836 = vmatmul.mubr.bf16.gmra.mrb[0].mxu0 %v2716
        %v2837 = vpop.f32.mrb[0].mxu0
        %v2838 = vadd.f32 0.0, %v2837
        %v2839 = vpop.f32.mrb[0].mxu0
        %v2840 = vpop.f32.mrb[0].mxu0
        %v2841 = vadd.f32 0.0, %v2840
        %v2842 = vpop.f32.mrb[0].mxu0
        %2843 = vmatprep.mubr.bf16.mxu0 0
        %2844 = vmatmul.mubr.bf16.gmra.mrb[0].mxu0 %v2719
        %v2845 = vpop.f32.mrb[0].mxu0
        %v2846 = vadd.f32 0.0, %v2845
        %v2847 = vpop.f32.mrb[0].mxu0
        %v2848 = vpop.f32.mrb[0].mxu0
        %v2849 = vadd.f32 0.0, %v2848
        %v2850 = vpop.f32.mrb[0].mxu0
        %2851 = vmatprep.mubr.bf16.mxu0 0
        %2852 = vmatmul.mubr.bf16.gmra.mrb[0].mxu0 %v2722
        %v2853 = vpop.f32.mrb[0].mxu0
        %v2854 = vadd.f32 0.0, %v2853
        %v2855 = vpop.f32.mrb[0].mxu0
        %v2856 = vpop.f32.mrb[0].mxu0
        %v2857 = vadd.f32 0.0, %v2856
        %v2858 = vpop.f32.mrb[0].mxu0
        %2859 = vmatprep.mubr.bf16.mxu0 0
        %2860 = vmatmul.mubr.bf16.gmra.mrb[0].mxu0 %v2725
        %v2861 = vpop.f32.mrb[0].mxu0
        %v2862 = vadd.f32 0.0, %v2861
        %v2863 = vpop.f32.mrb[0].mxu0
        %v2864 = vpop.f32.mrb[0].mxu0
        %v2865 = vadd.f32 0.0, %v2864
        %v2866 = vpop.f32.mrb[0].mxu0
        %2867 = vmatprep.mubr.bf16.mxu0 0
        %2868 = vmatmul.mubr.bf16.gmra.mrb[0].mxu0 %v2728
        %v2869 = vpop.f32.mrb[0].mxu0
        %v2870 = vadd.f32 0.0, %v2869
        %v2871 = vpop.f32.mrb[0].mxu0
        %v2872 = vpop.f32.mrb[0].mxu0
        %v2873 = vadd.f32 0.0, %v2872
        %v2874 = vpop.f32.mrb[0].mxu0
        %2875 = vmatprep.mubr.bf16.mxu0 0
        %2876 = vmatmul.mubr.bf16.gmra.mrb[0].mxu0 %v2731
        %v2877 = vpop.f32.mrb[0].mxu0
        %v2878 = vadd.f32 0.0, %v2877
        %v2879 = vpop.f32.mrb[0].mxu0
        %v2880 = vpop.f32.mrb[0].mxu0
        %v2881 = vadd.f32 0.0, %v2880
        %v2882 = vpop.f32.mrb[0].mxu0
        %2883 = vmatprep.mubr.bf16.mxu0 0
        %2884 = vmatmul.mubr.bf16.gmra.mrb[0].mxu0 %v2734
        %v2885 = vpop.f32.mrb[0].mxu0
        %v2886 = vadd.f32 0.0, %v2885
        %v2887 = vpop.f32.mrb[0].mxu0
        %v2888 = vpop.f32.mrb[0].mxu0
        %v2889 = vadd.f32 0.0, %v2888
        %v2890 = vpop.f32.mrb[0].mxu0
        %2891 = vmatprep.mubr.bf16.mxu0 0
        %2892 = vmatmul.mubr.bf16.gmra.mrb[0].mxu0 %v2737
        %v2893 = vpop.f32.mrb[0].mxu0
        %v2894 = vadd.f32 0.0, %v2893
        %v2895 = vpop.f32.mrb[0].mxu0
        %v2896 = vpop.f32.mrb[0].mxu0
        %v2897 = vadd.f32 0.0, %v2896
        %v2898 = vpop.f32.mrb[0].mxu0
        %2899 = vdwg.mxu0
        %v2900 = vsel %vm993, %v2774, 0.0
        %v2901 = vsel %vm993, %v2777, 0.0
        %v2902 = vadd.f32 %v2900, %v2901
        %v2903 = vsel %vm993, %v2782, 0.0
        %v2904 = vadd.f32 %v2902, %v2903
        %v2905 = vsel %vm993, %v2785, 0.0
        %v2906 = vadd.f32 %v2904, %v2905
        %v2907 = vsel %vm993, %v2790, 0.0
        %v2908 = vadd.f32 %v2906, %v2907
        %v2909 = vsel %vm993, %v2793, 0.0
        %v2910 = vadd.f32 %v2908, %v2909
        %v2911 = vsel %vm993, %v2798, 0.0
        %v2912 = vadd.f32 %v2910, %v2911
        %v2913 = vsel %vm993, %v2801, 0.0
        %v2914 = vadd.f32 %v2912, %v2913
        %v2915 = vsel %vm993, %v2806, 0.0
        %v2916 = vadd.f32 %v2914, %v2915
        %v2917 = vsel %vm993, %v2809, 0.0
        %v2918 = vadd.f32 %v2916, %v2917
        %v2919 = vsel %vm993, %v2814, 0.0
        %v2920 = vadd.f32 %v2918, %v2919
        %v2921 = vsel %vm993, %v2817, 0.0
        %v2922 = vadd.f32 %v2920, %v2921
        %v2923 = vsel %vm993, %v2822, 0.0
        %v2924 = vadd.f32 %v2922, %v2923
        %v2925 = vsel %vm993, %v2825, 0.0
        %v2926 = vadd.f32 %v2924, %v2925
        %v2927 = vsel %vm993, %v2830, 0.0
        %v2928 = vadd.f32 %v2926, %v2927
        %v2929 = vsel %vm993, %v2833, 0.0
        %v2930 = vadd.f32 %v2928, %v2929
        %v2931 = vsel %vm993, %v2838, 0.0
        %v2932 = vadd.f32 %v2930, %v2931
        %v2933 = vsel %vm993, %v2841, 0.0
        %v2934 = vadd.f32 %v2932, %v2933
        %v2935 = vsel %vm993, %v2846, 0.0
        %v2936 = vadd.f32 %v2934, %v2935
        %v2937 = vsel %vm993, %v2849, 0.0
        %v2938 = vadd.f32 %v2936, %v2937
        %v2939 = vsel %vm993, %v2854, 0.0
        %v2940 = vadd.f32 %v2938, %v2939
        %v2941 = vsel %vm993, %v2857, 0.0
        %v2942 = vadd.f32 %v2940, %v2941
        %v2943 = vsel %vm993, %v2862, 0.0
        %v2944 = vadd.f32 %v2942, %v2943
        %v2945 = vsel %vm993, %v2865, 0.0
        %v2946 = vadd.f32 %v2944, %v2945
        %v2947 = vsel %vm993, %v2870, 0.0
        %v2948 = vadd.f32 %v2946, %v2947
        %v2949 = vsel %vm993, %v2873, 0.0
        %v2950 = vadd.f32 %v2948, %v2949
        %v2951 = vsel %vm993, %v2878, 0.0
        %v2952 = vadd.f32 %v2950, %v2951
        %v2953 = vsel %vm993, %v2881, 0.0
        %v2954 = vadd.f32 %v2952, %v2953
        %v2955 = vsel %vm993, %v2886, 0.0
        %v2956 = vadd.f32 %v2954, %v2955
        %v2957 = vsel %vm993, %v2889, 0.0
        %v2958 = vadd.f32 %v2956, %v2957
        %v2959 = vsel %vm993, %v2894, 0.0
        %v2960 = vadd.f32 %v2958, %v2959
        %v2961 = vsel %vm993, %v2897, 0.0
        %v2962 = vadd.f32 %v2960, %v2961
        %v2963 = vrot.slane %v2962, 4
        %v2964 = vadd.f32 %v2962, %v2963
        %v2965 = vrot.slane %v2964, 2
        %v2966 = vadd.f32 %v2964, %v2965
        %v2967 = vrot.slane %v2966, 1
        %v2968 = vadd.f32 %v2966, %v2967
        %v2969 = vadd.f32 %v1571, %v2968
        %v2970 = vmul.f32 %v2774, %v2774
        %v2971 = vmul.f32 %v2777, %v2777
        %v2972 = vmul.f32 %v2782, %v2782
        %v2973 = vmul.f32 %v2785, %v2785
        %v2974 = vmul.f32 %v2790, %v2790
        %v2975 = vmul.f32 %v2793, %v2793
        %v2976 = vmul.f32 %v2798, %v2798
        %v2977 = vmul.f32 %v2801, %v2801
        %v2978 = vmul.f32 %v2806, %v2806
        %v2979 = vmul.f32 %v2809, %v2809
        %v2980 = vmul.f32 %v2814, %v2814
        %v2981 = vmul.f32 %v2817, %v2817
        %v2982 = vmul.f32 %v2822, %v2822
        %v2983 = vmul.f32 %v2825, %v2825
        %v2984 = vmul.f32 %v2830, %v2830
        %v2985 = vmul.f32 %v2833, %v2833
        %v2986 = vmul.f32 %v2838, %v2838
        %v2987 = vmul.f32 %v2841, %v2841
        %v2988 = vmul.f32 %v2846, %v2846
        %v2989 = vmul.f32 %v2849, %v2849
        %v2990 = vmul.f32 %v2854, %v2854
        %v2991 = vmul.f32 %v2857, %v2857
        %v2992 = vmul.f32 %v2862, %v2862
        %v2993 = vmul.f32 %v2865, %v2865
        %v2994 = vmul.f32 %v2870, %v2870
        %v2995 = vmul.f32 %v2873, %v2873
        %v2996 = vmul.f32 %v2878, %v2878
        %v2997 = vmul.f32 %v2881, %v2881
        %v2998 = vmul.f32 %v2886, %v2886
        %v2999 = vmul.f32 %v2889, %v2889
        %v3000 = vmul.f32 %v2894, %v2894
        %v3001 = vmul.f32 %v2897, %v2897
        %v3002 = vsel %vm993, %v2970, 0.0
        %v3003 = vsel %vm993, %v2971, 0.0
        %v3004 = vadd.f32 %v3002, %v3003
        %v3005 = vsel %vm993, %v2972, 0.0
        %v3006 = vadd.f32 %v3004, %v3005
        %v3007 = vsel %vm993, %v2973, 0.0
        %v3008 = vadd.f32 %v3006, %v3007
        %v3009 = vsel %vm993, %v2974, 0.0
        %v3010 = vadd.f32 %v3008, %v3009
        %v3011 = vsel %vm993, %v2975, 0.0
        %v3012 = vadd.f32 %v3010, %v3011
        %v3013 = vsel %vm993, %v2976, 0.0
        %v3014 = vadd.f32 %v3012, %v3013
        %v3015 = vsel %vm993, %v2977, 0.0
        %v3016 = vadd.f32 %v3014, %v3015
        %v3017 = vsel %vm993, %v2978, 0.0
        %v3018 = vadd.f32 %v3016, %v3017
        %v3019 = vsel %vm993, %v2979, 0.0
        %v3020 = vadd.f32 %v3018, %v3019
        %v3021 = vsel %vm993, %v2980, 0.0
        %v3022 = vadd.f32 %v3020, %v3021
        %v3023 = vsel %vm993, %v2981, 0.0
        %v3024 = vadd.f32 %v3022, %v3023
        %v3025 = vsel %vm993, %v2982, 0.0
        %v3026 = vadd.f32 %v3024, %v3025
        %v3027 = vsel %vm993, %v2983, 0.0
        %v3028 = vadd.f32 %v3026, %v3027
        %v3029 = vsel %vm993, %v2984, 0.0
        %v3030 = vadd.f32 %v3028, %v3029
        %v3031 = vsel %vm993, %v2985, 0.0
        %v3032 = vadd.f32 %v3030, %v3031
        %v3033 = vsel %vm993, %v2986, 0.0
        %v3034 = vadd.f32 %v3032, %v3033
        %v3035 = vsel %vm993, %v2987, 0.0
        %v3036 = vadd.f32 %v3034, %v3035
        %v3037 = vsel %vm993, %v2988, 0.0
        %v3038 = vadd.f32 %v3036, %v3037
        %v3039 = vsel %vm993, %v2989, 0.0
        %v3040 = vadd.f32 %v3038, %v3039
        %v3041 = vsel %vm993, %v2990, 0.0
        %v3042 = vadd.f32 %v3040, %v3041
        %v3043 = vsel %vm993, %v2991, 0.0
        %v3044 = vadd.f32 %v3042, %v3043
        %v3045 = vsel %vm993, %v2992, 0.0
        %v3046 = vadd.f32 %v3044, %v3045
        %v3047 = vsel %vm993, %v2993, 0.0
        %v3048 = vadd.f32 %v3046, %v3047
        %v3049 = vsel %vm993, %v2994, 0.0
        %v3050 = vadd.f32 %v3048, %v3049
        %v3051 = vsel %vm993, %v2995, 0.0
        %v3052 = vadd.f32 %v3050, %v3051
        %v3053 = vsel %vm993, %v2996, 0.0
        %v3054 = vadd.f32 %v3052, %v3053
        %v3055 = vsel %vm993, %v2997, 0.0
        %v3056 = vadd.f32 %v3054, %v3055
        %v3057 = vsel %vm993, %v2998, 0.0
        %v3058 = vadd.f32 %v3056, %v3057
        %v3059 = vsel %vm993, %v2999, 0.0
        %v3060 = vadd.f32 %v3058, %v3059
        %v3061 = vsel %vm993, %v3000, 0.0
        %v3062 = vadd.f32 %v3060, %v3061
        %v3063 = vsel %vm993, %v3001, 0.0
        %v3064 = vadd.f32 %v3062, %v3063
        %v3065 = vrot.slane %v3064, 4
        %v3066 = vadd.f32 %v3064, %v3065
        %v3067 = vrot.slane %v3066, 2
        %v3068 = vadd.f32 %v3066, %v3067
        %v3069 = vrot.slane %v3068, 1
        %v3070 = vadd.f32 %v3068, %v3069
        %v3071 = vadd.f32 %v1673, %v3070
        %s3072 = scalar_lea.vmem %s141, 24
        %v3073 = vld [vmem:[%s3072] sm:$0xf]
        %v3074 = vld [vmem:[%s3072 + $0x4] sm:$0xf]
        %v3075 = vld [vmem:[%s3072 + $0x8] sm:$0x1]
        %v3076 = vld [vmem:[%s3072 + $0xc] sm:$0xf]
        %v3077 = vld [vmem:[%s3072 + $0x10] sm:$0xf]
        %v3078 = vld [vmem:[%s3072 + $0x14] sm:$0x1]
        %v3079 = vld [vmem:[%s3072 + $0x18] sm:$0xf]
        %v3080 = vld [vmem:[%s3072 + $0x1c] sm:$0xf]
        %v3081 = vld [vmem:[%s3072 + $0x20] sm:$0x1]
        %v3082 = vld [vmem:[%s3072 + $0x24] sm:$0xf]
        %v3083 = vld [vmem:[%s3072 + $0x28] sm:$0xf]
        %v3084 = vld [vmem:[%s3072 + $0x2c] sm:$0x1]
        %v3085 = vld [vmem:[%s3072 + $0x30] sm:$0xf]
        %v3086 = vld [vmem:[%s3072 + $0x34] sm:$0xf]
        %v3087 = vld [vmem:[%s3072 + $0x38] sm:$0x1]
        %v3088 = vld [vmem:[%s3072 + $0x3c] sm:$0xf]
        %v3089 = vld [vmem:[%s3072 + $0x40] sm:$0xf]
        %v3090 = vld [vmem:[%s3072 + $0x44] sm:$0x1]
        %v3091 = vld [vmem:[%s3072 + $0x48] sm:$0xf]
        %v3092 = vld [vmem:[%s3072 + $0x4c] sm:$0xf]
        %v3093 = vld [vmem:[%s3072 + $0x50] sm:$0x1]
        %v3094 = vld [vmem:[%s3072 + $0x54] sm:$0xf]
        %v3095 = vld [vmem:[%s3072 + $0x58] sm:$0xf]
        %v3096 = vld [vmem:[%s3072 + $0x5c] sm:$0x1]
        %v3097 = vld [vmem:[%s3072 + $0x60] sm:$0xf]
        %v3098 = vld [vmem:[%s3072 + $0x64] sm:$0xf]
        %v3099 = vld [vmem:[%s3072 + $0x68] sm:$0x1]
        %v3100 = vld [vmem:[%s3072 + $0x6c] sm:$0xf]
        %v3101 = vld [vmem:[%s3072 + $0x70] sm:$0xf]
        %v3102 = vld [vmem:[%s3072 + $0x74] sm:$0x1]
        %v3103 = vld [vmem:[%s3072 + $0x78] sm:$0xf]
        %v3104 = vld [vmem:[%s3072 + $0x7c] sm:$0xf]
        %v3105 = vld [vmem:[%s3072 + $0x80] sm:$0x1]
        %v3106 = vld [vmem:[%s3072 + $0x84] sm:$0xf]
        %v3107 = vld [vmem:[%s3072 + $0x88] sm:$0xf]
        %v3108 = vld [vmem:[%s3072 + $0x8c] sm:$0x1]
        %v3109 = vld [vmem:[%s3072 + $0x90] sm:$0xf]
        %v3110 = vld [vmem:[%s3072 + $0x94] sm:$0xf]
        %v3111 = vld [vmem:[%s3072 + $0x98] sm:$0x1]
        %v3112 = vld [vmem:[%s3072 + $0x9c] sm:$0xf]
        %v3113 = vld [vmem:[%s3072 + $0xa0] sm:$0xf]
        %v3114 = vld [vmem:[%s3072 + $0xa4] sm:$0x1]
        %v3115 = vld [vmem:[%s3072 + $0xa8] sm:$0xf]
        %v3116 = vld [vmem:[%s3072 + $0xac] sm:$0xf]
        %v3117 = vld [vmem:[%s3072 + $0xb0] sm:$0x1]
        %v3118 = vld [vmem:[%s3072 + $0xb4] sm:$0xf]
        %v3119 = vld [vmem:[%s3072 + $0xb8] sm:$0xf]
        %v3120 = vld [vmem:[%s3072 + $0xbc] sm:$0x1]
        %v3169 = vunpack.c.l.b16 %v3073
        %v3170 = vunpack.c.l.b16 %v3074
        %v3171 = vunpack.c.l.b16 %v3075
        %v3172 = vunpack.c.l.b16 %v3076
        %v3173 = vunpack.c.l.b16 %v3077
        %v3174 = vunpack.c.l.b16 %v3078
        %v3175 = vunpack.c.l.b16 %v3079
        %v3176 = vunpack.c.l.b16 %v3080
        %v3177 = vunpack.c.l.b16 %v3081
        %v3178 = vunpack.c.l.b16 %v3082
        %v3179 = vunpack.c.l.b16 %v3083
        %v3180 = vunpack.c.l.b16 %v3084
        %v3181 = vunpack.c.l.b16 %v3085
        %v3182 = vunpack.c.l.b16 %v3086
        %v3183 = vunpack.c.l.b16 %v3087
        %v3184 = vunpack.c.l.b16 %v3088
        %v3185 = vunpack.c.l.b16 %v3089
        %v3186 = vunpack.c.l.b16 %v3090
        %v3187 = vunpack.c.l.b16 %v3091
        %v3188 = vunpack.c.l.b16 %v3092
        %v3189 = vunpack.c.l.b16 %v3093
        %v3190 = vunpack.c.l.b16 %v3094
        %v3191 = vunpack.c.l.b16 %v3095
        %v3192 = vunpack.c.l.b16 %v3096
        %v3193 = vunpack.c.l.b16 %v3097
        %v3194 = vunpack.c.l.b16 %v3098
        %v3195 = vunpack.c.l.b16 %v3099
        %v3196 = vunpack.c.l.b16 %v3100
        %v3197 = vunpack.c.l.b16 %v3101
        %v3198 = vunpack.c.l.b16 %v3102
        %v3199 = vunpack.c.l.b16 %v3103
        %v3200 = vunpack.c.l.b16 %v3104
        %v3201 = vunpack.c.l.b16 %v3105
        %v3202 = vunpack.c.l.b16 %v3106
        %v3203 = vunpack.c.l.b16 %v3107
        %v3204 = vunpack.c.l.b16 %v3108
        %v3205 = vunpack.c.l.b16 %v3109
        %v3206 = vunpack.c.l.b16 %v3110
        %v3207 = vunpack.c.l.b16 %v3111
        %v3208 = vunpack.c.l.b16 %v3112
        %v3209 = vunpack.c.l.b16 %v3113
        %v3210 = vunpack.c.l.b16 %v3114
        %v3211 = vunpack.c.l.b16 %v3115
        %v3212 = vunpack.c.l.b16 %v3116
        %v3213 = vunpack.c.l.b16 %v3117
        %v3214 = vunpack.c.l.b16 %v3118
        %v3215 = vunpack.c.l.b16 %v3119
        %v3216 = vunpack.c.l.b16 %v3120
        %v3217 = vpack.c.b16 %v3170, %v3169
        %v3218 = vpack.c.b16 %v3171, %v3171
        %v3219 = vpack.c.b16 %v3173, %v3172
        %v3220 = vpack.c.b16 %v3174, %v3174
        %v3221 = vpack.c.b16 %v3176, %v3175
        %v3222 = vpack.c.b16 %v3177, %v3177
        %v3223 = vpack.c.b16 %v3179, %v3178
        %v3224 = vpack.c.b16 %v3180, %v3180
        %v3225 = vpack.c.b16 %v3182, %v3181
        %v3226 = vpack.c.b16 %v3183, %v3183
        %v3227 = vpack.c.b16 %v3185, %v3184
        %v3228 = vpack.c.b16 %v3186, %v3186
        %v3229 = vpack.c.b16 %v3188, %v3187
        %v3230 = vpack.c.b16 %v3189, %v3189
        %v3231 = vpack.c.b16 %v3191, %v3190
        %v3232 = vpack.c.b16 %v3192, %v3192
        %v3233 = vpack.c.b16 %v3194, %v3193
        %v3234 = vpack.c.b16 %v3195, %v3195
        %v3235 = vpack.c.b16 %v3197, %v3196
        %v3236 = vpack.c.b16 %v3198, %v3198
        %v3237 = vpack.c.b16 %v3200, %v3199
        %v3238 = vpack.c.b16 %v3201, %v3201
        %v3239 = vpack.c.b16 %v3203, %v3202
        %v3240 = vpack.c.b16 %v3204, %v3204
        %v3241 = vpack.c.b16 %v3206, %v3205
        %v3242 = vpack.c.b16 %v3207, %v3207
        %v3243 = vpack.c.b16 %v3209, %v3208
        %v3244 = vpack.c.b16 %v3210, %v3210
        %v3245 = vpack.c.b16 %v3212, %v3211
        %v3246 = vpack.c.b16 %v3213, %v3213
        %v3247 = vpack.c.b16 %v3215, %v3214
        %v3248 = vpack.c.b16 %v3216, %v3216
        %3249 = vrot.lane.b32.xlu0 %v3217, 8
        %v3250 = vpop.permute.xlu0 %3249
        %3251 = vrot.lane.b32.xlu0 %v3218, 8
        %v3252 = vpop.permute.xlu0 %3251
        %3253 = vrot.lane.b32.xlu0 %v3219, 8
        %v3254 = vpop.permute.xlu0 %3253
        %3255 = vrot.lane.b32.xlu0 %v3220, 8
        %v3256 = vpop.permute.xlu0 %3255
        %3257 = vrot.lane.b32.xlu0 %v3221, 8
        %v3258 = vpop.permute.xlu0 %3257
        %3259 = vrot.lane.b32.xlu0 %v3222, 8
        %v3260 = vpop.permute.xlu0 %3259
        %3261 = vrot.lane.b32.xlu0 %v3223, 8
        %v3262 = vpop.permute.xlu0 %3261
        %3263 = vrot.lane.b32.xlu0 %v3224, 8
        %v3264 = vpop.permute.xlu0 %3263
        %3265 = vrot.lane.b32.xlu0 %v3225, 8
        %v3266 = vpop.permute.xlu0 %3265
        %3267 = vrot.lane.b32.xlu0 %v3226, 8
        %v3268 = vpop.permute.xlu0 %3267
        %3269 = vrot.lane.b32.xlu0 %v3227, 8
        %v3270 = vpop.permute.xlu0 %3269
        %3271 = vrot.lane.b32.xlu0 %v3228, 8
        %v3272 = vpop.permute.xlu0 %3271
        %3273 = vrot.lane.b32.xlu0 %v3229, 8
        %v3274 = vpop.permute.xlu0 %3273
        %3275 = vrot.lane.b32.xlu0 %v3230, 8
        %v3276 = vpop.permute.xlu0 %3275
        %3277 = vrot.lane.b32.xlu0 %v3231, 8
        %v3278 = vpop.permute.xlu0 %3277
        %3279 = vrot.lane.b32.xlu0 %v3232, 8
        %v3280 = vpop.permute.xlu0 %3279
        %3281 = vrot.lane.b32.xlu0 %v3233, 8
        %v3282 = vpop.permute.xlu0 %3281
        %3283 = vrot.lane.b32.xlu0 %v3234, 8
        %v3284 = vpop.permute.xlu0 %3283
        %3285 = vrot.lane.b32.xlu0 %v3235, 8
        %v3286 = vpop.permute.xlu0 %3285
        %3287 = vrot.lane.b32.xlu0 %v3236, 8
        %v3288 = vpop.permute.xlu0 %3287
        %3289 = vrot.lane.b32.xlu0 %v3237, 8
        %v3290 = vpop.permute.xlu0 %3289
        %3291 = vrot.lane.b32.xlu0 %v3238, 8
        %v3292 = vpop.permute.xlu0 %3291
        %3293 = vrot.lane.b32.xlu0 %v3239, 8
        %v3294 = vpop.permute.xlu0 %3293
        %3295 = vrot.lane.b32.xlu0 %v3240, 8
        %v3296 = vpop.permute.xlu0 %3295
        %3297 = vrot.lane.b32.xlu0 %v3241, 8
        %v3298 = vpop.permute.xlu0 %3297
        %3299 = vrot.lane.b32.xlu0 %v3242, 8
        %v3300 = vpop.permute.xlu0 %3299
        %3301 = vrot.lane.b32.xlu0 %v3243, 8
        %v3302 = vpop.permute.xlu0 %3301
        %3303 = vrot.lane.b32.xlu0 %v3244, 8
        %v3304 = vpop.permute.xlu0 %3303
        %3305 = vrot.lane.b32.xlu0 %v3245, 8
        %v3306 = vpop.permute.xlu0 %3305
        %3307 = vrot.lane.b32.xlu0 %v3246, 8
        %v3308 = vpop.permute.xlu0 %3307
        %3309 = vrot.lane.b32.xlu0 %v3247, 8
        %v3310 = vpop.permute.xlu0 %3309
        %3311 = vrot.lane.b32.xlu0 %v3248, 8
        %v3312 = vpop.permute.xlu0 %3311
        %v3314 = vshrl.u32 %v3217, 16
        %v3316 = vrot.slane %v3314, 7
        %v3317 = vshll.u32 %v3217, 16
        %v3319 = vor.u32 %v3316, %v3317
        %v3321 = vshrl.u32 %v3219, 16
        %v3323 = vrot.slane %v3321, 7
        %v3324 = vshll.u32 %v3219, 16
        %v3326 = vor.u32 %v3323, %v3324
        %v3328 = vshrl.u32 %v3221, 16
        %v3330 = vrot.slane %v3328, 7
        %v3331 = vshll.u32 %v3221, 16
        %v3333 = vor.u32 %v3330, %v3331
        %v3335 = vshrl.u32 %v3223, 16
        %v3337 = vrot.slane %v3335, 7
        %v3338 = vshll.u32 %v3223, 16
        %v3340 = vor.u32 %v3337, %v3338
        %v3342 = vshrl.u32 %v3225, 16
        %v3344 = vrot.slane %v3342, 7
        %v3345 = vshll.u32 %v3225, 16
        %v3347 = vor.u32 %v3344, %v3345
        %v3349 = vshrl.u32 %v3227, 16
        %v3351 = vrot.slane %v3349, 7
        %v3352 = vshll.u32 %v3227, 16
        %v3354 = vor.u32 %v3351, %v3352
        %v3356 = vshrl.u32 %v3229, 16
        %v3358 = vrot.slane %v3356, 7
        %v3359 = vshll.u32 %v3229, 16
        %v3361 = vor.u32 %v3358, %v3359
        %v3363 = vshrl.u32 %v3231, 16
        %v3365 = vrot.slane %v3363, 7
        %v3366 = vshll.u32 %v3231, 16
        %v3368 = vor.u32 %v3365, %v3366
        %v3370 = vshrl.u32 %v3233, 16
        %v3372 = vrot.slane %v3370, 7
        %v3373 = vshll.u32 %v3233, 16
        %v3375 = vor.u32 %v3372, %v3373
        %v3377 = vshrl.u32 %v3235, 16
        %v3379 = vrot.slane %v3377, 7
        %v3380 = vshll.u32 %v3235, 16
        %v3382 = vor.u32 %v3379, %v3380
        %v3384 = vshrl.u32 %v3237, 16
        %v3386 = vrot.slane %v3384, 7
        %v3387 = vshll.u32 %v3237, 16
        %v3389 = vor.u32 %v3386, %v3387
        %v3391 = vshrl.u32 %v3239, 16
        %v3393 = vrot.slane %v3391, 7
        %v3394 = vshll.u32 %v3239, 16
        %v3396 = vor.u32 %v3393, %v3394
        %v3398 = vshrl.u32 %v3241, 16
        %v3400 = vrot.slane %v3398, 7
        %v3401 = vshll.u32 %v3241, 16
        %v3403 = vor.u32 %v3400, %v3401
        %v3405 = vshrl.u32 %v3243, 16
        %v3407 = vrot.slane %v3405, 7
        %v3408 = vshll.u32 %v3243, 16
        %v3410 = vor.u32 %v3407, %v3408
        %v3412 = vshrl.u32 %v3245, 16
        %v3414 = vrot.slane %v3412, 7
        %v3415 = vshll.u32 %v3245, 16
        %v3417 = vor.u32 %v3414, %v3415
        %v3419 = vshrl.u32 %v3247, 16
        %v3421 = vrot.slane %v3419, 7
        %v3422 = vshll.u32 %v3247, 16
        %v3424 = vor.u32 %v3421, %v3422
        %3425 = vrot.lane.b32.xlu0 %v3319, 12
        %v3426 = vpop.permute.xlu0 %3425
        %3427 = vrot.lane.b32.xlu0 %v3316, 12
        %v3428 = vpop.permute.xlu0 %3427
        %3429 = vrot.lane.b32.xlu0 %v3326, 12
        %v3430 = vpop.permute.xlu0 %3429
        %3431 = vrot.lane.b32.xlu0 %v3323, 12
        %v3432 = vpop.permute.xlu0 %3431
        %3433 = vrot.lane.b32.xlu0 %v3333, 12
        %v3434 = vpop.permute.xlu0 %3433
        %3435 = vrot.lane.b32.xlu0 %v3330, 12
        %v3436 = vpop.permute.xlu0 %3435
        %3437 = vrot.lane.b32.xlu0 %v3340, 12
        %v3438 = vpop.permute.xlu0 %3437
        %3439 = vrot.lane.b32.xlu0 %v3337, 12
        %v3440 = vpop.permute.xlu0 %3439
        %3441 = vrot.lane.b32.xlu0 %v3347, 12
        %v3442 = vpop.permute.xlu0 %3441
        %3443 = vrot.lane.b32.xlu0 %v3344, 12
        %v3444 = vpop.permute.xlu0 %3443
        %3445 = vrot.lane.b32.xlu0 %v3354, 12
        %v3446 = vpop.permute.xlu0 %3445
        %3447 = vrot.lane.b32.xlu0 %v3351, 12
        %v3448 = vpop.permute.xlu0 %3447
        %3449 = vrot.lane.b32.xlu0 %v3361, 12
        %v3450 = vpop.permute.xlu0 %3449
        %3451 = vrot.lane.b32.xlu0 %v3358, 12
        %v3452 = vpop.permute.xlu0 %3451
        %3453 = vrot.lane.b32.xlu0 %v3368, 12
        %v3454 = vpop.permute.xlu0 %3453
        %3455 = vrot.lane.b32.xlu0 %v3365, 12
        %v3456 = vpop.permute.xlu0 %3455
        %3457 = vrot.lane.b32.xlu0 %v3375, 12
        %v3458 = vpop.permute.xlu0 %3457
        %3459 = vrot.lane.b32.xlu0 %v3372, 12
        %v3460 = vpop.permute.xlu0 %3459
        %3461 = vrot.lane.b32.xlu0 %v3382, 12
        %v3462 = vpop.permute.xlu0 %3461
        %3463 = vrot.lane.b32.xlu0 %v3379, 12
        %v3464 = vpop.permute.xlu0 %3463
        %3465 = vrot.lane.b32.xlu0 %v3389, 12
        %v3466 = vpop.permute.xlu0 %3465
        %3467 = vrot.lane.b32.xlu0 %v3386, 12
        %v3468 = vpop.permute.xlu0 %3467
        %3469 = vrot.lane.b32.xlu0 %v3396, 12
        %v3470 = vpop.permute.xlu0 %3469
        %3471 = vrot.lane.b32.xlu0 %v3393, 12
        %v3472 = vpop.permute.xlu0 %3471
        %3473 = vrot.lane.b32.xlu0 %v3403, 12
        %v3474 = vpop.permute.xlu0 %3473
        %3475 = vrot.lane.b32.xlu0 %v3400, 12
        %v3476 = vpop.permute.xlu0 %3475
        %3477 = vrot.lane.b32.xlu0 %v3410, 12
        %v3478 = vpop.permute.xlu0 %3477
        %3479 = vrot.lane.b32.xlu0 %v3407, 12
        %v3480 = vpop.permute.xlu0 %3479
        %3481 = vrot.lane.b32.xlu0 %v3417, 12
        %v3482 = vpop.permute.xlu0 %3481
        %3483 = vrot.lane.b32.xlu0 %v3414, 12
        %v3484 = vpop.permute.xlu0 %3483
        %3485 = vrot.lane.b32.xlu0 %v3424, 12
        %v3486 = vpop.permute.xlu0 %3485
        %3487 = vrot.lane.b32.xlu0 %v3421, 12
        %v3488 = vpop.permute.xlu0 %3487
        %v3490 = vsel %vm993, %v914, %v3250
        %v3492 = vsel %vm993, %v917, %v3252
        %v3494 = vsel %vm993, %v919, %v3254
        %v3496 = vsel %vm993, %v922, %v3256
        %v3498 = vsel %vm993, %v924, %v3258
        %v3500 = vsel %vm993, %v927, %v3260
        %v3502 = vsel %vm993, %v929, %v3262
        %v3504 = vsel %vm993, %v932, %v3264
        %v3506 = vsel %vm993, %v934, %v3266
        %v3508 = vsel %vm993, %v937, %v3268
        %v3510 = vsel %vm993, %v939, %v3270
        %v3512 = vsel %vm993, %v942, %v3272
        %v3514 = vsel %vm993, %v944, %v3274
        %v3516 = vsel %vm993, %v947, %v3276
        %v3518 = vsel %vm993, %v949, %v3278
        %v3520 = vsel %vm993, %v952, %v3280
        %v3522 = vsel %vm993, %v954, %v3282
        %v3524 = vsel %vm993, %v957, %v3284
        %v3526 = vsel %vm993, %v959, %v3286
        %v3528 = vsel %vm993, %v962, %v3288
        %v3530 = vsel %vm993, %v964, %v3290
        %v3532 = vsel %vm993, %v967, %v3292
        %v3534 = vsel %vm993, %v969, %v3294
        %v3536 = vsel %vm993, %v972, %v3296
        %v3538 = vsel %vm993, %v974, %v3298
        %v3540 = vsel %vm993, %v977, %v3300
        %v3542 = vsel %vm993, %v979, %v3302
        %v3544 = vsel %vm993, %v982, %v3304
        %v3546 = vsel %vm993, %v984, %v3306
        %v3548 = vsel %vm993, %v987, %v3308
        %v3550 = vsel %vm993, %v989, %v3310
        %v3552 = vsel %vm993, %v992, %v3312
        %v3554 = vsel %vm1058, %v3490, %v3426
        %v3556 = vsel %vm1058, %v3492, %v3428
        %v3558 = vsel %vm1058, %v3494, %v3430
        %v3560 = vsel %vm1058, %v3496, %v3432
        %v3562 = vsel %vm1058, %v3498, %v3434
        %v3564 = vsel %vm1058, %v3500, %v3436
        %v3566 = vsel %vm1058, %v3502, %v3438
        %v3568 = vsel %vm1058, %v3504, %v3440
        %v3570 = vsel %vm1058, %v3506, %v3442
        %v3572 = vsel %vm1058, %v3508, %v3444
        %v3574 = vsel %vm1058, %v3510, %v3446
        %v3576 = vsel %vm1058, %v3512, %v3448
        %v3578 = vsel %vm1058, %v3514, %v3450
        %v3580 = vsel %vm1058, %v3516, %v3452
        %v3582 = vsel %vm1058, %v3518, %v3454
        %v3584 = vsel %vm1058, %v3520, %v3456
        %v3586 = vsel %vm1058, %v3522, %v3458
        %v3588 = vsel %vm1058, %v3524, %v3460
        %v3590 = vsel %vm1058, %v3526, %v3462
        %v3592 = vsel %vm1058, %v3528, %v3464
        %v3594 = vsel %vm1058, %v3530, %v3466
        %v3596 = vsel %vm1058, %v3532, %v3468
        %v3598 = vsel %vm1058, %v3534, %v3470
        %v3600 = vsel %vm1058, %v3536, %v3472
        %v3602 = vsel %vm1058, %v3538, %v3474
        %v3604 = vsel %vm1058, %v3540, %v3476
        %v3606 = vsel %vm1058, %v3542, %v3478
        %v3608 = vsel %vm1058, %v3544, %v3480
        %v3610 = vsel %vm1058, %v3546, %v3482
        %v3612 = vsel %vm1058, %v3548, %v3484
        %v3614 = vsel %vm1058, %v3550, %v3486
        %v3616 = vsel %vm1058, %v3552, %v3488
        %v3617 = vshrl.u32 %v3554, 16
        %v3619 = vshll.u32 %v3554, 16
        %v3621 = vrot.slane %v3619, 1
        %v3622 = vor.u32 %v3617, %v3621
        %v3623 = vshll.u32 %v3556, 16
        %v3625 = vrot.slane %v3623, 1
        %v3626 = vsel %vm1123, %v3622, %v3625
        %v3627 = vshrl.u32 %v3558, 16
        %v3629 = vshll.u32 %v3558, 16
        %v3631 = vrot.slane %v3629, 1
        %v3632 = vor.u32 %v3627, %v3631
        %v3633 = vshll.u32 %v3560, 16
        %v3635 = vrot.slane %v3633, 1
        %v3636 = vsel %vm1123, %v3632, %v3635
        %v3637 = vshrl.u32 %v3562, 16
        %v3639 = vshll.u32 %v3562, 16
        %v3641 = vrot.slane %v3639, 1
        %v3642 = vor.u32 %v3637, %v3641
        %v3643 = vshll.u32 %v3564, 16
        %v3645 = vrot.slane %v3643, 1
        %v3646 = vsel %vm1123, %v3642, %v3645
        %v3647 = vshrl.u32 %v3566, 16
        %v3649 = vshll.u32 %v3566, 16
        %v3651 = vrot.slane %v3649, 1
        %v3652 = vor.u32 %v3647, %v3651
        %v3653 = vshll.u32 %v3568, 16
        %v3655 = vrot.slane %v3653, 1
        %v3656 = vsel %vm1123, %v3652, %v3655
        %v3657 = vshrl.u32 %v3570, 16
        %v3659 = vshll.u32 %v3570, 16
        %v3661 = vrot.slane %v3659, 1
        %v3662 = vor.u32 %v3657, %v3661
        %v3663 = vshll.u32 %v3572, 16
        %v3665 = vrot.slane %v3663, 1
        %v3666 = vsel %vm1123, %v3662, %v3665
        %v3667 = vshrl.u32 %v3574, 16
        %v3669 = vshll.u32 %v3574, 16
        %v3671 = vrot.slane %v3669, 1
        %v3672 = vor.u32 %v3667, %v3671
        %v3673 = vshll.u32 %v3576, 16
        %v3675 = vrot.slane %v3673, 1
        %v3676 = vsel %vm1123, %v3672, %v3675
        %v3677 = vshrl.u32 %v3578, 16
        %v3679 = vshll.u32 %v3578, 16
        %v3681 = vrot.slane %v3679, 1
        %v3682 = vor.u32 %v3677, %v3681
        %v3683 = vshll.u32 %v3580, 16
        %v3685 = vrot.slane %v3683, 1
        %v3686 = vsel %vm1123, %v3682, %v3685
        %v3687 = vshrl.u32 %v3582, 16
        %v3689 = vshll.u32 %v3582, 16
        %v3691 = vrot.slane %v3689, 1
        %v3692 = vor.u32 %v3687, %v3691
        %v3693 = vshll.u32 %v3584, 16
        %v3695 = vrot.slane %v3693, 1
        %v3696 = vsel %vm1123, %v3692, %v3695
        %v3697 = vshrl.u32 %v3586, 16
        %v3699 = vshll.u32 %v3586, 16
        %v3701 = vrot.slane %v3699, 1
        %v3702 = vor.u32 %v3697, %v3701
        %v3703 = vshll.u32 %v3588, 16
        %v3705 = vrot.slane %v3703, 1
        %v3706 = vsel %vm1123, %v3702, %v3705
        %v3707 = vshrl.u32 %v3590, 16
        %v3709 = vshll.u32 %v3590, 16
        %v3711 = vrot.slane %v3709, 1
        %v3712 = vor.u32 %v3707, %v3711
        %v3713 = vshll.u32 %v3592, 16
        %v3715 = vrot.slane %v3713, 1
        %v3716 = vsel %vm1123, %v3712, %v3715
        %v3717 = vshrl.u32 %v3594, 16
        %v3719 = vshll.u32 %v3594, 16
        %v3721 = vrot.slane %v3719, 1
        %v3722 = vor.u32 %v3717, %v3721
        %v3723 = vshll.u32 %v3596, 16
        %v3725 = vrot.slane %v3723, 1
        %v3726 = vsel %vm1123, %v3722, %v3725
        %v3727 = vshrl.u32 %v3598, 16
        %v3729 = vshll.u32 %v3598, 16
        %v3731 = vrot.slane %v3729, 1
        %v3732 = vor.u32 %v3727, %v3731
        %v3733 = vshll.u32 %v3600, 16
        %v3735 = vrot.slane %v3733, 1
        %v3736 = vsel %vm1123, %v3732, %v3735
        %v3737 = vshrl.u32 %v3602, 16
        %v3739 = vshll.u32 %v3602, 16
        %v3741 = vrot.slane %v3739, 1
        %v3742 = vor.u32 %v3737, %v3741
        %v3743 = vshll.u32 %v3604, 16
        %v3745 = vrot.slane %v3743, 1
        %v3746 = vsel %vm1123, %v3742, %v3745
        %v3747 = vshrl.u32 %v3606, 16
        %v3749 = vshll.u32 %v3606, 16
        %v3751 = vrot.slane %v3749, 1
        %v3752 = vor.u32 %v3747, %v3751
        %v3753 = vshll.u32 %v3608, 16
        %v3755 = vrot.slane %v3753, 1
        %v3756 = vsel %vm1123, %v3752, %v3755
        %v3757 = vshrl.u32 %v3610, 16
        %v3759 = vshll.u32 %v3610, 16
        %v3761 = vrot.slane %v3759, 1
        %v3762 = vor.u32 %v3757, %v3761
        %v3763 = vshll.u32 %v3612, 16
        %v3765 = vrot.slane %v3763, 1
        %v3766 = vsel %vm1123, %v3762, %v3765
        %v3767 = vshrl.u32 %v3614, 16
        %v3769 = vshll.u32 %v3614, 16
        %v3771 = vrot.slane %v3769, 1
        %v3772 = vor.u32 %v3767, %v3771
        %v3773 = vshll.u32 %v3616, 16
        %v3775 = vrot.slane %v3773, 1
        %v3776 = vsel %vm1123, %v3772, %v3775
        %s3777 = scalar_lea.vmem %s1, 16
        %v3778 = vld [vmem:[%s3777] sm:$0xf]
        %v3779 = vld [vmem:[%s3777 + $0x4] sm:$0xf]
        %v3782 = vunpack.c.l.b16 %v3778
        %v3783 = vunpack.c.l.b16 %v3779
        %v3784 = vpack.c.b16 %v3783, %v3782
        %v3787 = vsel %vm1292, %v3626, 0
        %v3790 = vsel %vm1292, %v3636, 0
        %v3793 = vsel %vm1292, %v3646, 0
        %v3796 = vsel %vm1292, %v3656, 0
        %v3799 = vsel %vm1292, %v3666, 0
        %v3802 = vsel %vm1292, %v3676, 0
        %v3805 = vsel %vm1292, %v3686, 0
        %v3808 = vsel %vm1292, %v3696, 0
        %v3811 = vsel %vm1292, %v3706, 0
        %v3814 = vsel %vm1292, %v3716, 0
        %v3817 = vsel %vm1292, %v3726, 0
        %v3820 = vsel %vm1292, %v3736, 0
        %v3823 = vsel %vm1292, %v3746, 0
        %v3826 = vsel %vm1292, %v3756, 0
        %v3829 = vsel %vm1292, %v3766, 0
        %v3832 = vsel %vm1292, %v3776, 0
        %3834 = vmatprep.subr.bf16.mxu0 0
        %3835 = vmatpush1.bf16.msra.mxu0 %v3784
        %3836 = vmatprep.subr.bf16.mxu0 0
        %3837 = vmatpush1.bf16.msra.mxu0 0
        %3838 = vmatprep.subr.bf16.mxu0 0
        %3839 = vmatpush1.bf16.msra.mxu0 0
        %3840 = vmatprep.subr.bf16.mxu0 0
        %3841 = vmatpush1.bf16.msra.mxu0 0
        %3842 = vmatprep.subr.bf16.mxu0 0
        %3843 = vmatpush1.bf16.msra.mxu0 0
        %3844 = vmatprep.subr.bf16.mxu0 0
        %3845 = vmatpush1.bf16.msra.mxu0 0
        %3846 = vmatprep.subr.bf16.mxu0 0
        %3847 = vmatpush1.bf16.msra.mxu0 0
        %3848 = vmatprep.subr.bf16.mxu0 0
        %3849 = vmatpush1.bf16.msra.mxu0 0
        %3850 = vmatprep.subr.bf16.mxu0 0
        %3851 = vmatpush1.bf16.msra.mxu0 0
        %3852 = vmatprep.subr.bf16.mxu0 0
        %3853 = vmatpush1.bf16.msra.mxu0 0
        %3854 = vmatprep.subr.bf16.mxu0 0
        %3855 = vmatpush1.bf16.msra.mxu0 0
        %3856 = vmatprep.subr.bf16.mxu0 0
        %3857 = vmatpush1.bf16.msra.mxu0 0
        %3858 = vmatprep.subr.bf16.mxu0 0
        %3859 = vmatpush1.bf16.msra.mxu0 0
        %3860 = vmatprep.subr.bf16.mxu0 0
        %3861 = vmatpush1.bf16.msra.mxu0 0
        %3862 = vmatprep.subr.bf16.mxu0 0
        %3863 = vmatpush1.bf16.msra.mxu0 0
        %3864 = vmatprep.subr.bf16.mxu0 0
        %3865 = vmatpush1.bf16.msra.mxu0 0
        %3866 = vmatprep.mubr.bf16.mxu0 0
        %3867 = vmatmul.mubr.bf16.gmra.mrb[0].mxu0 %v3787
        %v3868 = vpop.f32.mrb[0].mxu0
        %v3869 = vadd.f32 0.0, %v3868
        %v3870 = vpop.f32.mrb[0].mxu0
        %v3871 = vpop.f32.mrb[0].mxu0
        %v3872 = vadd.f32 0.0, %v3871
        %v3873 = vpop.f32.mrb[0].mxu0
        %3874 = vmatprep.mubr.bf16.mxu0 0
        %3875 = vmatmul.mubr.bf16.gmra.mrb[0].mxu0 %v3790
        %v3876 = vpop.f32.mrb[0].mxu0
        %v3877 = vadd.f32 0.0, %v3876
        %v3878 = vpop.f32.mrb[0].mxu0
        %v3879 = vpop.f32.mrb[0].mxu0
        %v3880 = vadd.f32 0.0, %v3879
        %v3881 = vpop.f32.mrb[0].mxu0
        %3882 = vmatprep.mubr.bf16.mxu0 0
        %3883 = vmatmul.mubr.bf16.gmra.mrb[0].mxu0 %v3793
        %v3884 = vpop.f32.mrb[0].mxu0
        %v3885 = vadd.f32 0.0, %v3884
        %v3886 = vpop.f32.mrb[0].mxu0
        %v3887 = vpop.f32.mrb[0].mxu0
        %v3888 = vadd.f32 0.0, %v3887
        %v3889 = vpop.f32.mrb[0].mxu0
        %3890 = vmatprep.mubr.bf16.mxu0 0
        %3891 = vmatmul.mubr.bf16.gmra.mrb[0].mxu0 %v3796
        %v3892 = vpop.f32.mrb[0].mxu0
        %v3893 = vadd.f32 0.0, %v3892
        %v3894 = vpop.f32.mrb[0].mxu0
        %v3895 = vpop.f32.mrb[0].mxu0
        %v3896 = vadd.f32 0.0, %v3895
        %v3897 = vpop.f32.mrb[0].mxu0
        %3898 = vmatprep.mubr.bf16.mxu0 0
        %3899 = vmatmul.mubr.bf16.gmra.mrb[0].mxu0 %v3799
        %v3900 = vpop.f32.mrb[0].mxu0
        %v3901 = vadd.f32 0.0, %v3900
        %v3902 = vpop.f32.mrb[0].mxu0
        %v3903 = vpop.f32.mrb[0].mxu0
        %v3904 = vadd.f32 0.0, %v3903
        %v3905 = vpop.f32.mrb[0].mxu0
        %3906 = vmatprep.mubr.bf16.mxu0 0
        %3907 = vmatmul.mubr.bf16.gmra.mrb[0].mxu0 %v3802
        %v3908 = vpop.f32.mrb[0].mxu0
        %v3909 = vadd.f32 0.0, %v3908
        %v3910 = vpop.f32.mrb[0].mxu0
        %v3911 = vpop.f32.mrb[0].mxu0
        %v3912 = vadd.f32 0.0, %v3911
        %v3913 = vpop.f32.mrb[0].mxu0
        %3914 = vmatprep.mubr.bf16.mxu0 0
        %3915 = vmatmul.mubr.bf16.gmra.mrb[0].mxu0 %v3805
        %v3916 = vpop.f32.mrb[0].mxu0
        %v3917 = vadd.f32 0.0, %v3916
        %v3918 = vpop.f32.mrb[0].mxu0
        %v3919 = vpop.f32.mrb[0].mxu0
        %v3920 = vadd.f32 0.0, %v3919
        %v3921 = vpop.f32.mrb[0].mxu0
        %3922 = vmatprep.mubr.bf16.mxu0 0
        %3923 = vmatmul.mubr.bf16.gmra.mrb[0].mxu0 %v3808
        %v3924 = vpop.f32.mrb[0].mxu0
        %v3925 = vadd.f32 0.0, %v3924
        %v3926 = vpop.f32.mrb[0].mxu0
        %v3927 = vpop.f32.mrb[0].mxu0
        %v3928 = vadd.f32 0.0, %v3927
        %v3929 = vpop.f32.mrb[0].mxu0
        %3930 = vmatprep.mubr.bf16.mxu0 0
        %3931 = vmatmul.mubr.bf16.gmra.mrb[0].mxu0 %v3811
        %v3932 = vpop.f32.mrb[0].mxu0
        %v3933 = vadd.f32 0.0, %v3932
        %v3934 = vpop.f32.mrb[0].mxu0
        %v3935 = vpop.f32.mrb[0].mxu0
        %v3936 = vadd.f32 0.0, %v3935
        %v3937 = vpop.f32.mrb[0].mxu0
        %3938 = vmatprep.mubr.bf16.mxu0 0
        %3939 = vmatmul.mubr.bf16.gmra.mrb[0].mxu0 %v3814
        %v3940 = vpop.f32.mrb[0].mxu0
        %v3941 = vadd.f32 0.0, %v3940
        %v3942 = vpop.f32.mrb[0].mxu0
        %v3943 = vpop.f32.mrb[0].mxu0
        %v3944 = vadd.f32 0.0, %v3943
        %v3945 = vpop.f32.mrb[0].mxu0
        %3946 = vmatprep.mubr.bf16.mxu0 0
        %3947 = vmatmul.mubr.bf16.gmra.mrb[0].mxu0 %v3817
        %v3948 = vpop.f32.mrb[0].mxu0
        %v3949 = vadd.f32 0.0, %v3948
        %v3950 = vpop.f32.mrb[0].mxu0
        %v3951 = vpop.f32.mrb[0].mxu0
        %v3952 = vadd.f32 0.0, %v3951
        %v3953 = vpop.f32.mrb[0].mxu0
        %3954 = vmatprep.mubr.bf16.mxu0 0
        %3955 = vmatmul.mubr.bf16.gmra.mrb[0].mxu0 %v3820
        %v3956 = vpop.f32.mrb[0].mxu0
        %v3957 = vadd.f32 0.0, %v3956
        %v3958 = vpop.f32.mrb[0].mxu0
        %v3959 = vpop.f32.mrb[0].mxu0
        %v3960 = vadd.f32 0.0, %v3959
        %v3961 = vpop.f32.mrb[0].mxu0
        %3962 = vmatprep.mubr.bf16.mxu0 0
        %3963 = vmatmul.mubr.bf16.gmra.mrb[0].mxu0 %v3823
        %v3964 = vpop.f32.mrb[0].mxu0
        %v3965 = vadd.f32 0.0, %v3964
        %v3966 = vpop.f32.mrb[0].mxu0
        %v3967 = vpop.f32.mrb[0].mxu0
        %v3968 = vadd.f32 0.0, %v3967
        %v3969 = vpop.f32.mrb[0].mxu0
        %3970 = vmatprep.mubr.bf16.mxu0 0
        %3971 = vmatmul.mubr.bf16.gmra.mrb[0].mxu0 %v3826
        %v3972 = vpop.f32.mrb[0].mxu0
        %v3973 = vadd.f32 0.0, %v3972
        %v3974 = vpop.f32.mrb[0].mxu0
        %v3975 = vpop.f32.mrb[0].mxu0
        %v3976 = vadd.f32 0.0, %v3975
        %v3977 = vpop.f32.mrb[0].mxu0
        %3978 = vmatprep.mubr.bf16.mxu0 0
        %3979 = vmatmul.mubr.bf16.gmra.mrb[0].mxu0 %v3829
        %v3980 = vpop.f32.mrb[0].mxu0
        %v3981 = vadd.f32 0.0, %v3980
        %v3982 = vpop.f32.mrb[0].mxu0
        %v3983 = vpop.f32.mrb[0].mxu0
        %v3984 = vadd.f32 0.0, %v3983
        %v3985 = vpop.f32.mrb[0].mxu0
        %3986 = vmatprep.mubr.bf16.mxu0 0
        %3987 = vmatmul.mubr.bf16.gmra.mrb[0].mxu0 %v3832
        %v3988 = vpop.f32.mrb[0].mxu0
        %v3989 = vadd.f32 0.0, %v3988
        %v3990 = vpop.f32.mrb[0].mxu0
        %v3991 = vpop.f32.mrb[0].mxu0
        %v3992 = vadd.f32 0.0, %v3991
        %v3993 = vpop.f32.mrb[0].mxu0
        %3994 = vdwg.mxu0
        %v3995 = vsel %vm993, %v3869, 0.0
        %v3996 = vsel %vm993, %v3872, 0.0
        %v3997 = vadd.f32 %v3995, %v3996
        %v3998 = vsel %vm993, %v3877, 0.0
        %v3999 = vadd.f32 %v3997, %v3998
        %v4000 = vsel %vm993, %v3880, 0.0
        %v4001 = vadd.f32 %v3999, %v4000
        %v4002 = vsel %vm993, %v3885, 0.0
        %v4003 = vadd.f32 %v4001, %v4002
        %v4004 = vsel %vm993, %v3888, 0.0
        %v4005 = vadd.f32 %v4003, %v4004
        %v4006 = vsel %vm993, %v3893, 0.0
        %v4007 = vadd.f32 %v4005, %v4006
        %v4008 = vsel %vm993, %v3896, 0.0
        %v4009 = vadd.f32 %v4007, %v4008
        %v4010 = vsel %vm993, %v3901, 0.0
        %v4011 = vadd.f32 %v4009, %v4010
        %v4012 = vsel %vm993, %v3904, 0.0
        %v4013 = vadd.f32 %v4011, %v4012
        %v4014 = vsel %vm993, %v3909, 0.0
        %v4015 = vadd.f32 %v4013, %v4014
        %v4016 = vsel %vm993, %v3912, 0.0
        %v4017 = vadd.f32 %v4015, %v4016
        %v4018 = vsel %vm993, %v3917, 0.0
        %v4019 = vadd.f32 %v4017, %v4018
        %v4020 = vsel %vm993, %v3920, 0.0
        %v4021 = vadd.f32 %v4019, %v4020
        %v4022 = vsel %vm993, %v3925, 0.0
        %v4023 = vadd.f32 %v4021, %v4022
        %v4024 = vsel %vm993, %v3928, 0.0
        %v4025 = vadd.f32 %v4023, %v4024
        %v4026 = vsel %vm993, %v3933, 0.0
        %v4027 = vadd.f32 %v4025, %v4026
        %v4028 = vsel %vm993, %v3936, 0.0
        %v4029 = vadd.f32 %v4027, %v4028
        %v4030 = vsel %vm993, %v3941, 0.0
        %v4031 = vadd.f32 %v4029, %v4030
        %v4032 = vsel %vm993, %v3944, 0.0
        %v4033 = vadd.f32 %v4031, %v4032
        %v4034 = vsel %vm993, %v3949, 0.0
        %v4035 = vadd.f32 %v4033, %v4034
        %v4036 = vsel %vm993, %v3952, 0.0
        %v4037 = vadd.f32 %v4035, %v4036
        %v4038 = vsel %vm993, %v3957, 0.0
        %v4039 = vadd.f32 %v4037, %v4038
        %v4040 = vsel %vm993, %v3960, 0.0
        %v4041 = vadd.f32 %v4039, %v4040
        %v4042 = vsel %vm993, %v3965, 0.0
        %v4043 = vadd.f32 %v4041, %v4042
        %v4044 = vsel %vm993, %v3968, 0.0
        %v4045 = vadd.f32 %v4043, %v4044
        %v4046 = vsel %vm993, %v3973, 0.0
        %v4047 = vadd.f32 %v4045, %v4046
        %v4048 = vsel %vm993, %v3976, 0.0
        %v4049 = vadd.f32 %v4047, %v4048
        %v4050 = vsel %vm993, %v3981, 0.0
        %v4051 = vadd.f32 %v4049, %v4050
        %v4052 = vsel %vm993, %v3984, 0.0
        %v4053 = vadd.f32 %v4051, %v4052
        %v4054 = vsel %vm993, %v3989, 0.0
        %v4055 = vadd.f32 %v4053, %v4054
        %v4056 = vsel %vm993, %v3992, 0.0
        %v4057 = vadd.f32 %v4055, %v4056
        %v4058 = vrot.slane %v4057, 4
        %v4059 = vadd.f32 %v4057, %v4058
        %v4060 = vrot.slane %v4059, 2
        %v4061 = vadd.f32 %v4059, %v4060
        %v4062 = vrot.slane %v4061, 1
        %v4063 = vadd.f32 %v4061, %v4062
        %v4064 = vadd.f32 %v2969, %v4063
        %v4065 = vmul.f32 %v3869, %v3869
        %v4066 = vmul.f32 %v3872, %v3872
        %v4067 = vmul.f32 %v3877, %v3877
        %v4068 = vmul.f32 %v3880, %v3880
        %v4069 = vmul.f32 %v3885, %v3885
        %v4070 = vmul.f32 %v3888, %v3888
        %v4071 = vmul.f32 %v3893, %v3893
        %v4072 = vmul.f32 %v3896, %v3896
        %v4073 = vmul.f32 %v3901, %v3901
        %v4074 = vmul.f32 %v3904, %v3904
        %v4075 = vmul.f32 %v3909, %v3909
        %v4076 = vmul.f32 %v3912, %v3912
        %v4077 = vmul.f32 %v3917, %v3917
        %v4078 = vmul.f32 %v3920, %v3920
        %v4079 = vmul.f32 %v3925, %v3925
        %v4080 = vmul.f32 %v3928, %v3928
        %v4081 = vmul.f32 %v3933, %v3933
        %v4082 = vmul.f32 %v3936, %v3936
        %v4083 = vmul.f32 %v3941, %v3941
        %v4084 = vmul.f32 %v3944, %v3944
        %v4085 = vmul.f32 %v3949, %v3949
        %v4086 = vmul.f32 %v3952, %v3952
        %v4087 = vmul.f32 %v3957, %v3957
        %v4088 = vmul.f32 %v3960, %v3960
        %v4089 = vmul.f32 %v3965, %v3965
        %v4090 = vmul.f32 %v3968, %v3968
        %v4091 = vmul.f32 %v3973, %v3973
        %v4092 = vmul.f32 %v3976, %v3976
        %v4093 = vmul.f32 %v3981, %v3981
        %v4094 = vmul.f32 %v3984, %v3984
        %v4095 = vmul.f32 %v3989, %v3989
        %v4096 = vmul.f32 %v3992, %v3992
        %v4097 = vsel %vm993, %v4065, 0.0
        %v4098 = vsel %vm993, %v4066, 0.0
        %v4099 = vadd.f32 %v4097, %v4098
        %v4100 = vsel %vm993, %v4067, 0.0
        %v4101 = vadd.f32 %v4099, %v4100
        %v4102 = vsel %vm993, %v4068, 0.0
        %v4103 = vadd.f32 %v4101, %v4102
        %v4104 = vsel %vm993, %v4069, 0.0
        %v4105 = vadd.f32 %v4103, %v4104
        %v4106 = vsel %vm993, %v4070, 0.0
        %v4107 = vadd.f32 %v4105, %v4106
        %v4108 = vsel %vm993, %v4071, 0.0
        %v4109 = vadd.f32 %v4107, %v4108
        %v4110 = vsel %vm993, %v4072, 0.0
        %v4111 = vadd.f32 %v4109, %v4110
        %v4112 = vsel %vm993, %v4073, 0.0
        %v4113 = vadd.f32 %v4111, %v4112
        %v4114 = vsel %vm993, %v4074, 0.0
        %v4115 = vadd.f32 %v4113, %v4114
        %v4116 = vsel %vm993, %v4075, 0.0
        %v4117 = vadd.f32 %v4115, %v4116
        %v4118 = vsel %vm993, %v4076, 0.0
        %v4119 = vadd.f32 %v4117, %v4118
        %v4120 = vsel %vm993, %v4077, 0.0
        %v4121 = vadd.f32 %v4119, %v4120
        %v4122 = vsel %vm993, %v4078, 0.0
        %v4123 = vadd.f32 %v4121, %v4122
        %v4124 = vsel %vm993, %v4079, 0.0
        %v4125 = vadd.f32 %v4123, %v4124
        %v4126 = vsel %vm993, %v4080, 0.0
        %v4127 = vadd.f32 %v4125, %v4126
        %v4128 = vsel %vm993, %v4081, 0.0
        %v4129 = vadd.f32 %v4127, %v4128
        %v4130 = vsel %vm993, %v4082, 0.0
        %v4131 = vadd.f32 %v4129, %v4130
        %v4132 = vsel %vm993, %v4083, 0.0
        %v4133 = vadd.f32 %v4131, %v4132
        %v4134 = vsel %vm993, %v4084, 0.0
        %v4135 = vadd.f32 %v4133, %v4134
        %v4136 = vsel %vm993, %v4085, 0.0
        %v4137 = vadd.f32 %v4135, %v4136
        %v4138 = vsel %vm993, %v4086, 0.0
        %v4139 = vadd.f32 %v4137, %v4138
        %v4140 = vsel %vm993, %v4087, 0.0
        %v4141 = vadd.f32 %v4139, %v4140
        %v4142 = vsel %vm993, %v4088, 0.0
        %v4143 = vadd.f32 %v4141, %v4142
        %v4144 = vsel %vm993, %v4089, 0.0
        %v4145 = vadd.f32 %v4143, %v4144
        %v4146 = vsel %vm993, %v4090, 0.0
        %v4147 = vadd.f32 %v4145, %v4146
        %v4148 = vsel %vm993, %v4091, 0.0
        %v4149 = vadd.f32 %v4147, %v4148
        %v4150 = vsel %vm993, %v4092, 0.0
        %v4151 = vadd.f32 %v4149, %v4150
        %v4152 = vsel %vm993, %v4093, 0.0
        %v4153 = vadd.f32 %v4151, %v4152
        %v4154 = vsel %vm993, %v4094, 0.0
        %v4155 = vadd.f32 %v4153, %v4154
        %v4156 = vsel %vm993, %v4095, 0.0
        %v4157 = vadd.f32 %v4155, %v4156
        %v4158 = vsel %vm993, %v4096, 0.0
        %v4159 = vadd.f32 %v4157, %v4158
        %v4160 = vrot.slane %v4159, 4
        %v4161 = vadd.f32 %v4159, %v4160
        %v4162 = vrot.slane %v4161, 2
        %v4163 = vadd.f32 %v4161, %v4162
        %v4164 = vrot.slane %v4163, 1
        %v4165 = vadd.f32 %v4163, %v4164
        %v4166 = vadd.f32 %v3071, %v4165
        %v4167 = vld [vmem:[%s3072] sm:$0xe]
        %v4168 = vld [vmem:[%s3072 + $0xc] sm:$0xe]
        %v4169 = vld [vmem:[%s3072 + $0x18] sm:$0xe]
        %v4170 = vld [vmem:[%s3072 + $0x24] sm:$0xe]
        %v4171 = vld [vmem:[%s3072 + $0x30] sm:$0xe]
        %v4172 = vld [vmem:[%s3072 + $0x3c] sm:$0xe]
        %v4173 = vld [vmem:[%s3072 + $0x48] sm:$0xe]
        %v4174 = vld [vmem:[%s3072 + $0x54] sm:$0xe]
        %v4175 = vld [vmem:[%s3072 + $0x60] sm:$0xe]
        %v4176 = vld [vmem:[%s3072 + $0x6c] sm:$0xe]
        %v4177 = vld [vmem:[%s3072 + $0x78] sm:$0xe]
        %v4178 = vld [vmem:[%s3072 + $0x84] sm:$0xe]
        %v4179 = vld [vmem:[%s3072 + $0x90] sm:$0xe]
        %v4180 = vld [vmem:[%s3072 + $0x9c] sm:$0xe]
        %v4181 = vld [vmem:[%s3072 + $0xa8] sm:$0xe]
        %v4182 = vld [vmem:[%s3072 + $0xb4] sm:$0xe]
        %v4199 = vunpack.c.l.b16 %v4167
        %v4200 = vunpack.c.l.b16 %v4168
        %v4201 = vunpack.c.l.b16 %v4169
        %v4202 = vunpack.c.l.b16 %v4170
        %v4203 = vunpack.c.l.b16 %v4171
        %v4204 = vunpack.c.l.b16 %v4172
        %v4205 = vunpack.c.l.b16 %v4173
        %v4206 = vunpack.c.l.b16 %v4174
        %v4207 = vunpack.c.l.b16 %v4175
        %v4208 = vunpack.c.l.b16 %v4176
        %v4209 = vunpack.c.l.b16 %v4177
        %v4210 = vunpack.c.l.b16 %v4178
        %v4211 = vunpack.c.l.b16 %v4179
        %v4212 = vunpack.c.l.b16 %v4180
        %v4213 = vunpack.c.l.b16 %v4181
        %v4214 = vunpack.c.l.b16 %v4182
        %v4215 = vpack.c.b16 %v3170, %v4199
        %v4216 = vpack.c.b16 %v3173, %v4200
        %v4217 = vpack.c.b16 %v3176, %v4201
        %v4218 = vpack.c.b16 %v3179, %v4202
        %v4219 = vpack.c.b16 %v3182, %v4203
        %v4220 = vpack.c.b16 %v3185, %v4204
        %v4221 = vpack.c.b16 %v3188, %v4205
        %v4222 = vpack.c.b16 %v3191, %v4206
        %v4223 = vpack.c.b16 %v3194, %v4207
        %v4224 = vpack.c.b16 %v3197, %v4208
        %v4225 = vpack.c.b16 %v3200, %v4209
        %v4226 = vpack.c.b16 %v3203, %v4210
        %v4227 = vpack.c.b16 %v3206, %v4211
        %v4228 = vpack.c.b16 %v3209, %v4212
        %v4229 = vpack.c.b16 %v3212, %v4213
        %v4230 = vpack.c.b16 %v3215, %v4214
        %v4232 = vshrl.u32 %v4215, 16
        %v4234 = vshll.u32 %v4215, 16
        %v4236 = vrot.slane %v4234, 1
        %v4237 = vor.u32 %v4232, %v4236
        %v4239 = vshll.u32 %v3218, 16
        %v4241 = vrot.slane %v4239, 1
        %v4242 = vsel %vm1123, %v4237, %v4241
        %v4243 = vshrl.u32 %v3218, 16
        %v4246 = vshrl.u32 %v4216, 16
        %v4248 = vshll.u32 %v4216, 16
        %v4250 = vrot.slane %v4248, 1
        %v4251 = vor.u32 %v4246, %v4250
        %v4253 = vshll.u32 %v3220, 16
        %v4255 = vrot.slane %v4253, 1
        %v4256 = vsel %vm1123, %v4251, %v4255
        %v4257 = vshrl.u32 %v3220, 16
        %v4260 = vshrl.u32 %v4217, 16
        %v4262 = vshll.u32 %v4217, 16
        %v4264 = vrot.slane %v4262, 1
        %v4265 = vor.u32 %v4260, %v4264
        %v4267 = vshll.u32 %v3222, 16
        %v4269 = vrot.slane %v4267, 1
        %v4270 = vsel %vm1123, %v4265, %v4269
        %v4271 = vshrl.u32 %v3222, 16
        %v4274 = vshrl.u32 %v4218, 16
        %v4276 = vshll.u32 %v4218, 16
        %v4278 = vrot.slane %v4276, 1
        %v4279 = vor.u32 %v4274, %v4278
        %v4281 = vshll.u32 %v3224, 16
        %v4283 = vrot.slane %v4281, 1
        %v4284 = vsel %vm1123, %v4279, %v4283
        %v4285 = vshrl.u32 %v3224, 16
        %v4288 = vshrl.u32 %v4219, 16
        %v4290 = vshll.u32 %v4219, 16
        %v4292 = vrot.slane %v4290, 1
        %v4293 = vor.u32 %v4288, %v4292
        %v4295 = vshll.u32 %v3226, 16
        %v4297 = vrot.slane %v4295, 1
        %v4298 = vsel %vm1123, %v4293, %v4297
        %v4299 = vshrl.u32 %v3226, 16
        %v4302 = vshrl.u32 %v4220, 16
        %v4304 = vshll.u32 %v4220, 16
        %v4306 = vrot.slane %v4304, 1
        %v4307 = vor.u32 %v4302, %v4306
        %v4309 = vshll.u32 %v3228, 16
        %v4311 = vrot.slane %v4309, 1
        %v4312 = vsel %vm1123, %v4307, %v4311
        %v4313 = vshrl.u32 %v3228, 16
        %v4316 = vshrl.u32 %v4221, 16
        %v4318 = vshll.u32 %v4221, 16
        %v4320 = vrot.slane %v4318, 1
        %v4321 = vor.u32 %v4316, %v4320
        %v4323 = vshll.u32 %v3230, 16
        %v4325 = vrot.slane %v4323, 1
        %v4326 = vsel %vm1123, %v4321, %v4325
        %v4327 = vshrl.u32 %v3230, 16
        %v4330 = vshrl.u32 %v4222, 16
        %v4332 = vshll.u32 %v4222, 16
        %v4334 = vrot.slane %v4332, 1
        %v4335 = vor.u32 %v4330, %v4334
        %v4337 = vshll.u32 %v3232, 16
        %v4339 = vrot.slane %v4337, 1
        %v4340 = vsel %vm1123, %v4335, %v4339
        %v4341 = vshrl.u32 %v3232, 16
        %v4344 = vshrl.u32 %v4223, 16
        %v4346 = vshll.u32 %v4223, 16
        %v4348 = vrot.slane %v4346, 1
        %v4349 = vor.u32 %v4344, %v4348
        %v4351 = vshll.u32 %v3234, 16
        %v4353 = vrot.slane %v4351, 1
        %v4354 = vsel %vm1123, %v4349, %v4353
        %v4355 = vshrl.u32 %v3234, 16
        %v4358 = vshrl.u32 %v4224, 16
        %v4360 = vshll.u32 %v4224, 16
        %v4362 = vrot.slane %v4360, 1
        %v4363 = vor.u32 %v4358, %v4362
        %v4365 = vshll.u32 %v3236, 16
        %v4367 = vrot.slane %v4365, 1
        %v4368 = vsel %vm1123, %v4363, %v4367
        %v4369 = vshrl.u32 %v3236, 16
        %v4372 = vshrl.u32 %v4225, 16
        %v4374 = vshll.u32 %v4225, 16
        %v4376 = vrot.slane %v4374, 1
        %v4377 = vor.u32 %v4372, %v4376
        %v4379 = vshll.u32 %v3238, 16
        %v4381 = vrot.slane %v4379, 1
        %v4382 = vsel %vm1123, %v4377, %v4381
        %v4383 = vshrl.u32 %v3238, 16
        %v4386 = vshrl.u32 %v4226, 16
        %v4388 = vshll.u32 %v4226, 16
        %v4390 = vrot.slane %v4388, 1
        %v4391 = vor.u32 %v4386, %v4390
        %v4393 = vshll.u32 %v3240, 16
        %v4395 = vrot.slane %v4393, 1
        %v4396 = vsel %vm1123, %v4391, %v4395
        %v4397 = vshrl.u32 %v3240, 16
        %v4400 = vshrl.u32 %v4227, 16
        %v4402 = vshll.u32 %v4227, 16
        %v4404 = vrot.slane %v4402, 1
        %v4405 = vor.u32 %v4400, %v4404
        %v4407 = vshll.u32 %v3242, 16
        %v4409 = vrot.slane %v4407, 1
        %v4410 = vsel %vm1123, %v4405, %v4409
        %v4411 = vshrl.u32 %v3242, 16
        %v4414 = vshrl.u32 %v4228, 16
        %v4416 = vshll.u32 %v4228, 16
        %v4418 = vrot.slane %v4416, 1
        %v4419 = vor.u32 %v4414, %v4418
        %v4421 = vshll.u32 %v3244, 16
        %v4423 = vrot.slane %v4421, 1
        %v4424 = vsel %vm1123, %v4419, %v4423
        %v4425 = vshrl.u32 %v3244, 16
        %v4428 = vshrl.u32 %v4229, 16
        %v4430 = vshll.u32 %v4229, 16
        %v4432 = vrot.slane %v4430, 1
        %v4433 = vor.u32 %v4428, %v4432
        %v4435 = vshll.u32 %v3246, 16
        %v4437 = vrot.slane %v4435, 1
        %v4438 = vsel %vm1123, %v4433, %v4437
        %v4439 = vshrl.u32 %v3246, 16
        %v4442 = vshrl.u32 %v4230, 16
        %v4444 = vshll.u32 %v4230, 16
        %v4446 = vrot.slane %v4444, 1
        %v4447 = vor.u32 %v4442, %v4446
        %v4449 = vshll.u32 %v3248, 16
        %v4451 = vrot.slane %v4449, 1
        %v4452 = vsel %vm1123, %v4447, %v4451
        %v4453 = vshrl.u32 %v3248, 16
        %4455 = vrot.lane.b32.xlu0 %v4242, 12
        %v4456 = vpop.permute.xlu0 %4455
        %4457 = vrot.lane.b32.xlu0 %v4243, 12
        %v4458 = vpop.permute.xlu0 %4457
        %4459 = vrot.lane.b32.xlu0 %v4256, 12
        %v4460 = vpop.permute.xlu0 %4459
        %4461 = vrot.lane.b32.xlu0 %v4257, 12
        %v4462 = vpop.permute.xlu0 %4461
        %4463 = vrot.lane.b32.xlu0 %v4270, 12
        %v4464 = vpop.permute.xlu0 %4463
        %4465 = vrot.lane.b32.xlu0 %v4271, 12
        %v4466 = vpop.permute.xlu0 %4465
        %4467 = vrot.lane.b32.xlu0 %v4284, 12
        %v4468 = vpop.permute.xlu0 %4467
        %4469 = vrot.lane.b32.xlu0 %v4285, 12
        %v4470 = vpop.permute.xlu0 %4469
        %4471 = vrot.lane.b32.xlu0 %v4298, 12
        %v4472 = vpop.permute.xlu0 %4471
        %4473 = vrot.lane.b32.xlu0 %v4299, 12
        %v4474 = vpop.permute.xlu0 %4473
        %4475 = vrot.lane.b32.xlu0 %v4312, 12
        %v4476 = vpop.permute.xlu0 %4475
        %4477 = vrot.lane.b32.xlu0 %v4313, 12
        %v4478 = vpop.permute.xlu0 %4477
        %4479 = vrot.lane.b32.xlu0 %v4326, 12
        %v4480 = vpop.permute.xlu0 %4479
        %4481 = vrot.lane.b32.xlu0 %v4327, 12
        %v4482 = vpop.permute.xlu0 %4481
        %4483 = vrot.lane.b32.xlu0 %v4340, 12
        %v4484 = vpop.permute.xlu0 %4483
        %4485 = vrot.lane.b32.xlu0 %v4341, 12
        %v4486 = vpop.permute.xlu0 %4485
        %4487 = vrot.lane.b32.xlu0 %v4354, 12
        %v4488 = vpop.permute.xlu0 %4487
        %4489 = vrot.lane.b32.xlu0 %v4355, 12
        %v4490 = vpop.permute.xlu0 %4489
        %4491 = vrot.lane.b32.xlu0 %v4368, 12
        %v4492 = vpop.permute.xlu0 %4491
        %4493 = vrot.lane.b32.xlu0 %v4369, 12
        %v4494 = vpop.permute.xlu0 %4493
        %4495 = vrot.lane.b32.xlu0 %v4382, 12
        %v4496 = vpop.permute.xlu0 %4495
        %4497 = vrot.lane.b32.xlu0 %v4383, 12
        %v4498 = vpop.permute.xlu0 %4497
        %4499 = vrot.lane.b32.xlu0 %v4396, 12
        %v4500 = vpop.permute.xlu0 %4499
        %4501 = vrot.lane.b32.xlu0 %v4397, 12
        %v4502 = vpop.permute.xlu0 %4501
        %4503 = vrot.lane.b32.xlu0 %v4410, 12
        %v4504 = vpop.permute.xlu0 %4503
        %4505 = vrot.lane.b32.xlu0 %v4411, 12
        %v4506 = vpop.permute.xlu0 %4505
        %4507 = vrot.lane.b32.xlu0 %v4424, 12
        %v4508 = vpop.permute.xlu0 %4507
        %4509 = vrot.lane.b32.xlu0 %v4425, 12
        %v4510 = vpop.permute.xlu0 %4509
        %4511 = vrot.lane.b32.xlu0 %v4438, 12
        %v4512 = vpop.permute.xlu0 %4511
        %4513 = vrot.lane.b32.xlu0 %v4439, 12
        %v4514 = vpop.permute.xlu0 %4513
        %4515 = vrot.lane.b32.xlu0 %v4452, 12
        %v4516 = vpop.permute.xlu0 %4515
        %4517 = vrot.lane.b32.xlu0 %v4453, 12
        %v4518 = vpop.permute.xlu0 %4517
        %v4519 = vsel %vm993, %v2363, %v3250
        %v4520 = vsel %vm993, %v2365, %v3252
        %v4521 = vsel %vm993, %v2367, %v3254
        %v4522 = vsel %vm993, %v2369, %v3256
        %v4523 = vsel %vm993, %v2371, %v3258
        %v4524 = vsel %vm993, %v2373, %v3260
        %v4525 = vsel %vm993, %v2375, %v3262
        %v4526 = vsel %vm993, %v2377, %v3264
        %v4527 = vsel %vm993, %v2379, %v3266
        %v4528 = vsel %vm993, %v2381, %v3268
        %v4529 = vsel %vm993, %v2383, %v3270
        %v4530 = vsel %vm993, %v2385, %v3272
        %v4531 = vsel %vm993, %v2387, %v3274
        %v4532 = vsel %vm993, %v2389, %v3276
        %v4533 = vsel %vm993, %v2391, %v3278
        %v4534 = vsel %vm993, %v2393, %v3280
        %v4535 = vsel %vm993, %v2395, %v3282
        %v4536 = vsel %vm993, %v2397, %v3284
        %v4537 = vsel %vm993, %v2399, %v3286
        %v4538 = vsel %vm993, %v2401, %v3288
        %v4539 = vsel %vm993, %v2403, %v3290
        %v4540 = vsel %vm993, %v2405, %v3292
        %v4541 = vsel %vm993, %v2407, %v3294
        %v4542 = vsel %vm993, %v2409, %v3296
        %v4543 = vsel %vm993, %v2411, %v3298
        %v4544 = vsel %vm993, %v2413, %v3300
        %v4545 = vsel %vm993, %v2415, %v3302
        %v4546 = vsel %vm993, %v2417, %v3304
        %v4547 = vsel %vm993, %v2419, %v3306
        %v4548 = vsel %vm993, %v2421, %v3308
        %v4549 = vsel %vm993, %v2423, %v3310
        %v4550 = vsel %vm993, %v2425, %v3312
        %v4552 = vsel %vm1058, %v4519, %v4456
        %v4554 = vsel %vm1058, %v4520, %v4458
        %v4556 = vsel %vm1058, %v4521, %v4460
        %v4558 = vsel %vm1058, %v4522, %v4462
        %v4560 = vsel %vm1058, %v4523, %v4464
        %v4562 = vsel %vm1058, %v4524, %v4466
        %v4564 = vsel %vm1058, %v4525, %v4468
        %v4566 = vsel %vm1058, %v4526, %v4470
        %v4568 = vsel %vm1058, %v4527, %v4472
        %v4570 = vsel %vm1058, %v4528, %v4474
        %v4572 = vsel %vm1058, %v4529, %v4476
        %v4574 = vsel %vm1058, %v4530, %v4478
        %v4576 = vsel %vm1058, %v4531, %v4480
        %v4578 = vsel %vm1058, %v4532, %v4482
        %v4580 = vsel %vm1058, %v4533, %v4484
        %v4582 = vsel %vm1058, %v4534, %v4486
        %v4584 = vsel %vm1058, %v4535, %v4488
        %v4586 = vsel %vm1058, %v4536, %v4490
        %v4588 = vsel %vm1058, %v4537, %v4492
        %v4590 = vsel %vm1058, %v4538, %v4494
        %v4592 = vsel %vm1058, %v4539, %v4496
        %v4594 = vsel %vm1058, %v4540, %v4498
        %v4596 = vsel %vm1058, %v4541, %v4500
        %v4598 = vsel %vm1058, %v4542, %v4502
        %v4600 = vsel %vm1058, %v4543, %v4504
        %v4602 = vsel %vm1058, %v4544, %v4506
        %v4604 = vsel %vm1058, %v4545, %v4508
        %v4606 = vsel %vm1058, %v4546, %v4510
        %v4608 = vsel %vm1058, %v4547, %v4512
        %v4610 = vsel %vm1058, %v4548, %v4514
        %v4612 = vsel %vm1058, %v4549, %v4516
        %v4614 = vsel %vm1058, %v4550, %v4518
        %v4615 = vshrl.u32 %v4552, 16
        %v4617 = vshll.u32 %v4552, 16
        %v4619 = vrot.slane %v4617, 1
        %v4620 = vor.u32 %v4615, %v4619
        %v4621 = vshll.u32 %v4554, 16
        %v4623 = vrot.slane %v4621, 1
        %v4624 = vsel %vm1123, %v4620, %v4623
        %v4625 = vshrl.u32 %v4556, 16
        %v4627 = vshll.u32 %v4556, 16
        %v4629 = vrot.slane %v4627, 1
        %v4630 = vor.u32 %v4625, %v4629
        %v4631 = vshll.u32 %v4558, 16
        %v4633 = vrot.slane %v4631, 1
        %v4634 = vsel %vm1123, %v4630, %v4633
        %v4635 = vshrl.u32 %v4560, 16
        %v4637 = vshll.u32 %v4560, 16
        %v4639 = vrot.slane %v4637, 1
        %v4640 = vor.u32 %v4635, %v4639
        %v4641 = vshll.u32 %v4562, 16
        %v4643 = vrot.slane %v4641, 1
        %v4644 = vsel %vm1123, %v4640, %v4643
        %v4645 = vshrl.u32 %v4564, 16
        %v4647 = vshll.u32 %v4564, 16
        %v4649 = vrot.slane %v4647, 1
        %v4650 = vor.u32 %v4645, %v4649
        %v4651 = vshll.u32 %v4566, 16
        %v4653 = vrot.slane %v4651, 1
        %v4654 = vsel %vm1123, %v4650, %v4653
        %v4655 = vshrl.u32 %v4568, 16
        %v4657 = vshll.u32 %v4568, 16
        %v4659 = vrot.slane %v4657, 1
        %v4660 = vor.u32 %v4655, %v4659
        %v4661 = vshll.u32 %v4570, 16
        %v4663 = vrot.slane %v4661, 1
        %v4664 = vsel %vm1123, %v4660, %v4663
        %v4665 = vshrl.u32 %v4572, 16
        %v4667 = vshll.u32 %v4572, 16
        %v4669 = vrot.slane %v4667, 1
        %v4670 = vor.u32 %v4665, %v4669
        %v4671 = vshll.u32 %v4574, 16
        %v4673 = vrot.slane %v4671, 1
        %v4674 = vsel %vm1123, %v4670, %v4673
        %v4675 = vshrl.u32 %v4576, 16
        %v4677 = vshll.u32 %v4576, 16
        %v4679 = vrot.slane %v4677, 1
        %v4680 = vor.u32 %v4675, %v4679
        %v4681 = vshll.u32 %v4578, 16
        %v4683 = vrot.slane %v4681, 1
        %v4684 = vsel %vm1123, %v4680, %v4683
        %v4685 = vshrl.u32 %v4580, 16
        %v4687 = vshll.u32 %v4580, 16
        %v4689 = vrot.slane %v4687, 1
        %v4690 = vor.u32 %v4685, %v4689
        %v4691 = vshll.u32 %v4582, 16
        %v4693 = vrot.slane %v4691, 1
        %v4694 = vsel %vm1123, %v4690, %v4693
        %v4695 = vshrl.u32 %v4584, 16
        %v4697 = vshll.u32 %v4584, 16
        %v4699 = vrot.slane %v4697, 1
        %v4700 = vor.u32 %v4695, %v4699
        %v4701 = vshll.u32 %v4586, 16
        %v4703 = vrot.slane %v4701, 1
        %v4704 = vsel %vm1123, %v4700, %v4703
        %v4705 = vshrl.u32 %v4588, 16
        %v4707 = vshll.u32 %v4588, 16
        %v4709 = vrot.slane %v4707, 1
        %v4710 = vor.u32 %v4705, %v4709
        %v4711 = vshll.u32 %v4590, 16
        %v4713 = vrot.slane %v4711, 1
        %v4714 = vsel %vm1123, %v4710, %v4713
        %v4715 = vshrl.u32 %v4592, 16
        %v4717 = vshll.u32 %v4592, 16
        %v4719 = vrot.slane %v4717, 1
        %v4720 = vor.u32 %v4715, %v4719
        %v4721 = vshll.u32 %v4594, 16
        %v4723 = vrot.slane %v4721, 1
        %v4724 = vsel %vm1123, %v4720, %v4723
        %v4725 = vshrl.u32 %v4596, 16
        %v4727 = vshll.u32 %v4596, 16
        %v4729 = vrot.slane %v4727, 1
        %v4730 = vor.u32 %v4725, %v4729
        %v4731 = vshll.u32 %v4598, 16
        %v4733 = vrot.slane %v4731, 1
        %v4734 = vsel %vm1123, %v4730, %v4733
        %v4735 = vshrl.u32 %v4600, 16
        %v4737 = vshll.u32 %v4600, 16
        %v4739 = vrot.slane %v4737, 1
        %v4740 = vor.u32 %v4735, %v4739
        %v4741 = vshll.u32 %v4602, 16
        %v4743 = vrot.slane %v4741, 1
        %v4744 = vsel %vm1123, %v4740, %v4743
        %v4745 = vshrl.u32 %v4604, 16
        %v4747 = vshll.u32 %v4604, 16
        %v4749 = vrot.slane %v4747, 1
        %v4750 = vor.u32 %v4745, %v4749
        %v4751 = vshll.u32 %v4606, 16
        %v4753 = vrot.slane %v4751, 1
        %v4754 = vsel %vm1123, %v4750, %v4753
        %v4755 = vshrl.u32 %v4608, 16
        %v4757 = vshll.u32 %v4608, 16
        %v4759 = vrot.slane %v4757, 1
        %v4760 = vor.u32 %v4755, %v4759
        %v4761 = vshll.u32 %v4610, 16
        %v4763 = vrot.slane %v4761, 1
        %v4764 = vsel %vm1123, %v4760, %v4763
        %v4765 = vshrl.u32 %v4612, 16
        %v4767 = vshll.u32 %v4612, 16
        %v4769 = vrot.slane %v4767, 1
        %v4770 = vor.u32 %v4765, %v4769
        %v4771 = vshll.u32 %v4614, 16
        %v4773 = vrot.slane %v4771, 1
        %v4774 = vsel %vm1123, %v4770, %v4773
        %s4775 = scalar_lea.vmem %s1, 24
        %v4776 = vld [vmem:[%s4775] sm:$0xf]
        %v4777 = vld [vmem:[%s4775 + $0x4] sm:$0xf]
        %v4780 = vunpack.c.l.b16 %v4776
        %v4781 = vunpack.c.l.b16 %v4777
        %v4782 = vpack.c.b16 %v4781, %v4780
        %v4785 = vsel %vm1292, %v4624, 0
        %v4788 = vsel %vm1292, %v4634, 0
        %v4791 = vsel %vm1292, %v4644, 0
        %v4794 = vsel %vm1292, %v4654, 0
        %v4797 = vsel %vm1292, %v4664, 0
        %v4800 = vsel %vm1292, %v4674, 0
        %v4803 = vsel %vm1292, %v4684, 0
        %v4806 = vsel %vm1292, %v4694, 0
        %v4809 = vsel %vm1292, %v4704, 0
        %v4812 = vsel %vm1292, %v4714, 0
        %v4815 = vsel %vm1292, %v4724, 0
        %v4818 = vsel %vm1292, %v4734, 0
        %v4821 = vsel %vm1292, %v4744, 0
        %v4824 = vsel %vm1292, %v4754, 0
        %v4827 = vsel %vm1292, %v4764, 0
        %v4830 = vsel %vm1292, %v4774, 0
        %4832 = vmatprep.subr.bf16.mxu0 0
        %4833 = vmatpush1.bf16.msra.mxu0 %v4782
        %4834 = vmatprep.subr.bf16.mxu0 0
        %4835 = vmatpush1.bf16.msra.mxu0 0
        %4836 = vmatprep.subr.bf16.mxu0 0
        %4837 = vmatpush1.bf16.msra.mxu0 0
        %4838 = vmatprep.subr.bf16.mxu0 0
        %4839 = vmatpush1.bf16.msra.mxu0 0
        %4840 = vmatprep.subr.bf16.mxu0 0
        %4841 = vmatpush1.bf16.msra.mxu0 0
        %4842 = vmatprep.subr.bf16.mxu0 0
        %4843 = vmatpush1.bf16.msra.mxu0 0
        %4844 = vmatprep.subr.bf16.mxu0 0
        %4845 = vmatpush1.bf16.msra.mxu0 0
        %4846 = vmatprep.subr.bf16.mxu0 0
        %4847 = vmatpush1.bf16.msra.mxu0 0
        %4848 = vmatprep.subr.bf16.mxu0 0
        %4849 = vmatpush1.bf16.msra.mxu0 0
        %4850 = vmatprep.subr.bf16.mxu0 0
        %4851 = vmatpush1.bf16.msra.mxu0 0
        %4852 = vmatprep.subr.bf16.mxu0 0
        %4853 = vmatpush1.bf16.msra.mxu0 0
        %4854 = vmatprep.subr.bf16.mxu0 0
        %4855 = vmatpush1.bf16.msra.mxu0 0
        %4856 = vmatprep.subr.bf16.mxu0 0
        %4857 = vmatpush1.bf16.msra.mxu0 0
        %4858 = vmatprep.subr.bf16.mxu0 0
        %4859 = vmatpush1.bf16.msra.mxu0 0
        %4860 = vmatprep.subr.bf16.mxu0 0
        %4861 = vmatpush1.bf16.msra.mxu0 0
        %4862 = vmatprep.subr.bf16.mxu0 0
        %4863 = vmatpush1.bf16.msra.mxu0 0
        %4864 = vmatprep.mubr.bf16.mxu0 0
        %4865 = vmatmul.mubr.bf16.gmra.mrb[0].mxu0 %v4785
        %v4866 = vpop.f32.mrb[0].mxu0
        %v4867 = vadd.f32 0.0, %v4866
        %v4868 = vpop.f32.mrb[0].mxu0
        %v4869 = vpop.f32.mrb[0].mxu0
        %v4870 = vadd.f32 0.0, %v4869
        %v4871 = vpop.f32.mrb[0].mxu0
        %4872 = vmatprep.mubr.bf16.mxu0 0
        %4873 = vmatmul.mubr.bf16.gmra.mrb[0].mxu0 %v4788
        %v4874 = vpop.f32.mrb[0].mxu0
        %v4875 = vadd.f32 0.0, %v4874
        %v4876 = vpop.f32.mrb[0].mxu0
        %v4877 = vpop.f32.mrb[0].mxu0
        %v4878 = vadd.f32 0.0, %v4877
        %v4879 = vpop.f32.mrb[0].mxu0
        %4880 = vmatprep.mubr.bf16.mxu0 0
        %4881 = vmatmul.mubr.bf16.gmra.mrb[0].mxu0 %v4791
        %v4882 = vpop.f32.mrb[0].mxu0
        %v4883 = vadd.f32 0.0, %v4882
        %v4884 = vpop.f32.mrb[0].mxu0
        %v4885 = vpop.f32.mrb[0].mxu0
        %v4886 = vadd.f32 0.0, %v4885
        %v4887 = vpop.f32.mrb[0].mxu0
        %4888 = vmatprep.mubr.bf16.mxu0 0
        %4889 = vmatmul.mubr.bf16.gmra.mrb[0].mxu0 %v4794
        %v4890 = vpop.f32.mrb[0].mxu0
        %v4891 = vadd.f32 0.0, %v4890
        %v4892 = vpop.f32.mrb[0].mxu0
        %v4893 = vpop.f32.mrb[0].mxu0
        %v4894 = vadd.f32 0.0, %v4893
        %v4895 = vpop.f32.mrb[0].mxu0
        %4896 = vmatprep.mubr.bf16.mxu0 0
        %4897 = vmatmul.mubr.bf16.gmra.mrb[0].mxu0 %v4797
        %v4898 = vpop.f32.mrb[0].mxu0
        %v4899 = vadd.f32 0.0, %v4898
        %v4900 = vpop.f32.mrb[0].mxu0
        %v4901 = vpop.f32.mrb[0].mxu0
        %v4902 = vadd.f32 0.0, %v4901
        %v4903 = vpop.f32.mrb[0].mxu0
        %4904 = vmatprep.mubr.bf16.mxu0 0
        %4905 = vmatmul.mubr.bf16.gmra.mrb[0].mxu0 %v4800
        %v4906 = vpop.f32.mrb[0].mxu0
        %v4907 = vadd.f32 0.0, %v4906
        %v4908 = vpop.f32.mrb[0].mxu0
        %v4909 = vpop.f32.mrb[0].mxu0
        %v4910 = vadd.f32 0.0, %v4909
        %v4911 = vpop.f32.mrb[0].mxu0
        %4912 = vmatprep.mubr.bf16.mxu0 0
        %4913 = vmatmul.mubr.bf16.gmra.mrb[0].mxu0 %v4803
        %v4914 = vpop.f32.mrb[0].mxu0
        %v4915 = vadd.f32 0.0, %v4914
        %v4916 = vpop.f32.mrb[0].mxu0
        %v4917 = vpop.f32.mrb[0].mxu0
        %v4918 = vadd.f32 0.0, %v4917
        %v4919 = vpop.f32.mrb[0].mxu0
        %4920 = vmatprep.mubr.bf16.mxu0 0
        %4921 = vmatmul.mubr.bf16.gmra.mrb[0].mxu0 %v4806
        %v4922 = vpop.f32.mrb[0].mxu0
        %v4923 = vadd.f32 0.0, %v4922
        %v4924 = vpop.f32.mrb[0].mxu0
        %v4925 = vpop.f32.mrb[0].mxu0
        %v4926 = vadd.f32 0.0, %v4925
        %v4927 = vpop.f32.mrb[0].mxu0
        %4928 = vmatprep.mubr.bf16.mxu0 0
        %4929 = vmatmul.mubr.bf16.gmra.mrb[0].mxu0 %v4809
        %v4930 = vpop.f32.mrb[0].mxu0
        %v4931 = vadd.f32 0.0, %v4930
        %v4932 = vpop.f32.mrb[0].mxu0
        %v4933 = vpop.f32.mrb[0].mxu0
        %v4934 = vadd.f32 0.0, %v4933
        %v4935 = vpop.f32.mrb[0].mxu0
        %4936 = vmatprep.mubr.bf16.mxu0 0
        %4937 = vmatmul.mubr.bf16.gmra.mrb[0].mxu0 %v4812
        %v4938 = vpop.f32.mrb[0].mxu0
        %v4939 = vadd.f32 0.0, %v4938
        %v4940 = vpop.f32.mrb[0].mxu0
        %v4941 = vpop.f32.mrb[0].mxu0
        %v4942 = vadd.f32 0.0, %v4941
        %v4943 = vpop.f32.mrb[0].mxu0
        %4944 = vmatprep.mubr.bf16.mxu0 0
        %4945 = vmatmul.mubr.bf16.gmra.mrb[0].mxu0 %v4815
        %v4946 = vpop.f32.mrb[0].mxu0
        %v4947 = vadd.f32 0.0, %v4946
        %v4948 = vpop.f32.mrb[0].mxu0
        %v4949 = vpop.f32.mrb[0].mxu0
        %v4950 = vadd.f32 0.0, %v4949
        %v4951 = vpop.f32.mrb[0].mxu0
        %4952 = vmatprep.mubr.bf16.mxu0 0
        %4953 = vmatmul.mubr.bf16.gmra.mrb[0].mxu0 %v4818
        %v4954 = vpop.f32.mrb[0].mxu0
        %v4955 = vadd.f32 0.0, %v4954
        %v4956 = vpop.f32.mrb[0].mxu0
        %v4957 = vpop.f32.mrb[0].mxu0
        %v4958 = vadd.f32 0.0, %v4957
        %v4959 = vpop.f32.mrb[0].mxu0
        %4960 = vmatprep.mubr.bf16.mxu0 0
        %4961 = vmatmul.mubr.bf16.gmra.mrb[0].mxu0 %v4821
        %v4962 = vpop.f32.mrb[0].mxu0
        %v4963 = vadd.f32 0.0, %v4962
        %v4964 = vpop.f32.mrb[0].mxu0
        %v4965 = vpop.f32.mrb[0].mxu0
        %v4966 = vadd.f32 0.0, %v4965
        %v4967 = vpop.f32.mrb[0].mxu0
        %4968 = vmatprep.mubr.bf16.mxu0 0
        %4969 = vmatmul.mubr.bf16.gmra.mrb[0].mxu0 %v4824
        %v4970 = vpop.f32.mrb[0].mxu0
        %v4971 = vadd.f32 0.0, %v4970
        %v4972 = vpop.f32.mrb[0].mxu0
        %v4973 = vpop.f32.mrb[0].mxu0
        %v4974 = vadd.f32 0.0, %v4973
        %v4975 = vpop.f32.mrb[0].mxu0
        %4976 = vmatprep.mubr.bf16.mxu0 0
        %4977 = vmatmul.mubr.bf16.gmra.mrb[0].mxu0 %v4827
        %v4978 = vpop.f32.mrb[0].mxu0
        %v4979 = vadd.f32 0.0, %v4978
        %v4980 = vpop.f32.mrb[0].mxu0
        %v4981 = vpop.f32.mrb[0].mxu0
        %v4982 = vadd.f32 0.0, %v4981
        %v4983 = vpop.f32.mrb[0].mxu0
        %4984 = vmatprep.mubr.bf16.mxu0 0
        %4985 = vmatmul.mubr.bf16.gmra.mrb[0].mxu0 %v4830
        %v4986 = vpop.f32.mrb[0].mxu0
        %v4987 = vadd.f32 0.0, %v4986
        %v4988 = vpop.f32.mrb[0].mxu0
        %v4989 = vpop.f32.mrb[0].mxu0
        %v4990 = vadd.f32 0.0, %v4989
        %v4991 = vpop.f32.mrb[0].mxu0
        %4992 = vdwg.mxu0
        %v4993 = vsel %vm993, %v4867, 0.0
        %v4994 = vsel %vm993, %v4870, 0.0
        %v4995 = vadd.f32 %v4993, %v4994
        %v4996 = vsel %vm993, %v4875, 0.0
        %v4997 = vadd.f32 %v4995, %v4996
        %v4998 = vsel %vm993, %v4878, 0.0
        %v4999 = vadd.f32 %v4997, %v4998
        %v5000 = vsel %vm993, %v4883, 0.0
        %v5001 = vadd.f32 %v4999, %v5000
        %v5002 = vsel %vm993, %v4886, 0.0
        %v5003 = vadd.f32 %v5001, %v5002
        %v5004 = vsel %vm993, %v4891, 0.0
        %v5005 = vadd.f32 %v5003, %v5004
        %v5006 = vsel %vm993, %v4894, 0.0
        %v5007 = vadd.f32 %v5005, %v5006
        %v5008 = vsel %vm993, %v4899, 0.0
        %v5009 = vadd.f32 %v5007, %v5008
        %v5010 = vsel %vm993, %v4902, 0.0
        %v5011 = vadd.f32 %v5009, %v5010
        %v5012 = vsel %vm993, %v4907, 0.0
        %v5013 = vadd.f32 %v5011, %v5012
        %v5014 = vsel %vm993, %v4910, 0.0
        %v5015 = vadd.f32 %v5013, %v5014
        %v5016 = vsel %vm993, %v4915, 0.0
        %v5017 = vadd.f32 %v5015, %v5016
        %v5018 = vsel %vm993, %v4918, 0.0
        %v5019 = vadd.f32 %v5017, %v5018
        %v5020 = vsel %vm993, %v4923, 0.0
        %v5021 = vadd.f32 %v5019, %v5020
        %v5022 = vsel %vm993, %v4926, 0.0
        %v5023 = vadd.f32 %v5021, %v5022
        %v5024 = vsel %vm993, %v4931, 0.0
        %v5025 = vadd.f32 %v5023, %v5024
        %v5026 = vsel %vm993, %v4934, 0.0
        %v5027 = vadd.f32 %v5025, %v5026
        %v5028 = vsel %vm993, %v4939, 0.0
        %v5029 = vadd.f32 %v5027, %v5028
        %v5030 = vsel %vm993, %v4942, 0.0
        %v5031 = vadd.f32 %v5029, %v5030
        %v5032 = vsel %vm993, %v4947, 0.0
        %v5033 = vadd.f32 %v5031, %v5032
        %v5034 = vsel %vm993, %v4950, 0.0
        %v5035 = vadd.f32 %v5033, %v5034
        %v5036 = vsel %vm993, %v4955, 0.0
        %v5037 = vadd.f32 %v5035, %v5036
        %v5038 = vsel %vm993, %v4958, 0.0
        %v5039 = vadd.f32 %v5037, %v5038
        %v5040 = vsel %vm993, %v4963, 0.0
        %v5041 = vadd.f32 %v5039, %v5040
        %v5042 = vsel %vm993, %v4966, 0.0
        %v5043 = vadd.f32 %v5041, %v5042
        %v5044 = vsel %vm993, %v4971, 0.0
        %v5045 = vadd.f32 %v5043, %v5044
        %v5046 = vsel %vm993, %v4974, 0.0
        %v5047 = vadd.f32 %v5045, %v5046
        %v5048 = vsel %vm993, %v4979, 0.0
        %v5049 = vadd.f32 %v5047, %v5048
        %v5050 = vsel %vm993, %v4982, 0.0
        %v5051 = vadd.f32 %v5049, %v5050
        %v5052 = vsel %vm993, %v4987, 0.0
        %v5053 = vadd.f32 %v5051, %v5052
        %v5054 = vsel %vm993, %v4990, 0.0
        %v5055 = vadd.f32 %v5053, %v5054
        %v5056 = vrot.slane %v5055, 4
        %v5057 = vadd.f32 %v5055, %v5056
        %v5058 = vrot.slane %v5057, 2
        %v5059 = vadd.f32 %v5057, %v5058
        %v5060 = vrot.slane %v5059, 1
        %v5061 = vadd.f32 %v5059, %v5060
        %v5062 = vadd.f32 %v4064, %v5061
        %v5063 = vmul.f32 %v4867, %v4867
        %v5064 = vmul.f32 %v4870, %v4870
        %v5065 = vmul.f32 %v4875, %v4875
        %v5066 = vmul.f32 %v4878, %v4878
        %v5067 = vmul.f32 %v4883, %v4883
        %v5068 = vmul.f32 %v4886, %v4886
        %v5069 = vmul.f32 %v4891, %v4891
        %v5070 = vmul.f32 %v4894, %v4894
        %v5071 = vmul.f32 %v4899, %v4899
        %v5072 = vmul.f32 %v4902, %v4902
        %v5073 = vmul.f32 %v4907, %v4907
        %v5074 = vmul.f32 %v4910, %v4910
        %v5075 = vmul.f32 %v4915, %v4915
        %v5076 = vmul.f32 %v4918, %v4918
        %v5077 = vmul.f32 %v4923, %v4923
        %v5078 = vmul.f32 %v4926, %v4926
        %v5079 = vmul.f32 %v4931, %v4931
        %v5080 = vmul.f32 %v4934, %v4934
        %v5081 = vmul.f32 %v4939, %v4939
        %v5082 = vmul.f32 %v4942, %v4942
        %v5083 = vmul.f32 %v4947, %v4947
        %v5084 = vmul.f32 %v4950, %v4950
        %v5085 = vmul.f32 %v4955, %v4955
        %v5086 = vmul.f32 %v4958, %v4958
        %v5087 = vmul.f32 %v4963, %v4963
        %v5088 = vmul.f32 %v4966, %v4966
        %v5089 = vmul.f32 %v4971, %v4971
        %v5090 = vmul.f32 %v4974, %v4974
        %v5091 = vmul.f32 %v4979, %v4979
        %v5092 = vmul.f32 %v4982, %v4982
        %v5093 = vmul.f32 %v4987, %v4987
        %v5094 = vmul.f32 %v4990, %v4990
        %v5095 = vsel %vm993, %v5063, 0.0
        %v5096 = vsel %vm993, %v5064, 0.0
        %v5097 = vadd.f32 %v5095, %v5096
        %v5098 = vsel %vm993, %v5065, 0.0
        %v5099 = vadd.f32 %v5097, %v5098
        %v5100 = vsel %vm993, %v5066, 0.0
        %v5101 = vadd.f32 %v5099, %v5100
        %v5102 = vsel %vm993, %v5067, 0.0
        %v5103 = vadd.f32 %v5101, %v5102
        %v5104 = vsel %vm993, %v5068, 0.0
        %v5105 = vadd.f32 %v5103, %v5104
        %v5106 = vsel %vm993, %v5069, 0.0
        %v5107 = vadd.f32 %v5105, %v5106
        %v5108 = vsel %vm993, %v5070, 0.0
        %v5109 = vadd.f32 %v5107, %v5108
        %v5110 = vsel %vm993, %v5071, 0.0
        %v5111 = vadd.f32 %v5109, %v5110
        %v5112 = vsel %vm993, %v5072, 0.0
        %v5113 = vadd.f32 %v5111, %v5112
        %v5114 = vsel %vm993, %v5073, 0.0
        %v5115 = vadd.f32 %v5113, %v5114
        %v5116 = vsel %vm993, %v5074, 0.0
        %v5117 = vadd.f32 %v5115, %v5116
        %v5118 = vsel %vm993, %v5075, 0.0
        %v5119 = vadd.f32 %v5117, %v5118
        %v5120 = vsel %vm993, %v5076, 0.0
        %v5121 = vadd.f32 %v5119, %v5120
        %v5122 = vsel %vm993, %v5077, 0.0
        %v5123 = vadd.f32 %v5121, %v5122
        %v5124 = vsel %vm993, %v5078, 0.0
        %v5125 = vadd.f32 %v5123, %v5124
        %v5126 = vsel %vm993, %v5079, 0.0
        %v5127 = vadd.f32 %v5125, %v5126
        %v5128 = vsel %vm993, %v5080, 0.0
        %v5129 = vadd.f32 %v5127, %v5128
        %v5130 = vsel %vm993, %v5081, 0.0
        %v5131 = vadd.f32 %v5129, %v5130
        %v5132 = vsel %vm993, %v5082, 0.0
        %v5133 = vadd.f32 %v5131, %v5132
        %v5134 = vsel %vm993, %v5083, 0.0
        %v5135 = vadd.f32 %v5133, %v5134
        %v5136 = vsel %vm993, %v5084, 0.0
        %v5137 = vadd.f32 %v5135, %v5136
        %v5138 = vsel %vm993, %v5085, 0.0
        %v5139 = vadd.f32 %v5137, %v5138
        %v5140 = vsel %vm993, %v5086, 0.0
        %v5141 = vadd.f32 %v5139, %v5140
        %v5142 = vsel %vm993, %v5087, 0.0
        %v5143 = vadd.f32 %v5141, %v5142
        %v5144 = vsel %vm993, %v5088, 0.0
        %v5145 = vadd.f32 %v5143, %v5144
        %v5146 = vsel %vm993, %v5089, 0.0
        %v5147 = vadd.f32 %v5145, %v5146
        %v5148 = vsel %vm993, %v5090, 0.0
        %v5149 = vadd.f32 %v5147, %v5148
        %v5150 = vsel %vm993, %v5091, 0.0
        %v5151 = vadd.f32 %v5149, %v5150
        %v5152 = vsel %vm993, %v5092, 0.0
        %v5153 = vadd.f32 %v5151, %v5152
        %v5154 = vsel %vm993, %v5093, 0.0
        %v5155 = vadd.f32 %v5153, %v5154
        %v5156 = vsel %vm993, %v5094, 0.0
        %v5157 = vadd.f32 %v5155, %v5156
        %v5158 = vrot.slane %v5157, 4
        %v5159 = vadd.f32 %v5157, %v5158
        %v5160 = vrot.slane %v5159, 2
        %v5161 = vadd.f32 %v5159, %v5160
        %v5162 = vrot.slane %v5161, 1
        %v5163 = vadd.f32 %v5161, %v5162
        %v5164 = vadd.f32 %v4166, %v5163
        %vm5165 = vcmask 1040384
        %v5166 = vsel %vm5165, %v5062, %v5164
        %vm5167 = vcmask 58368
        %5168 = vst.msk [vmem:[%s136] sm:$0x3] %vm5167, %v5166
        %s5169 = sand.u32 %s71, 1
        %s5170 = scalar_lea.sflag [#allocation3], %s5169
        %s5171 = sand.u32 %s71, 1
        %s5172 = smul.addr %s5171, 2
        %s5173 = scalar_lea.vmem [#allocation2], %s5172
        // Predicated region
        $region29: #{tpu_custom_call.1} parent=27 // pred_check
          %p5174 = pneg %p81
        $region30: #{tpu_custom_call.1} parent=27 // pred_check_branch
          %5176 = sbr.rel (%p5174) target = $region32
        $region31: #{tpu_custom_call.1} parent=27 // pred_region
          %s5178 = ssub.s32 32, 32
          %5179 = vsyncadd %s5170, %s5178
          %s5180 = smul.addr %s16, 32
          %s5181 = scalar_lea.hbm %s2, %s5180
          %s5183 = sshll.u32 %s5173, 4
          %s5184 = int_to_ptr.vmem [resolvable:$true] %s5183
          %5186 = dma.vmem_to_hbm [thread:$0]  %s5184, 32, %s5181, %s5170
        $region32: #{tpu_custom_call.1} parent=27 // pred_fallthru
          _
      $region28: #{tpu_custom_call.1} parent=5 // pred_fallthru
        _
      %p5187 = scmp.le.s32.totalorder 2, %s11
      // Predicated region
      $region33: #{tpu_custom_call.1} parent=5 // pred_check
        %p5188 = pneg %p5187
      $region34: #{tpu_custom_call.1} parent=5 // pred_check_branch
        %5190 = sbr.rel (%p5188) target = $region36
      $region35: #{tpu_custom_call.1} parent=5 // pred_region
        %s5191 = ssub.s32 %s11, 2
        // Predicated region
        $region37: #{tpu_custom_call.1} parent=35 // pred_check
          %p5192 = pneg %p87
        $region38: #{tpu_custom_call.1} parent=35 // pred_check_branch
          %5194 = sbr.rel (%p5192) target = $region40
        $region39: #{tpu_custom_call.1} parent=35 // pred_region
          %s5195 = sand.u32 %s72, 1
          %s5196 = scalar_lea.sflag [#allocation3], %s5195
          %s5197 = sand.u32 %s72, 1
          %s5198 = smul.addr %s5197, 2
          %s5199 = scalar_lea.vmem [#allocation2], %s5198
          %5200 = dma.done %s5196, 32
        $region40: #{tpu_custom_call.1} parent=35 // pred_fallthru
          _
      $region36: #{tpu_custom_call.1} parent=5 // pred_fallthru
        _
    $region6: #{tpu_custom_call.1} parent=1 // loop_footer
      %s15 = sadd.s32 1, %s11
    $region7: #{tpu_custom_call.1} parent=1 // loop_footer_branch
      %10 = sbr.rel target = $region3
    $region8: #{tpu_custom_call.1} parent=1 // loop_exit
      _
    %5201 = vsyncpa [#allocation3], 1
    %s5202 = scalar_lea.sflag [#allocation3], 1
    %5203 = vsyncpa %s5202, 1

</llo_original>
